<compile_context>
chip_gen: v6e
topology: v6e:2x2x1
jax: 0.10.0
libtpu: 0.0.40
codegen_flags: <defaults>
</compile_context>

<pallas_src>
import jax
import jax.numpy as jnp
import numpy as np
from jax.experimental import pallas as pl
from jax.experimental.pallas import tpu as pltpu


def parallel_synapse_kernel(x_ref, slope_ref, thres_ref, ampli_ref, bias_ref, out_ref):
    # x_ref:     (N, tileP)     batch tile, transposed: tileP on the 128-lane axis
    # slope_ref: (M, K, N, 1)   pre-arranged params (trailing unit dim -> cheap lane broadcast)
    # thres_ref: (M, K, N, 1)
    # ampli_ref: (M, K, N, 1)
    # bias_ref:  (K, 1)
    # out_ref:   (K, tileP)     transposed output tile -> fully lane-dense stores
    x = x_ref[...]                                   # (N, tileP)
    n_in, tile_p = x.shape
    m_syn = slope_ref.shape[0]
    k_out = out_ref.shape[0]

    # Hoist the batch-sized broadcast out of the m-loop (JAX does not CSE broadcast_in_dim).
    xb = jnp.broadcast_to(x[None, :, :], (k_out, n_in, tile_p))     # (K, N, tileP)

    # Seed the accumulator with the bias -> saves one (K, tileP) VPU pass at the end.
    acc = jnp.broadcast_to(bias_ref[...], (k_out, tile_p))          # (K, tileP) f32

    # n_synapse is small & static -> unrolled Python loop (M=3).  For large M switch to
    # lax.fori_loop(..., unroll=True) so live ranges / vreg pressure stay bounded.
    for m in range(m_syn):
        s = slope_ref[m]                             # (K, N, 1)
        t = thres_ref[m]                             # (K, N, 1)
        a = ampli_ref[m]                             # (K, N, 1)
        st = s * t                                   # param-sized hoists (K, N, 1)
        a2 = a * a
        # u = slope*(x - thres) computed as slope*x - slope*thres: benign fp reassociation
        # at the 1e-3 tolerance; saves a batch-sized subtract per m.
        u = s * xb - st                              # (K, N, tileP)  VPU, 100% lane occupancy
        v = a2 * jnp.tanh(u)                         # tanh on EUP; muls on VPU (co-issue)
        acc = acc + jnp.sum(v, axis=1)               # sublane reduce over N -> (K, tileP)

    out_ref[...] = acc.astype(out_ref.dtype)


def prepare_params(thres, slope, ampli, bias):
    """One-time parameter layout prep, hoisted out of the per-call path.

    (M, N, K) -> (M, K, N, 1) float32: N lands on the sublane axis of the kernel's
    (K, N, tileP) temporaries and the trailing unit dim makes the per-(k, n) scalars
    broadcast across the 128-lane tileP axis with a supported unit-dim broadcast.
    In a real model the weights would simply be stored in this layout.
    """
    def prep(p):
        return jnp.transpose(p, (0, 2, 1)).astype(jnp.float32)[..., None]
    bias2 = bias.astype(jnp.float32).reshape(-1, 1)                  # (K, 1)
    return prep(slope), prep(thres), prep(ampli), bias2


def _pick_tile_p(n_data, tile_p_max=512):
    # Big tiles amortize the ~0.35 us/grid-step overhead and lengthen the unmasked
    # lane-dense stores, but keep >= 2 grid steps when the batch allows so the
    # "parallel" batch axis can still be sharded across v7x's two TensorCores.
    if n_data <= 128:
        return 128
    half = pl.cdiv(n_data, 2)
    half_rounded = ((half + 127) // 128) * 128
    return int(max(128, min(tile_p_max, half_rounded)))


def parallel_synapse_forward(x, prepared_params, *, tile_p_max=512):
    """x: (P, N); prepared_params from prepare_params(...).  Returns (P, K) float32."""
    slope_p, thres_p, ampli_p, bias2 = prepared_params
    P, N = x.shape
    M, K, N2, _ = slope_p.shape
    assert N2 == N, "input_dim mismatch"

    tile_p = _pick_tile_p(P, tile_p_max)
    n_tiles = pl.cdiv(P, tile_p)
    P_pad = n_tiles * tile_p
    if P_pad != P:
        x = jnp.pad(x, ((0, P_pad - P), (0, 0)))       # padded rows discarded at the end
    x_t = x.astype(jnp.float32).T                      # (N, P_pad): tileP on lanes in-kernel

    # Advisory cost estimate: one tanh per (p, m, n, k) element (EUP is the binding slot).
    cost = pl.CostEstimate(
        flops=6 * P_pad * M * N * K,
        transcendentals=P_pad * M * N * K,
        bytes_accessed=4 * (P_pad * N + 3 * M * N * K + K + P_pad * K),
    )

    def build(param_pipeline_mode):
        def param_spec():
            if param_pipeline_mode is None:
                return pl.BlockSpec((M, K, N, 1), lambda i: (0, 0, 0, 0))
            # Grid-invariant blocks: single-buffering halves their VMEM footprint
            # (matters under v7x's 64 MiB) at zero cost since the block index never changes.
            return pl.BlockSpec((M, K, N, 1), lambda i: (0, 0, 0, 0),
                                pipeline_mode=param_pipeline_mode)

        return pl.pallas_call(
            parallel_synapse_kernel,
            out_shape=jax.ShapeDtypeStruct((K, P_pad), jnp.float32),
            grid_spec=pltpu.PrefetchScalarGridSpec(
                num_scalar_prefetch=0,
                grid=(n_tiles,),
                in_specs=[
                    pl.BlockSpec((N, tile_p), lambda i: (0, i)),    # x tile, pipelined
                    param_spec(),                                   # params: grid-invariant,
                    param_spec(),                                   #   stay resident in VMEM
                    param_spec(),
                    pl.BlockSpec((K, 1), lambda i: (0, 0)),
                ],
                out_specs=pl.BlockSpec((K, tile_p), lambda i: (0, i)),  # lane-dense output
            ),
            compiler_params=pltpu.CompilerParams(
                dimension_semantics=("parallel",),          # megacore / v7x 2-TC sharding
                vmem_limit_bytes=48 * 1024 * 1024,          # explicit: v5e default is 16 MiB;
            ),                                              #   leaves headroom on v7x (64 MiB)
            cost_estimate=cost,
        )

    try:
        out_t = build(pl.Buffered(1))(x_t, slope_p, thres_p, ampli_p, bias2)
        jax.block_until_ready(out_t)
    except Exception:
        # pipeline_mode=pl.Buffered(1) not supported by this jax build: fall back to the
        # default double-buffered specs (still correct, slightly larger VMEM footprint).
        out_t = build(None)(x_t, slope_p, thres_p, ampli_p, bias2)

    return out_t.T[:P]                                 # (P, K); transpose is layout plumbing


if __name__ == "__main__":
    # Small shapes consistent with the module's forward: input (n_data, input_dim).
    P, N, K, M = 256, 32, 10, 3          # n_data, input_dim, output_dim, n_synapse
    input_range = (0.0, 3.0)
    slope_init, ampli_init = 1.0, 2.0

    key = jax.random.PRNGKey(0)
    ks = jax.random.split(key, 5)

    x = jax.random.normal(ks[0], (P, N), jnp.float32)

    # Parameter init mirroring the PyTorch module (torch.rand / torch.randn shapes).
    thres = jax.random.uniform(ks[1], (M, N, K), jnp.float32,
                               input_range[0], input_range[1])
    slope = jax.random.uniform(ks[2], (M, N, K), jnp.float32) + slope_init
    ampli = jax.random.uniform(ks[3], (M, N, K), jnp.float32) + ampli_init
    bias = jax.random.normal(ks[4], (K,), jnp.float32)

    # Layout prep is done once (hoisted out of the per-call path, per the review).
    params = prepare_params(thres, slope, ampli, bias)

    out = parallel_synapse_forward(x, params)
    jax.block_until_ready(out)

    # Pure-JAX reference (mirrors the PyTorch forward exactly).
    u = slope[None] * (x[:, None, :, None] - thres[None])             # (P, M, N, K)
    ref = ((ampli[None] ** 2) * jnp.tanh(u)).sum(axis=(1, 2)) + bias  # (P, K)

    assert out.shape == (P, K)
    assert np.allclose(np.asarray(out), np.asarray(ref), rtol=1e-3, atol=1e-3)
    print("KERNEL_OK")
</pallas_src>

<mosaic_0001>
module attributes {stable_mosaic.version = 11 : i64} {
  func.func @parallel_synapse_kernel(%arg0: i32, %arg1: memref<32x128xf32, #tpu.memory_space<vmem>>, %arg2: memref<3x10x32x1xf32, #tpu.memory_space<vmem>>, %arg3: memref<3x10x32x1xf32, #tpu.memory_space<vmem>>, %arg4: memref<3x10x32x1xf32, #tpu.memory_space<vmem>>, %arg5: memref<10x1xf32, #tpu.memory_space<vmem>>, %arg6: memref<10x128xf32, #tpu.memory_space<vmem>>) attributes {dimension_semantics = [#tpu.dimension_semantics<parallel>], iteration_bounds = array<i64: 2>, scalar_prefetch = 0 : i64, scratch_operands = 0 : i64, tpu.core_type = #tpu.core_type<tc>, window_params = [{transform_indices = @transform_0, window_bounds = array<i64: 32, 128>}, {pipeline_mode = #tpu.pipeline_mode<synchronous>, transform_indices = @transform_1, window_bounds = array<i64: 3, 10, 32, 1>}, {pipeline_mode = #tpu.pipeline_mode<synchronous>, transform_indices = @transform_2, window_bounds = array<i64: 3, 10, 32, 1>}, {pipeline_mode = #tpu.pipeline_mode<synchronous>, transform_indices = @transform_3, window_bounds = array<i64: 3, 10, 32, 1>}, {pipeline_mode = #tpu.pipeline_mode<synchronous>, transform_indices = @transform_4, window_bounds = array<i64: 10, 1>}, {transform_indices = @transform_5, window_bounds = array<i64: 10, 128>}]} {
    %c0 = arith.constant 0 : index
    %c0_0 = arith.constant 0 : index
    %0 = vector.load %arg1[%c0, %c0_0] : memref<32x128xf32, #tpu.memory_space<vmem>>, vector<32x128xf32>
    %1 = vector.shape_cast %0 : vector<32x128xf32> to vector<1x32x128xf32>
    %2 = vector.shape_cast %1 : vector<1x32x128xf32> to vector<1x32x128xf32>
    %3 = vector.broadcast %2 : vector<1x32x128xf32> to vector<10x32x128xf32>
    %c0_1 = arith.constant 0 : index
    %c0_2 = arith.constant 0 : index
    %4 = vector.load %arg5[%c0_1, %c0_2] : memref<10x1xf32, #tpu.memory_space<vmem>>, vector<10x1xf32>
    %5 = vector.shape_cast %4 : vector<10x1xf32> to vector<10x1xf32>
    %6 = vector.broadcast %5 : vector<10x1xf32> to vector<10x128xf32>
    %c0_3 = arith.constant 0 : index
    %c0_4 = arith.constant 0 : index
    %c0_5 = arith.constant 0 : index
    %c0_6 = arith.constant 0 : index
    %7 = vector.load %arg2[%c0_3, %c0_4, %c0_5, %c0_6] : memref<3x10x32x1xf32, #tpu.memory_space<vmem>>, vector<1x10x32x1xf32>
    %8 = vector.shape_cast %7 : vector<1x10x32x1xf32> to vector<10x32x1xf32>
    %c0_7 = arith.constant 0 : index
    %c0_8 = arith.constant 0 : index
    %c0_9 = arith.constant 0 : index
    %c0_10 = arith.constant 0 : index
    %9 = vector.load %arg3[%c0_7, %c0_8, %c0_9, %c0_10] : memref<3x10x32x1xf32, #tpu.memory_space<vmem>>, vector<1x10x32x1xf32>
    %10 = vector.shape_cast %9 : vector<1x10x32x1xf32> to vector<10x32x1xf32>
    %c0_11 = arith.constant 0 : index
    %c0_12 = arith.constant 0 : index
    %c0_13 = arith.constant 0 : index
    %c0_14 = arith.constant 0 : index
    %11 = vector.load %arg4[%c0_11, %c0_12, %c0_13, %c0_14] : memref<3x10x32x1xf32, #tpu.memory_space<vmem>>, vector<1x10x32x1xf32>
    %12 = vector.shape_cast %11 : vector<1x10x32x1xf32> to vector<10x32x1xf32>
    %13 = arith.mulf %8, %10 : vector<10x32x1xf32>
    %14 = arith.mulf %12, %12 : vector<10x32x1xf32>
    %15 = vector.broadcast %8 : vector<10x32x1xf32> to vector<10x32x128xf32>
    %16 = arith.mulf %15, %3 : vector<10x32x128xf32>
    %17 = vector.broadcast %13 : vector<10x32x1xf32> to vector<10x32x128xf32>
    %18 = arith.subf %16, %17 : vector<10x32x128xf32>
    %19 = math.tanh %18 : vector<10x32x128xf32>
    %20 = vector.broadcast %14 : vector<10x32x1xf32> to vector<10x32x128xf32>
    %21 = arith.mulf %20, %19 : vector<10x32x128xf32>
    %cst = arith.constant dense<0.000000e+00> : vector<10x128xf32>
    %22 = vector.multi_reduction <add>, %21, %cst [1] : vector<10x32x128xf32> to vector<10x128xf32>
    %23 = arith.addf %6, %22 : vector<10x128xf32>
    %c1 = arith.constant 1 : index
    %c0_15 = arith.constant 0 : index
    %c0_16 = arith.constant 0 : index
    %c0_17 = arith.constant 0 : index
    %24 = vector.load %arg2[%c1, %c0_15, %c0_16, %c0_17] : memref<3x10x32x1xf32, #tpu.memory_space<vmem>>, vector<1x10x32x1xf32>
    %25 = vector.shape_cast %24 : vector<1x10x32x1xf32> to vector<10x32x1xf32>
    %c1_18 = arith.constant 1 : index
    %c0_19 = arith.constant 0 : index
    %c0_20 = arith.constant 0 : index
    %c0_21 = arith.constant 0 : index
    %26 = vector.load %arg3[%c1_18, %c0_19, %c0_20, %c0_21] : memref<3x10x32x1xf32, #tpu.memory_space<vmem>>, vector<1x10x32x1xf32>
    %27 = vector.shape_cast %26 : vector<1x10x32x1xf32> to vector<10x32x1xf32>
    %c1_22 = arith.constant 1 : index
    %c0_23 = arith.constant 0 : index
    %c0_24 = arith.constant 0 : index
    %c0_25 = arith.constant 0 : index
    %28 = vector.load %arg4[%c1_22, %c0_23, %c0_24, %c0_25] : memref<3x10x32x1xf32, #tpu.memory_space<vmem>>, vector<1x10x32x1xf32>
    %29 = vector.shape_cast %28 : vector<1x10x32x1xf32> to vector<10x32x1xf32>
    %30 = arith.mulf %25, %27 : vector<10x32x1xf32>
    %31 = arith.mulf %29, %29 : vector<10x32x1xf32>
    %32 = vector.broadcast %25 : vector<10x32x1xf32> to vector<10x32x128xf32>
    %33 = arith.mulf %32, %3 : vector<10x32x128xf32>
    %34 = vector.broadcast %30 : vector<10x32x1xf32> to vector<10x32x128xf32>
    %35 = arith.subf %33, %34 : vector<10x32x128xf32>
    %36 = math.tanh %35 : vector<10x32x128xf32>
    %37 = vector.broadcast %31 : vector<10x32x1xf32> to vector<10x32x128xf32>
    %38 = arith.mulf %37, %36 : vector<10x32x128xf32>
    %cst_26 = arith.constant dense<0.000000e+00> : vector<10x128xf32>
    %39 = vector.multi_reduction <add>, %38, %cst_26 [1] : vector<10x32x128xf32> to vector<10x128xf32>
    %40 = arith.addf %23, %39 : vector<10x128xf32>
    %c2 = arith.constant 2 : index
    %c0_27 = arith.constant 0 : index
    %c0_28 = arith.constant 0 : index
    %c0_29 = arith.constant 0 : index
    %41 = vector.load %arg2[%c2, %c0_27, %c0_28, %c0_29] : memref<3x10x32x1xf32, #tpu.memory_space<vmem>>, vector<1x10x32x1xf32>
    %42 = vector.shape_cast %41 : vector<1x10x32x1xf32> to vector<10x32x1xf32>
    %c2_30 = arith.constant 2 : index
    %c0_31 = arith.constant 0 : index
    %c0_32 = arith.constant 0 : index
    %c0_33 = arith.constant 0 : index
    %43 = vector.load %arg3[%c2_30, %c0_31, %c0_32, %c0_33] : memref<3x10x32x1xf32, #tpu.memory_space<vmem>>, vector<1x10x32x1xf32>
    %44 = vector.shape_cast %43 : vector<1x10x32x1xf32> to vector<10x32x1xf32>
    %c2_34 = arith.constant 2 : index
    %c0_35 = arith.constant 0 : index
    %c0_36 = arith.constant 0 : index
    %c0_37 = arith.constant 0 : index
    %45 = vector.load %arg4[%c2_34, %c0_35, %c0_36, %c0_37] : memref<3x10x32x1xf32, #tpu.memory_space<vmem>>, vector<1x10x32x1xf32>
    %46 = vector.shape_cast %45 : vector<1x10x32x1xf32> to vector<10x32x1xf32>
    %47 = arith.mulf %42, %44 : vector<10x32x1xf32>
    %48 = arith.mulf %46, %46 : vector<10x32x1xf32>
    %49 = vector.broadcast %42 : vector<10x32x1xf32> to vector<10x32x128xf32>
    %50 = arith.mulf %49, %3 : vector<10x32x128xf32>
    %51 = vector.broadcast %47 : vector<10x32x1xf32> to vector<10x32x128xf32>
    %52 = arith.subf %50, %51 : vector<10x32x128xf32>
    %53 = math.tanh %52 : vector<10x32x128xf32>
    %54 = vector.broadcast %48 : vector<10x32x1xf32> to vector<10x32x128xf32>
    %55 = arith.mulf %54, %53 : vector<10x32x128xf32>
    %cst_38 = arith.constant dense<0.000000e+00> : vector<10x128xf32>
    %56 = vector.multi_reduction <add>, %55, %cst_38 [1] : vector<10x32x128xf32> to vector<10x128xf32>
    %57 = arith.addf %40, %56 : vector<10x128xf32>
    %c0_39 = arith.constant 0 : index
    %c0_40 = arith.constant 0 : index
    %58 = vector.load %arg6[%c0_39, %c0_40] : memref<10x128xf32, #tpu.memory_space<vmem>>, vector<10x128xf32>
    tpu.vector_store %arg6[%c0_39, %c0_40], %57 {strides = array<i32>} : memref<10x128xf32, #tpu.memory_space<vmem>>, vector<10x128xf32>,
    return
  }
  func.func @transform_0(%arg0: i32) -> (i32, i32) {
    %c0_i32 = arith.constant 0 : i32
    %c0_i32_0 = arith.constant 0 : i32
    return %c0_i32, %arg0 : i32, i32
  }
  func.func @transform_1(%arg0: i32) -> (i32, i32, i32, i32) {
    %c0_i32 = arith.constant 0 : i32
    %c0_i32_0 = arith.constant 0 : i32
    %c0_i32_1 = arith.constant 0 : i32
    %c0_i32_2 = arith.constant 0 : i32
    %c0_i32_3 = arith.constant 0 : i32
    return %c0_i32, %c0_i32_0, %c0_i32_1, %c0_i32_2 : i32, i32, i32, i32
  }
  func.func @transform_2(%arg0: i32) -> (i32, i32, i32, i32) {
    %c0_i32 = arith.constant 0 : i32
    %c0_i32_0 = arith.constant 0 : i32
    %c0_i32_1 = arith.constant 0 : i32
    %c0_i32_2 = arith.constant 0 : i32
    %c0_i32_3 = arith.constant 0 : i32
    return %c0_i32, %c0_i32_0, %c0_i32_1, %c0_i32_2 : i32, i32, i32, i32
  }
  func.func @transform_3(%arg0: i32) -> (i32, i32, i32, i32) {
    %c0_i32 = arith.constant 0 : i32
    %c0_i32_0 = arith.constant 0 : i32
    %c0_i32_1 = arith.constant 0 : i32
    %c0_i32_2 = arith.constant 0 : i32
    %c0_i32_3 = arith.constant 0 : i32
    return %c0_i32, %c0_i32_0, %c0_i32_1, %c0_i32_2 : i32, i32, i32, i32
  }
  func.func @transform_4(%arg0: i32) -> (i32, i32) {
    %c0_i32 = arith.constant 0 : i32
    %c0_i32_0 = arith.constant 0 : i32
    %c0_i32_1 = arith.constant 0 : i32
    return %c0_i32, %c0_i32_0 : i32, i32
  }
  func.func @transform_5(%arg0: i32) -> (i32, i32) {
    %c0_i32 = arith.constant 0 : i32
    %c0_i32_0 = arith.constant 0 : i32
    return %c0_i32, %arg0 : i32, i32
  }
}

module attributes {stable_mosaic.version = 11 : i64} {
  func.func @parallel_synapse_kernel(%arg0: i32, %arg1: memref<32x128xf32, #tpu.memory_space<vmem>>, %arg2: memref<3x10x32x1xf32, #tpu.memory_space<vmem>>, %arg3: memref<3x10x32x1xf32, #tpu.memory_space<vmem>>, %arg4: memref<3x10x32x1xf32, #tpu.memory_space<vmem>>, %arg5: memref<10x1xf32, #tpu.memory_space<vmem>>, %arg6: memref<10x128xf32, #tpu.memory_space<vmem>>) attributes {dimension_semantics = [#tpu.dimension_semantics<parallel>], iteration_bounds = array<i64: 2>, scalar_prefetch = 0 : i64, scratch_operands = 0 : i64, tpu.core_type = #tpu.core_type<tc>, window_params = [{transform_indices = @transform_0, window_bounds = array<i64: 32, 128>}, {pipeline_mode = #tpu.pipeline_mode<synchronous>, transform_indices = @transform_1, window_bounds = array<i64: 3, 10, 32, 1>}, {pipeline_mode = #tpu.pipeline_mode<synchronous>, transform_indices = @transform_2, window_bounds = array<i64: 3, 10, 32, 1>}, {pipeline_mode = #tpu.pipeline_mode<synchronous>, transform_indices = @transform_3, window_bounds = array<i64: 3, 10, 32, 1>}, {pipeline_mode = #tpu.pipeline_mode<synchronous>, transform_indices = @transform_4, window_bounds = array<i64: 10, 1>}, {transform_indices = @transform_5, window_bounds = array<i64: 10, 128>}]} {
    %c0 = arith.constant 0 : index
    %c0_0 = arith.constant 0 : index
    %0 = vector.load %arg1[%c0, %c0_0] : memref<32x128xf32, #tpu.memory_space<vmem>>, vector<32x128xf32>
    %1 = vector.shape_cast %0 : vector<32x128xf32> to vector<1x32x128xf32>
    %2 = vector.shape_cast %1 : vector<1x32x128xf32> to vector<1x32x128xf32>
    %3 = vector.broadcast %2 : vector<1x32x128xf32> to vector<10x32x128xf32>
    %c0_1 = arith.constant 0 : index
    %c0_2 = arith.constant 0 : index
    %4 = vector.load %arg5[%c0_1, %c0_2] : memref<10x1xf32, #tpu.memory_space<vmem>>, vector<10x1xf32>
    %5 = vector.shape_cast %4 : vector<10x1xf32> to vector<10x1xf32>
    %6 = vector.broadcast %5 : vector<10x1xf32> to vector<10x128xf32>
    %c0_3 = arith.constant 0 : index
    %c0_4 = arith.constant 0 : index
    %c0_5 = arith.constant 0 : index
    %c0_6 = arith.constant 0 : index
    %7 = vector.load %arg2[%c0_3, %c0_4, %c0_5, %c0_6] : memref<3x10x32x1xf32, #tpu.memory_space<vmem>>, vector<1x10x32x1xf32>
    %8 = vector.shape_cast %7 : vector<1x10x32x1xf32> to vector<10x32x1xf32>
    %c0_7 = arith.constant 0 : index
    %c0_8 = arith.constant 0 : index
    %c0_9 = arith.constant 0 : index
    %c0_10 = arith.constant 0 : index
    %9 = vector.load %arg3[%c0_7, %c0_8, %c0_9, %c0_10] : memref<3x10x32x1xf32, #tpu.memory_space<vmem>>, vector<1x10x32x1xf32>
    %10 = vector.shape_cast %9 : vector<1x10x32x1xf32> to vector<10x32x1xf32>
    %c0_11 = arith.constant 0 : index
    %c0_12 = arith.constant 0 : index
    %c0_13 = arith.constant 0 : index
    %c0_14 = arith.constant 0 : index
    %11 = vector.load %arg4[%c0_11, %c0_12, %c0_13, %c0_14] : memref<3x10x32x1xf32, #tpu.memory_space<vmem>>, vector<1x10x32x1xf32>
    %12 = vector.shape_cast %11 : vector<1x10x32x1xf32> to vector<10x32x1xf32>
    %13 = arith.mulf %8, %10 : vector<10x32x1xf32>
    %14 = arith.mulf %12, %12 : vector<10x32x1xf32>
    %15 = vector.broadcast %8 : vector<10x32x1xf32> to vector<10x32x128xf32>
    %16 = arith.mulf %15, %3 : vector<10x32x128xf32>
    %17 = vector.broadcast %13 : vector<10x32x1xf32> to vector<10x32x128xf32>
    %18 = arith.subf %16, %17 : vector<10x32x128xf32>
    %19 = math.tanh %18 : vector<10x32x128xf32>
    %20 = vector.broadcast %14 : vector<10x32x1xf32> to vector<10x32x128xf32>
    %21 = arith.mulf %20, %19 : vector<10x32x128xf32>
    %cst = arith.constant dense<0.000000e+00> : vector<10x128xf32>
    %22 = vector.multi_reduction <add>, %21, %cst [1] : vector<10x32x128xf32> to vector<10x128xf32>
    %23 = arith.addf %6, %22 : vector<10x128xf32>
    %c1 = arith.constant 1 : index
    %c0_15 = arith.constant 0 : index
    %c0_16 = arith.constant 0 : index
    %c0_17 = arith.constant 0 : index
    %24 = vector.load %arg2[%c1, %c0_15, %c0_16, %c0_17] : memref<3x10x32x1xf32, #tpu.memory_space<vmem>>, vector<1x10x32x1xf32>
    %25 = vector.shape_cast %24 : vector<1x10x32x1xf32> to vector<10x32x1xf32>
    %c1_18 = arith.constant 1 : index
    %c0_19 = arith.constant 0 : index
    %c0_20 = arith.constant 0 : index
    %c0_21 = arith.constant 0 : index
    %26 = vector.load %arg3[%c1_18, %c0_19, %c0_20, %c0_21] : memref<3x10x32x1xf32, #tpu.memory_space<vmem>>, vector<1x10x32x1xf32>
    %27 = vector.shape_cast %26 : vector<1x10x32x1xf32> to vector<10x32x1xf32>
    %c1_22 = arith.constant 1 : index
    %c0_23 = arith.constant 0 : index
    %c0_24 = arith.constant 0 : index
    %c0_25 = arith.constant 0 : index
    %28 = vector.load %arg4[%c1_22, %c0_23, %c0_24, %c0_25] : memref<3x10x32x1xf32, #tpu.memory_space<vmem>>, vector<1x10x32x1xf32>
    %29 = vector.shape_cast %28 : vector<1x10x32x1xf32> to vector<10x32x1xf32>
    %30 = arith.mulf %25, %27 : vector<10x32x1xf32>
    %31 = arith.mulf %29, %29 : vector<10x32x1xf32>
    %32 = vector.broadcast %25 : vector<10x32x1xf32> to vector<10x32x128xf32>
    %33 = arith.mulf %32, %3 : vector<10x32x128xf32>
    %34 = vector.broadcast %30 : vector<10x32x1xf32> to vector<10x32x128xf32>
    %35 = arith.subf %33, %34 : vector<10x32x128xf32>
    %36 = math.tanh %35 : vector<10x32x128xf32>
    %37 = vector.broadcast %31 : vector<10x32x1xf32> to vector<10x32x128xf32>
    %38 = arith.mulf %37, %36 : vector<10x32x128xf32>
    %cst_26 = arith.constant dense<0.000000e+00> : vector<10x128xf32>
    %39 = vector.multi_reduction <add>, %38, %cst_26 [1] : vector<10x32x128xf32> to vector<10x128xf32>
    %40 = arith.addf %23, %39 : vector<10x128xf32>
    %c2 = arith.constant 2 : index
    %c0_27 = arith.constant 0 : index
    %c0_28 = arith.constant 0 : index
    %c0_29 = arith.constant 0 : index
    %41 = vector.load %arg2[%c2, %c0_27, %c0_28, %c0_29] : memref<3x10x32x1xf32, #tpu.memory_space<vmem>>, vector<1x10x32x1xf32>
    %42 = vector.shape_cast %41 : vector<1x10x32x1xf32> to vector<10x32x1xf32>
    %c2_30 = arith.constant 2 : index
    %c0_31 = arith.constant 0 : index
    %c0_32 = arith.constant 0 : index
    %c0_33 = arith.constant 0 : index
    %43 = vector.load %arg3[%c2_30, %c0_31, %c0_32, %c0_33] : memref<3x10x32x1xf32, #tpu.memory_space<vmem>>, vector<1x10x32x1xf32>
    %44 = vector.shape_cast %43 : vector<1x10x32x1xf32> to vector<10x32x1xf32>
    %c2_34 = arith.constant 2 : index
    %c0_35 = arith.constant 0 : index
    %c0_36 = arith.constant 0 : index
    %c0_37 = arith.constant 0 : index
    %45 = vector.load %arg4[%c2_34, %c0_35, %c0_36, %c0_37] : memref<3x10x32x1xf32, #tpu.memory_space<vmem>>, vector<1x10x32x1xf32>
    %46 = vector.shape_cast %45 : vector<1x10x32x1xf32> to vector<10x32x1xf32>
    %47 = arith.mulf %42, %44 : vector<10x32x1xf32>
    %48 = arith.mulf %46, %46 : vector<10x32x1xf32>
    %49 = vector.broadcast %42 : vector<10x32x1xf32> to vector<10x32x128xf32>
    %50 = arith.mulf %49, %3 : vector<10x32x128xf32>
    %51 = vector.broadcast %47 : vector<10x32x1xf32> to vector<10x32x128xf32>
    %52 = arith.subf %50, %51 : vector<10x32x128xf32>
    %53 = math.tanh %52 : vector<10x32x128xf32>
    %54 = vector.broadcast %48 : vector<10x32x1xf32> to vector<10x32x128xf32>
    %55 = arith.mulf %54, %53 : vector<10x32x128xf32>
    %cst_38 = arith.constant dense<0.000000e+00> : vector<10x128xf32>
    %56 = vector.multi_reduction <add>, %55, %cst_38 [1] : vector<10x32x128xf32> to vector<10x128xf32>
    %57 = arith.addf %40, %56 : vector<10x128xf32>
    %c0_39 = arith.constant 0 : index
    %c0_40 = arith.constant 0 : index
    %58 = vector.load %arg6[%c0_39, %c0_40] : memref<10x128xf32, #tpu.memory_space<vmem>>, vector<10x128xf32>
    tpu.vector_store %arg6[%c0_39, %c0_40], %57 {strides = array<i32>} : memref<10x128xf32, #tpu.memory_space<vmem>>, vector<10x128xf32>,
    return
  }
  func.func @transform_0(%arg0: i32) -> (i32, i32) {
    %c0_i32 = arith.constant 0 : i32
    %c0_i32_0 = arith.constant 0 : i32
    return %c0_i32, %arg0 : i32, i32
  }
  func.func @transform_1(%arg0: i32) -> (i32, i32, i32, i32) {
    %c0_i32 = arith.constant 0 : i32
    %c0_i32_0 = arith.constant 0 : i32
    %c0_i32_1 = arith.constant 0 : i32
    %c0_i32_2 = arith.constant 0 : i32
    %c0_i32_3 = arith.constant 0 : i32
    return %c0_i32, %c0_i32_0, %c0_i32_1, %c0_i32_2 : i32, i32, i32, i32
  }
  func.func @transform_2(%arg0: i32) -> (i32, i32, i32, i32) {
    %c0_i32 = arith.constant 0 : i32
    %c0_i32_0 = arith.constant 0 : i32
    %c0_i32_1 = arith.constant 0 : i32
    %c0_i32_2 = arith.constant 0 : i32
    %c0_i32_3 = arith.constant 0 : i32
    return %c0_i32, %c0_i32_0, %c0_i32_1, %c0_i32_2 : i32, i32, i32, i32
  }
  func.func @transform_3(%arg0: i32) -> (i32, i32, i32, i32) {
    %c0_i32 = arith.constant 0 : i32
    %c0_i32_0 = arith.constant 0 : i32
    %c0_i32_1 = arith.constant 0 : i32
    %c0_i32_2 = arith.constant 0 : i32
    %c0_i32_3 = arith.constant 0 : i32
    return %c0_i32, %c0_i32_0, %c0_i32_1, %c0_i32_2 : i32, i32, i32, i32
  }
  func.func @transform_4(%arg0: i32) -> (i32, i32) {
    %c0_i32 = arith.constant 0 : i32
    %c0_i32_0 = arith.constant 0 : i32
    %c0_i32_1 = arith.constant 0 : i32
    return %c0_i32, %c0_i32_0 : i32, i32
  }
  func.func @transform_5(%arg0: i32) -> (i32, i32) {
    %c0_i32 = arith.constant 0 : i32
    %c0_i32_0 = arith.constant 0 : i32
    return %c0_i32, %arg0 : i32, i32
  }
}

</mosaic_0001>

<llo_original>
// kernel: tpu_custom_call.1
$region0: #{tpu_custom_call.1}
  #allocation0 [shape = 'u32[]', space=smem, size = 0x4, offset = 0x4, fixed_abs, tag = 'smem constant byte address 0x4 - core index']
  #allocation1 [shape = 'u32[144,128]{1,0:T(1,128)}', space=vmem, size = 0x12000, scoped, tag = 'internal scratch']
  %s0 = inlined_call_operand.vmem [shape: f32[32,256], index: 0, kind: input, shape index: {}]
  %s1 = inlined_call_operand.vmem [shape: f32[3,10,32,1], index: 1, kind: input, shape index: {}]
  %s2 = inlined_call_operand.vmem [shape: f32[3,10,32,1], index: 2, kind: input, shape index: {}]
  %s3 = inlined_call_operand.vmem [shape: f32[3,10,32,1], index: 3, kind: input, shape index: {}]
  %s4 = inlined_call_operand.vmem [shape: f32[10,1], index: 4, kind: input, shape index: {}]
  %s5 = inlined_call_operand.hbm [shape: f32[10,256], index: 5, kind: output, shape index: {}]
  %s6 = sld [smem:[#allocation0]]
  $region91: #{tpu_custom_call.1} parent=0
    _
  %s8 = ssub.s32 1, %s6
  %s9 = scalar_select 0, %s8, %s6
  $region1: #{tpu_custom_call.1} parent=0
    #allocation2 [shape = 'u8[32768]{0}', space=vmem, size = 0x8000, scoped, tag = 'input window, operand 0']
    #allocation3 [shape = 'u8[16384]{0}', space=vmem, size = 0x4000, scoped, tag = 'output window, operand 0']
    #allocation4 [shape = 's32[2]{0}', space=sflag, size = 0x8, scoped, tag = 'scoped memory for tpu_custom_call.1']
    %10 = vsyncpa [#allocation4], 0
    %s11 = scalar_lea.sflag [#allocation4], 1
    %12 = vsyncpa %s11, 0
    loop: start=0, step=1, limit=4
    $region2: #{tpu_custom_call.1} parent=1 // loop_pre_header
      _
    $region3: #{tpu_custom_call.1} parent=1 // loop_header
      %s14 = sphi 0, %s18
      %p15 = scmp.ge.s32.totalorder %s14, 4
      %s24 = sphi 0, %s26
      %s27 = sphi 0, %s24
      %s28 = sphi 0, %s27
      %s44 = sphi 0, %s28
      %s48 = sphi 0, %s48
      %s50 = sphi 0, %s48
      %s51 = sphi 0, %s50
      %s65 = sphi 0, %s51
      %s69 = sphi 0, %s69
      %s71 = sphi 0, %s69
      %s72 = sphi 0, %s71
      %s86 = sphi 0, %s72
      %s90 = sphi 0, %s90
      %s92 = sphi 0, %s90
      %s93 = sphi 0, %s92
      %s107 = sphi 0, %s93
      %s111 = sphi 0, %s111
      %s113 = sphi 0, %s111
      %s114 = sphi 0, %s113
      %s128 = sphi 0, %s114
      %s134 = sphi 0, %s136
      %s137 = sphi 0, %s134
      %s138 = sphi 0, %s137
      %s154 = sphi 0, %s138
    $region4: #{tpu_custom_call.1} parent=1 // loop_header_branch
      %17 = sbr.rel (%p15) target = $region8
    $region5: #{tpu_custom_call.1} parent=1 // loop_body
      %s19 = ssub.s32 %s14, 1
      %s20 = ssub.s32 %s14, 2
      %s21 = sadd.s32 %s14, 1
      %s22 = ssub.s32 %s14, %s21
      %p23 = scmp.eq.s32.totalorder %s22, 0
      %s25 = sadd.s32 %s24, 1
      %s26 = scalar_select %p23, %s24, %s25
      %p29 = pneg %p23
      %p30 = scmp.eq.s32.totalorder %s14, 1
      %p31 = por %p29, %p30
      %p32 = scmp.ne.s32.totalorder %s24, %s27
      %p33 = scmp.eq.s32.totalorder %s14, 0
      %p34 = por %p32, %p33
      %p35 = scmp.ne.s32.totalorder %s24, %s27
      %p36 = scmp.eq.s32.totalorder %s19, 1
      %p37 = por %p35, %p36
      %p38 = scmp.ne.s32.totalorder %s27, %s28
      %p39 = scmp.eq.s32.totalorder %s19, 0
      %p40 = por %p38, %p39
      %p41 = scmp.ne.s32.totalorder %s27, %s28
      %p42 = scmp.eq.s32.totalorder %s20, 1
      %p43 = por %p41, %p42
      %p45 = scmp.ne.s32.totalorder %s28, %s44
      %p46 = scmp.eq.s32.totalorder %s20, 0
      %p47 = por %p45, %p46
      %s49 = sadd.s32 %s48, 1
      %p52 = scmp.eq.s32.totalorder %s14, 1
      %p53 = scmp.ne.s32.totalorder %s48, %s50
      %p54 = scmp.eq.s32.totalorder %s14, 0
      %p55 = por %p53, %p54
      %p56 = scmp.ne.s32.totalorder %s48, %s50
      %p57 = scmp.eq.s32.totalorder %s19, 1
      %p58 = por %p56, %p57
      %p59 = scmp.ne.s32.totalorder %s50, %s51
      %p60 = scmp.eq.s32.totalorder %s19, 0
      %p61 = por %p59, %p60
      %p62 = scmp.ne.s32.totalorder %s50, %s51
      %p63 = scmp.eq.s32.totalorder %s20, 1
      %p64 = por %p62, %p63
      %p66 = scmp.ne.s32.totalorder %s51, %s65
      %p67 = scmp.eq.s32.totalorder %s20, 0
      %p68 = por %p66, %p67
      %s70 = sadd.s32 %s69, 1
      %p73 = scmp.eq.s32.totalorder %s14, 1
      %p74 = scmp.ne.s32.totalorder %s69, %s71
      %p75 = scmp.eq.s32.totalorder %s14, 0
      %p76 = por %p74, %p75
      %p77 = scmp.ne.s32.totalorder %s69, %s71
      %p78 = scmp.eq.s32.totalorder %s19, 1
      %p79 = por %p77, %p78
      %p80 = scmp.ne.s32.totalorder %s71, %s72
      %p81 = scmp.eq.s32.totalorder %s19, 0
      %p82 = por %p80, %p81
      %p83 = scmp.ne.s32.totalorder %s71, %s72
      %p84 = scmp.eq.s32.totalorder %s20, 1
      %p85 = por %p83, %p84
      %p87 = scmp.ne.s32.totalorder %s72, %s86
      %p88 = scmp.eq.s32.totalorder %s20, 0
      %p89 = por %p87, %p88
      %s91 = sadd.s32 %s90, 1
      %p94 = scmp.eq.s32.totalorder %s14, 1
      %p95 = scmp.ne.s32.totalorder %s90, %s92
      %p96 = scmp.eq.s32.totalorder %s14, 0
      %p97 = por %p95, %p96
      %p98 = scmp.ne.s32.totalorder %s90, %s92
      %p99 = scmp.eq.s32.totalorder %s19, 1
      %p100 = por %p98, %p99
      %p101 = scmp.ne.s32.totalorder %s92, %s93
      %p102 = scmp.eq.s32.totalorder %s19, 0
      %p103 = por %p101, %p102
      %p104 = scmp.ne.s32.totalorder %s92, %s93
      %p105 = scmp.eq.s32.totalorder %s20, 1
      %p106 = por %p104, %p105
      %p108 = scmp.ne.s32.totalorder %s93, %s107
      %p109 = scmp.eq.s32.totalorder %s20, 0
      %p110 = por %p108, %p109
      %s112 = sadd.s32 %s111, 1
      %p115 = scmp.eq.s32.totalorder %s14, 1
      %p116 = scmp.ne.s32.totalorder %s111, %s113
      %p117 = scmp.eq.s32.totalorder %s14, 0
      %p118 = por %p116, %p117
      %p119 = scmp.ne.s32.totalorder %s111, %s113
      %p120 = scmp.eq.s32.totalorder %s19, 1
      %p121 = por %p119, %p120
      %p122 = scmp.ne.s32.totalorder %s113, %s114
      %p123 = scmp.eq.s32.totalorder %s19, 0
      %p124 = por %p122, %p123
      %p125 = scmp.ne.s32.totalorder %s113, %s114
      %p126 = scmp.eq.s32.totalorder %s20, 1
      %p127 = por %p125, %p126
      %p129 = scmp.ne.s32.totalorder %s114, %s128
      %p130 = scmp.eq.s32.totalorder %s20, 0
      %p131 = por %p129, %p130
      %s132 = ssub.s32 %s14, %s21
      %p133 = scmp.eq.s32.totalorder %s132, 0
      %s135 = sadd.s32 %s134, 1
      %s136 = scalar_select %p133, %s134, %s135
      %p139 = pneg %p133
      %p140 = scmp.eq.s32.totalorder %s14, 1
      %p141 = por %p139, %p140
      %p142 = scmp.ne.s32.totalorder %s134, %s137
      %p143 = scmp.eq.s32.totalorder %s14, 0
      %p144 = por %p142, %p143
      %p145 = scmp.ne.s32.totalorder %s134, %s137
      %p146 = scmp.eq.s32.totalorder %s19, 1
      %p147 = por %p145, %p146
      %p148 = scmp.ne.s32.totalorder %s137, %s138
      %p149 = scmp.eq.s32.totalorder %s19, 0
      %p150 = por %p148, %p149
      %p151 = scmp.ne.s32.totalorder %s137, %s138
      %p152 = scmp.eq.s32.totalorder %s20, 1
      %p153 = por %p151, %p152
      %p155 = scmp.ne.s32.totalorder %s138, %s154
      %p156 = scmp.eq.s32.totalorder %s20, 0
      %p157 = por %p155, %p156
      %p158 = scmp.le.s32.totalorder 1, %s14
      %p159 = scmp.lt.s32.totalorder %s14, 3
      %p160 = pnand %p158, %p159
      %p161 = pneg %p160
      // Predicated region
      $region9: #{tpu_custom_call.1} parent=5 // pred_check
        _
      $region10: #{tpu_custom_call.1} parent=5 // pred_check_branch
        %163 = sbr.rel (%p160) target = $region12
      $region11: #{tpu_custom_call.1} parent=5 // pred_region
        %s164 = ssub.s32 %s14, 1
        // Predicated region
        $region13: #{tpu_custom_call.1} parent=11 // pred_check
          %p165 = pneg %p61
        $region14: #{tpu_custom_call.1} parent=11 // pred_check_branch
          %167 = sbr.rel (%p165) target = $region16
        $region15: #{tpu_custom_call.1} parent=11 // pred_region
          _
        $region16: #{tpu_custom_call.1} parent=11 // pred_fallthru
          _
        // Predicated region
        $region17: #{tpu_custom_call.1} parent=11 // pred_check
          %p168 = pneg %p82
        $region18: #{tpu_custom_call.1} parent=11 // pred_check_branch
          %170 = sbr.rel (%p168) target = $region20
        $region19: #{tpu_custom_call.1} parent=11 // pred_region
          _
        $region20: #{tpu_custom_call.1} parent=11 // pred_fallthru
          _
        // Predicated region
        $region21: #{tpu_custom_call.1} parent=11 // pred_check
          %p171 = pneg %p103
        $region22: #{tpu_custom_call.1} parent=11 // pred_check_branch
          %173 = sbr.rel (%p171) target = $region24
        $region23: #{tpu_custom_call.1} parent=11 // pred_region
          _
        $region24: #{tpu_custom_call.1} parent=11 // pred_fallthru
          _
        // Predicated region
        $region25: #{tpu_custom_call.1} parent=11 // pred_check
          %p174 = pneg %p124
        $region26: #{tpu_custom_call.1} parent=11 // pred_check_branch
          %176 = sbr.rel (%p174) target = $region28
        $region27: #{tpu_custom_call.1} parent=11 // pred_region
          _
        $region28: #{tpu_custom_call.1} parent=11 // pred_fallthru
          _
      $region12: #{tpu_custom_call.1} parent=5 // pred_fallthru
        _
      %p177 = scmp.lt.s32.totalorder %s14, 2
      // Predicated region
      $region29: #{tpu_custom_call.1} parent=5 // pred_check
        %p178 = pneg %p177
      $region30: #{tpu_custom_call.1} parent=5 // pred_check_branch
        %180 = sbr.rel (%p178) target = $region32
      $region31: #{tpu_custom_call.1} parent=5 // pred_region
        // Predicated region
        $region33: #{tpu_custom_call.1} parent=31 // pred_check
          %p181 = pneg %p34
        $region34: #{tpu_custom_call.1} parent=31 // pred_check_branch
          %183 = sbr.rel (%p181) target = $region36
        $region35: #{tpu_custom_call.1} parent=31 // pred_region
          %s184 = sand.u32 %s24, 1
          %s185 = sand.u32 %s24, 1
          %s186 = smul.addr %s185, 32
          %s187 = scalar_lea.vmem [#allocation2], %s186
          %s188 = smul.addr %s14, 8
          %s189 = scalar_lea.vmem %s0, %s188
          // Predicated region
          $region37: #{tpu_custom_call.1} parent=35 // pred_check
            _
          $region38: #{tpu_custom_call.1} parent=35 // pred_check_branch
            %191 = sbr.rel (0) target = $region40
          $region39: #{tpu_custom_call.1} parent=35 // pred_region
            // Predicated region
            $region41: #{tpu_custom_call.1} parent=39 // pred_check
              _
            $region42: #{tpu_custom_call.1} parent=39 // pred_check_branch
              %193 = sbr.rel (0) target = $region44
            $region43: #{tpu_custom_call.1} parent=39 // pred_region
              // Predicated region
              $region56: #{tpu_custom_call.1} parent=43 // pred_check
                _
              $region57: #{tpu_custom_call.1} parent=43 // pred_check_branch
                %215 = sbr.rel (0) target = $region59
              $region58: #{tpu_custom_call.1} parent=43 // pred_region
                loop: start=0, step=1, limit=1
                $region60: #{tpu_custom_call.1} parent=58 // loop_pre_header
                  _
                $region61: #{tpu_custom_call.1} parent=58 // loop_header
                  %s217 = sphi 0, %s221
                  %p218 = scmp.ge.s32.totalorder %s217, 1
                  %s222 = sphi %s189, %s189
                  %s223 = sphi %s187, %s187
                $region62: #{tpu_custom_call.1} parent=58 // loop_header_branch
                  %220 = sbr.rel (%p218) target = $region66
                $region63: #{tpu_custom_call.1} parent=58 // loop_body
                  %v224 = vld [vmem:[%s222] sm:$0xff]
                  %225 = vst [vmem:[%s223] sm:$0xff] %v224
                  %v226 = vld [vmem:[%s222 + $0x10] sm:$0xff]
                  %227 = vst [vmem:[%s223 + $0x8] sm:$0xff] %v226
                  %v228 = vld [vmem:[%s222 + $0x20] sm:$0xff]
                  %229 = vst [vmem:[%s223 + $0x10] sm:$0xff] %v228
                  %v230 = vld [vmem:[%s222 + $0x30] sm:$0xff]
                  %231 = vst [vmem:[%s223 + $0x18] sm:$0xff] %v230
                $region64: #{tpu_custom_call.1} parent=58 // loop_footer
                  %s221 = sadd.s32 1, %s217
                $region65: #{tpu_custom_call.1} parent=58 // loop_footer_branch
                  %216 = sbr.rel target = $region61
                $region66: #{tpu_custom_call.1} parent=58 // loop_exit
                  _
              $region59: #{tpu_custom_call.1} parent=43 // pred_fallthru
                _
              // Predicated region
              $region67: #{tpu_custom_call.1} parent=43 // pred_check
                _
              $region68: #{tpu_custom_call.1} parent=43 // pred_check_branch
                %233 = sbr.rel target = $region70
              $region69: #{tpu_custom_call.1} parent=43 // pred_region
                _
              $region70: #{tpu_custom_call.1} parent=43 // pred_fallthru
                _
            $region44: #{tpu_custom_call.1} parent=39 // pred_fallthru
              _
            // Predicated region
            $region45: #{tpu_custom_call.1} parent=39 // pred_check
              _
            $region46: #{tpu_custom_call.1} parent=39 // pred_check_branch
              %195 = sbr.rel target = $region48
            $region47: #{tpu_custom_call.1} parent=39 // pred_region
              %s197 = ssub.s32 256, 1
              loop: start=0, step=1, limit=1
              $region49: #{tpu_custom_call.1} parent=47 // loop_pre_header
                _
              $region50: #{tpu_custom_call.1} parent=47 // loop_header
                %s199 = sphi 0, %s203
                %p200 = scmp.ge.s32.totalorder %s199, 1
                %s204 = sphi %s189, %s189
                %s205 = sphi %s187, %s187
              $region51: #{tpu_custom_call.1} parent=47 // loop_header_branch
                %202 = sbr.rel (%p200) target = $region55
              $region52: #{tpu_custom_call.1} parent=47 // loop_body
                %v206 = vld [vmem:[%s204] sm:%s197]
                %207 = vst [vmem:[%s205] sm:%s197] %v206
                %v208 = vld [vmem:[%s204 + $0x10] sm:%s197]
                %209 = vst [vmem:[%s205 + $0x8] sm:%s197] %v208
                %v210 = vld [vmem:[%s204 + $0x20] sm:%s197]
                %211 = vst [vmem:[%s205 + $0x10] sm:%s197] %v210
                %v212 = vld [vmem:[%s204 + $0x30] sm:%s197]
                %213 = vst [vmem:[%s205 + $0x18] sm:%s197] %v212
              $region53: #{tpu_custom_call.1} parent=47 // loop_footer
                %s203 = sadd.s32 1, %s199
              $region54: #{tpu_custom_call.1} parent=47 // loop_footer_branch
                %198 = sbr.rel target = $region50
              $region55: #{tpu_custom_call.1} parent=47 // loop_exit
                _
            $region48: #{tpu_custom_call.1} parent=39 // pred_fallthru
              _
          $region40: #{tpu_custom_call.1} parent=35 // pred_fallthru
            _
          %234 = vnop
        $region36: #{tpu_custom_call.1} parent=31 // pred_fallthru
          _
      $region32: #{tpu_custom_call.1} parent=5 // pred_fallthru
        _
      %p235 = scmp.le.s32.totalorder 1, %s14
      %p236 = scmp.lt.s32.totalorder %s14, 3
      %p237 = pnand %p235, %p236
      %p238 = pneg %p237
      // Predicated region
      $region71: #{tpu_custom_call.1} parent=5 // pred_check
        _
      $region72: #{tpu_custom_call.1} parent=5 // pred_check_branch
        %240 = sbr.rel (%p237) target = $region74
      $region73: #{tpu_custom_call.1} parent=5 // pred_region
        %s241 = ssub.s32 %s14, 1
        %s242 = sand.u32 %s27, 1
        %s243 = sand.u32 %s27, 1
        %s244 = smul.addr %s243, 32
        %s245 = scalar_lea.vmem [#allocation2], %s244
        // Predicated region
        $region75: #{tpu_custom_call.1} parent=73 // pred_check
          %p246 = pneg %p40
        $region76: #{tpu_custom_call.1} parent=73 // pred_check_branch
          %248 = sbr.rel (%p246) target = $region78
        $region77: #{tpu_custom_call.1} parent=73 // pred_region
          _
        $region78: #{tpu_custom_call.1} parent=73 // pred_fallthru
          _
        %s249 = sand.u32 %s27, 1
        %s250 = sand.u32 %s27, 1
        %s251 = smul.addr %s250, 32
        %s252 = scalar_lea.vmem [#allocation2], %s251
        %p253 = pneg %p40
        %p254 = pneg %p37
        %p255 = pneg %p61
        %p256 = pneg %p58
        %p257 = pneg %p82
        %p258 = pneg %p79
        %p259 = pneg %p103
        %p260 = pneg %p100
        %p261 = pneg %p124
        %p262 = pneg %p121
        %p263 = pneg %p150
        %p264 = pneg %p147
        %s265 = sand.u32 %s137, 1
        %s266 = scalar_lea.sflag [#allocation4], %s265
        %s267 = sand.u32 %s137, 1
        %s268 = smul.addr %s267, 16
        %s269 = scalar_lea.vmem [#allocation3], %s268
        %v270 = vld [vmem:[%s245] sm:$0xff]
        %v271 = vld [vmem:[%s245 + $0x8] sm:$0xff]
        %v272 = vld [vmem:[%s245 + $0x10] sm:$0xff]
        %v273 = vld [vmem:[%s245 + $0x18] sm:$0xff]
        %v274 = vld [vmem:[%s4] sm:$0xff]
        %v275 = vld [vmem:[%s4 + $0x8] sm:$0x3]
        %277 = vset.pattern.permute.xlu0 0
        %278 = vperm.xlu0 %277, %v274
        %v279 = vpop.permute.xlu0 %278
        %282 = vset.pattern.permute.xlu0 0
        %283 = vperm.xlu0 %282, %v275
        %v284 = vpop.permute.xlu0 %283
        %v286 = vld [vmem:[%s1] sm:$0xff]
        %v287 = vld [vmem:[%s1 + $0x8] sm:$0xff]
        %v288 = vld [vmem:[%s1 + $0x10] sm:$0xff]
        %v289 = vld [vmem:[%s1 + $0x18] sm:$0xff]
        %v290 = vld [vmem:[%s1 + $0x20] sm:$0xff]
        %v291 = vld [vmem:[%s1 + $0x28] sm:$0xff]
        %v292 = vld [vmem:[%s1 + $0x30] sm:$0xff]
        %v293 = vld [vmem:[%s1 + $0x38] sm:$0xff]
        %v294 = vld [vmem:[%s1 + $0x40] sm:$0xff]
        %v295 = vld [vmem:[%s1 + $0x48] sm:$0xff]
        %v296 = vld [vmem:[%s1 + $0x50] sm:$0xff]
        %v297 = vld [vmem:[%s1 + $0x58] sm:$0xff]
        %v298 = vld [vmem:[%s1 + $0x60] sm:$0xff]
        %v299 = vld [vmem:[%s1 + $0x68] sm:$0xff]
        %v300 = vld [vmem:[%s1 + $0x70] sm:$0xff]
        %v301 = vld [vmem:[%s1 + $0x78] sm:$0xff]
        %v302 = vld [vmem:[%s1 + $0x80] sm:$0xff]
        %v303 = vld [vmem:[%s1 + $0x88] sm:$0xff]
        %v304 = vld [vmem:[%s1 + $0x90] sm:$0xff]
        %v305 = vld [vmem:[%s1 + $0x98] sm:$0xff]
        %v306 = vld [vmem:[%s1 + $0xa0] sm:$0xff]
        %v307 = vld [vmem:[%s1 + $0xa8] sm:$0xff]
        %v308 = vld [vmem:[%s1 + $0xb0] sm:$0xff]
        %v309 = vld [vmem:[%s1 + $0xb8] sm:$0xff]
        %v310 = vld [vmem:[%s1 + $0xc0] sm:$0xff]
        %v311 = vld [vmem:[%s1 + $0xc8] sm:$0xff]
        %v312 = vld [vmem:[%s1 + $0xd0] sm:$0xff]
        %v313 = vld [vmem:[%s1 + $0xd8] sm:$0xff]
        %v314 = vld [vmem:[%s1 + $0xe0] sm:$0xff]
        %v315 = vld [vmem:[%s1 + $0xe8] sm:$0xff]
        %v316 = vld [vmem:[%s1 + $0xf0] sm:$0xff]
        %v317 = vld [vmem:[%s1 + $0xf8] sm:$0xff]
        %v318 = vld [vmem:[%s1 + $0x100] sm:$0xff]
        %v319 = vld [vmem:[%s1 + $0x108] sm:$0xff]
        %v320 = vld [vmem:[%s1 + $0x110] sm:$0xff]
        %v321 = vld [vmem:[%s1 + $0x118] sm:$0xff]
        %v322 = vld [vmem:[%s1 + $0x120] sm:$0xff]
        %v323 = vld [vmem:[%s1 + $0x128] sm:$0xff]
        %v324 = vld [vmem:[%s1 + $0x130] sm:$0xff]
        %v325 = vld [vmem:[%s1 + $0x138] sm:$0xff]
        %v326 = vld [vmem:[%s2] sm:$0xff]
        %v327 = vld [vmem:[%s2 + $0x8] sm:$0xff]
        %v328 = vld [vmem:[%s2 + $0x10] sm:$0xff]
        %v329 = vld [vmem:[%s2 + $0x18] sm:$0xff]
        %v330 = vld [vmem:[%s2 + $0x20] sm:$0xff]
        %v331 = vld [vmem:[%s2 + $0x28] sm:$0xff]
        %v332 = vld [vmem:[%s2 + $0x30] sm:$0xff]
        %v333 = vld [vmem:[%s2 + $0x38] sm:$0xff]
        %v334 = vld [vmem:[%s2 + $0x40] sm:$0xff]
        %v335 = vld [vmem:[%s2 + $0x48] sm:$0xff]
        %v336 = vld [vmem:[%s2 + $0x50] sm:$0xff]
        %v337 = vld [vmem:[%s2 + $0x58] sm:$0xff]
        %v338 = vld [vmem:[%s2 + $0x60] sm:$0xff]
        %v339 = vld [vmem:[%s2 + $0x68] sm:$0xff]
        %v340 = vld [vmem:[%s2 + $0x70] sm:$0xff]
        %v341 = vld [vmem:[%s2 + $0x78] sm:$0xff]
        %v342 = vld [vmem:[%s2 + $0x80] sm:$0xff]
        %v343 = vld [vmem:[%s2 + $0x88] sm:$0xff]
        %v344 = vld [vmem:[%s2 + $0x90] sm:$0xff]
        %v345 = vld [vmem:[%s2 + $0x98] sm:$0xff]
        %v346 = vld [vmem:[%s2 + $0xa0] sm:$0xff]
        %v347 = vld [vmem:[%s2 + $0xa8] sm:$0xff]
        %v348 = vld [vmem:[%s2 + $0xb0] sm:$0xff]
        %v349 = vld [vmem:[%s2 + $0xb8] sm:$0xff]
        %v350 = vld [vmem:[%s2 + $0xc0] sm:$0xff]
        %v351 = vld [vmem:[%s2 + $0xc8] sm:$0xff]
        %v352 = vld [vmem:[%s2 + $0xd0] sm:$0xff]
        %v353 = vld [vmem:[%s2 + $0xd8] sm:$0xff]
        %v354 = vld [vmem:[%s2 + $0xe0] sm:$0xff]
        %v355 = vld [vmem:[%s2 + $0xe8] sm:$0xff]
        %v356 = vld [vmem:[%s2 + $0xf0] sm:$0xff]
        %v357 = vld [vmem:[%s2 + $0xf8] sm:$0xff]
        %v358 = vld [vmem:[%s2 + $0x100] sm:$0xff]
        %v359 = vld [vmem:[%s2 + $0x108] sm:$0xff]
        %v360 = vld [vmem:[%s2 + $0x110] sm:$0xff]
        %v361 = vld [vmem:[%s2 + $0x118] sm:$0xff]
        %v362 = vld [vmem:[%s2 + $0x120] sm:$0xff]
        %v363 = vld [vmem:[%s2 + $0x128] sm:$0xff]
        %v364 = vld [vmem:[%s2 + $0x130] sm:$0xff]
        %v365 = vld [vmem:[%s2 + $0x138] sm:$0xff]
        %v366 = vld [vmem:[%s3] sm:$0xff]
        %v367 = vld [vmem:[%s3 + $0x8] sm:$0xff]
        %v368 = vld [vmem:[%s3 + $0x10] sm:$0xff]
        %v369 = vld [vmem:[%s3 + $0x18] sm:$0xff]
        %v370 = vld [vmem:[%s3 + $0x20] sm:$0xff]
        %v371 = vld [vmem:[%s3 + $0x28] sm:$0xff]
        %v372 = vld [vmem:[%s3 + $0x30] sm:$0xff]
        %v373 = vld [vmem:[%s3 + $0x38] sm:$0xff]
        %v374 = vld [vmem:[%s3 + $0x40] sm:$0xff]
        %v375 = vld [vmem:[%s3 + $0x48] sm:$0xff]
        %v376 = vld [vmem:[%s3 + $0x50] sm:$0xff]
        %v377 = vld [vmem:[%s3 + $0x58] sm:$0xff]
        %v378 = vld [vmem:[%s3 + $0x60] sm:$0xff]
        %v379 = vld [vmem:[%s3 + $0x68] sm:$0xff]
        %v380 = vld [vmem:[%s3 + $0x70] sm:$0xff]
        %v381 = vld [vmem:[%s3 + $0x78] sm:$0xff]
        %v382 = vld [vmem:[%s3 + $0x80] sm:$0xff]
        %v383 = vld [vmem:[%s3 + $0x88] sm:$0xff]
        %v384 = vld [vmem:[%s3 + $0x90] sm:$0xff]
        %v385 = vld [vmem:[%s3 + $0x98] sm:$0xff]
        %v386 = vld [vmem:[%s3 + $0xa0] sm:$0xff]
        %v387 = vld [vmem:[%s3 + $0xa8] sm:$0xff]
        %v388 = vld [vmem:[%s3 + $0xb0] sm:$0xff]
        %v389 = vld [vmem:[%s3 + $0xb8] sm:$0xff]
        %v390 = vld [vmem:[%s3 + $0xc0] sm:$0xff]
        %v391 = vld [vmem:[%s3 + $0xc8] sm:$0xff]
        %v392 = vld [vmem:[%s3 + $0xd0] sm:$0xff]
        %v393 = vld [vmem:[%s3 + $0xd8] sm:$0xff]
        %v394 = vld [vmem:[%s3 + $0xe0] sm:$0xff]
        %v395 = vld [vmem:[%s3 + $0xe8] sm:$0xff]
        %v396 = vld [vmem:[%s3 + $0xf0] sm:$0xff]
        %v397 = vld [vmem:[%s3 + $0xf8] sm:$0xff]
        %v398 = vld [vmem:[%s3 + $0x100] sm:$0xff]
        %v399 = vld [vmem:[%s3 + $0x108] sm:$0xff]
        %v400 = vld [vmem:[%s3 + $0x110] sm:$0xff]
        %v401 = vld [vmem:[%s3 + $0x118] sm:$0xff]
        %v402 = vld [vmem:[%s3 + $0x120] sm:$0xff]
        %v403 = vld [vmem:[%s3 + $0x128] sm:$0xff]
        %v404 = vld [vmem:[%s3 + $0x130] sm:$0xff]
        %v405 = vld [vmem:[%s3 + $0x138] sm:$0xff]
        %v406 = vmul.f32 %v286, %v326
        %v407 = vmul.f32 %v287, %v327
        %v408 = vmul.f32 %v288, %v328
        %v409 = vmul.f32 %v289, %v329
        %v410 = vmul.f32 %v290, %v330
        %v411 = vmul.f32 %v291, %v331
        %v412 = vmul.f32 %v292, %v332
        %v413 = vmul.f32 %v293, %v333
        %v414 = vmul.f32 %v294, %v334
        %v415 = vmul.f32 %v295, %v335
        %v416 = vmul.f32 %v296, %v336
        %v417 = vmul.f32 %v297, %v337
        %v418 = vmul.f32 %v298, %v338
        %v419 = vmul.f32 %v299, %v339
        %v420 = vmul.f32 %v300, %v340
        %v421 = vmul.f32 %v301, %v341
        %v422 = vmul.f32 %v302, %v342
        %v423 = vmul.f32 %v303, %v343
        %v424 = vmul.f32 %v304, %v344
        %v425 = vmul.f32 %v305, %v345
        %v426 = vmul.f32 %v306, %v346
        %v427 = vmul.f32 %v307, %v347
        %v428 = vmul.f32 %v308, %v348
        %v429 = vmul.f32 %v309, %v349
        %v430 = vmul.f32 %v310, %v350
        %v431 = vmul.f32 %v311, %v351
        %v432 = vmul.f32 %v312, %v352
        %v433 = vmul.f32 %v313, %v353
        %v434 = vmul.f32 %v314, %v354
        %v435 = vmul.f32 %v315, %v355
        %v436 = vmul.f32 %v316, %v356
        %v437 = vmul.f32 %v317, %v357
        %v438 = vmul.f32 %v318, %v358
        %v439 = vmul.f32 %v319, %v359
        %v440 = vmul.f32 %v320, %v360
        %v441 = vmul.f32 %v321, %v361
        %v442 = vmul.f32 %v322, %v362
        %v443 = vmul.f32 %v323, %v363
        %v444 = vmul.f32 %v324, %v364
        %v445 = vmul.f32 %v325, %v365
        %v446 = vmul.f32 %v366, %v366
        %v447 = vmul.f32 %v367, %v367
        %v448 = vmul.f32 %v368, %v368
        %v449 = vmul.f32 %v369, %v369
        %v450 = vmul.f32 %v370, %v370
        %v451 = vmul.f32 %v371, %v371
        %v452 = vmul.f32 %v372, %v372
        %v453 = vmul.f32 %v373, %v373
        %v454 = vmul.f32 %v374, %v374
        %v455 = vmul.f32 %v375, %v375
        %v456 = vmul.f32 %v376, %v376
        %v457 = vmul.f32 %v377, %v377
        %v458 = vmul.f32 %v378, %v378
        %v459 = vmul.f32 %v379, %v379
        %v460 = vmul.f32 %v380, %v380
        %v461 = vmul.f32 %v381, %v381
        %v462 = vmul.f32 %v382, %v382
        %v463 = vmul.f32 %v383, %v383
        %v464 = vmul.f32 %v384, %v384
        %v465 = vmul.f32 %v385, %v385
        %v466 = vmul.f32 %v386, %v386
        %v467 = vmul.f32 %v387, %v387
        %v468 = vmul.f32 %v388, %v388
        %v469 = vmul.f32 %v389, %v389
        %v470 = vmul.f32 %v390, %v390
        %v471 = vmul.f32 %v391, %v391
        %v472 = vmul.f32 %v392, %v392
        %v473 = vmul.f32 %v393, %v393
        %v474 = vmul.f32 %v394, %v394
        %v475 = vmul.f32 %v395, %v395
        %v476 = vmul.f32 %v396, %v396
        %v477 = vmul.f32 %v397, %v397
        %v478 = vmul.f32 %v398, %v398
        %v479 = vmul.f32 %v399, %v399
        %v480 = vmul.f32 %v400, %v400
        %v481 = vmul.f32 %v401, %v401
        %v482 = vmul.f32 %v402, %v402
        %v483 = vmul.f32 %v403, %v403
        %v484 = vmul.f32 %v404, %v404
        %v485 = vmul.f32 %v405, %v405
        %487 = vset.pattern.permute.xlu0 0
        %488 = vperm.xlu0 %487, %v286
        %v489 = vpop.permute.xlu0 %488
        %492 = vset.pattern.permute.xlu0 0
        %493 = vperm.xlu0 %492, %v287
        %v494 = vpop.permute.xlu0 %493
        %497 = vset.pattern.permute.xlu0 0
        %498 = vperm.xlu0 %497, %v288
        %v499 = vpop.permute.xlu0 %498
        %502 = vset.pattern.permute.xlu0 0
        %503 = vperm.xlu0 %502, %v289
        %v504 = vpop.permute.xlu0 %503
        %507 = vset.pattern.permute.xlu0 0
        %508 = vperm.xlu0 %507, %v290
        %v509 = vpop.permute.xlu0 %508
        %512 = vset.pattern.permute.xlu0 0
        %513 = vperm.xlu0 %512, %v291
        %v514 = vpop.permute.xlu0 %513
        %517 = vset.pattern.permute.xlu0 0
        %518 = vperm.xlu0 %517, %v292
        %v519 = vpop.permute.xlu0 %518
        %522 = vset.pattern.permute.xlu0 0
        %523 = vperm.xlu0 %522, %v293
        %v524 = vpop.permute.xlu0 %523
        %527 = vset.pattern.permute.xlu0 0
        %528 = vperm.xlu0 %527, %v294
        %v529 = vpop.permute.xlu0 %528
        %532 = vset.pattern.permute.xlu0 0
        %533 = vperm.xlu0 %532, %v295
        %v534 = vpop.permute.xlu0 %533
        %537 = vset.pattern.permute.xlu0 0
        %538 = vperm.xlu0 %537, %v296
        %v539 = vpop.permute.xlu0 %538
        %542 = vset.pattern.permute.xlu0 0
        %543 = vperm.xlu0 %542, %v297
        %v544 = vpop.permute.xlu0 %543
        %547 = vset.pattern.permute.xlu0 0
        %548 = vperm.xlu0 %547, %v298
        %v549 = vpop.permute.xlu0 %548
        %552 = vset.pattern.permute.xlu0 0
        %553 = vperm.xlu0 %552, %v299
        %v554 = vpop.permute.xlu0 %553
        %557 = vset.pattern.permute.xlu0 0
        %558 = vperm.xlu0 %557, %v300
        %v559 = vpop.permute.xlu0 %558
        %562 = vset.pattern.permute.xlu0 0
        %563 = vperm.xlu0 %562, %v301
        %v564 = vpop.permute.xlu0 %563
        %567 = vset.pattern.permute.xlu0 0
        %568 = vperm.xlu0 %567, %v302
        %v569 = vpop.permute.xlu0 %568
        %572 = vset.pattern.permute.xlu0 0
        %573 = vperm.xlu0 %572, %v303
        %v574 = vpop.permute.xlu0 %573
        %577 = vset.pattern.permute.xlu0 0
        %578 = vperm.xlu0 %577, %v304
        %v579 = vpop.permute.xlu0 %578
        %582 = vset.pattern.permute.xlu0 0
        %583 = vperm.xlu0 %582, %v305
        %v584 = vpop.permute.xlu0 %583
        %587 = vset.pattern.permute.xlu0 0
        %588 = vperm.xlu0 %587, %v306
        %v589 = vpop.permute.xlu0 %588
        %592 = vset.pattern.permute.xlu0 0
        %593 = vperm.xlu0 %592, %v307
        %v594 = vpop.permute.xlu0 %593
        %597 = vset.pattern.permute.xlu0 0
        %598 = vperm.xlu0 %597, %v308
        %v599 = vpop.permute.xlu0 %598
        %602 = vset.pattern.permute.xlu0 0
        %603 = vperm.xlu0 %602, %v309
        %v604 = vpop.permute.xlu0 %603
        %607 = vset.pattern.permute.xlu0 0
        %608 = vperm.xlu0 %607, %v310
        %v609 = vpop.permute.xlu0 %608
        %612 = vset.pattern.permute.xlu0 0
        %613 = vperm.xlu0 %612, %v311
        %v614 = vpop.permute.xlu0 %613
        %617 = vset.pattern.permute.xlu0 0
        %618 = vperm.xlu0 %617, %v312
        %v619 = vpop.permute.xlu0 %618
        %622 = vset.pattern.permute.xlu0 0
        %623 = vperm.xlu0 %622, %v313
        %v624 = vpop.permute.xlu0 %623
        %627 = vset.pattern.permute.xlu0 0
        %628 = vperm.xlu0 %627, %v314
        %v629 = vpop.permute.xlu0 %628
        %632 = vset.pattern.permute.xlu0 0
        %633 = vperm.xlu0 %632, %v315
        %v634 = vpop.permute.xlu0 %633
        %637 = vset.pattern.permute.xlu0 0
        %638 = vperm.xlu0 %637, %v316
        %v639 = vpop.permute.xlu0 %638
        %642 = vset.pattern.permute.xlu0 0
        %643 = vperm.xlu0 %642, %v317
        %v644 = vpop.permute.xlu0 %643
        %647 = vset.pattern.permute.xlu0 0
        %648 = vperm.xlu0 %647, %v318
        %v649 = vpop.permute.xlu0 %648
        %652 = vset.pattern.permute.xlu0 0
        %653 = vperm.xlu0 %652, %v319
        %v654 = vpop.permute.xlu0 %653
        %657 = vset.pattern.permute.xlu0 0
        %658 = vperm.xlu0 %657, %v320
        %v659 = vpop.permute.xlu0 %658
        %662 = vset.pattern.permute.xlu0 0
        %663 = vperm.xlu0 %662, %v321
        %v664 = vpop.permute.xlu0 %663
        %667 = vset.pattern.permute.xlu0 0
        %668 = vperm.xlu0 %667, %v322
        %v669 = vpop.permute.xlu0 %668
        %672 = vset.pattern.permute.xlu0 0
        %673 = vperm.xlu0 %672, %v323
        %v674 = vpop.permute.xlu0 %673
        %677 = vset.pattern.permute.xlu0 0
        %678 = vperm.xlu0 %677, %v324
        %v679 = vpop.permute.xlu0 %678
        %682 = vset.pattern.permute.xlu0 0
        %683 = vperm.xlu0 %682, %v325
        %v684 = vpop.permute.xlu0 %683
        %v686 = vmul.f32 %v489, %v270
        %v687 = vmul.f32 %v494, %v271
        %v688 = vmul.f32 %v499, %v272
        %v689 = vmul.f32 %v504, %v273
        %v690 = vmul.f32 %v509, %v270
        %v691 = vmul.f32 %v514, %v271
        %v692 = vmul.f32 %v519, %v272
        %v693 = vmul.f32 %v524, %v273
        %v694 = vmul.f32 %v529, %v270
        %v695 = vmul.f32 %v534, %v271
        %v696 = vmul.f32 %v539, %v272
        %v697 = vmul.f32 %v544, %v273
        %v698 = vmul.f32 %v549, %v270
        %v699 = vmul.f32 %v554, %v271
        %v700 = vmul.f32 %v559, %v272
        %v701 = vmul.f32 %v564, %v273
        %v702 = vmul.f32 %v569, %v270
        %v703 = vmul.f32 %v574, %v271
        %v704 = vmul.f32 %v579, %v272
        %v705 = vmul.f32 %v584, %v273
        %v706 = vmul.f32 %v589, %v270
        %v707 = vmul.f32 %v594, %v271
        %v708 = vmul.f32 %v599, %v272
        %v709 = vmul.f32 %v604, %v273
        %v710 = vmul.f32 %v609, %v270
        %v711 = vmul.f32 %v614, %v271
        %v712 = vmul.f32 %v619, %v272
        %v713 = vmul.f32 %v624, %v273
        %v714 = vmul.f32 %v629, %v270
        %v715 = vmul.f32 %v634, %v271
        %v716 = vmul.f32 %v639, %v272
        %v717 = vmul.f32 %v644, %v273
        %v718 = vmul.f32 %v649, %v270
        %v719 = vmul.f32 %v654, %v271
        %v720 = vmul.f32 %v659, %v272
        %v721 = vmul.f32 %v664, %v273
        %v722 = vmul.f32 %v669, %v270
        %v723 = vmul.f32 %v674, %v271
        %v724 = vmul.f32 %v679, %v272
        %v725 = vmul.f32 %v684, %v273
        %727 = vset.pattern.permute.xlu0 0
        %728 = vperm.xlu0 %727, %v406
        %v729 = vpop.permute.xlu0 %728
        %732 = vset.pattern.permute.xlu0 0
        %733 = vperm.xlu0 %732, %v407
        %v734 = vpop.permute.xlu0 %733
        %737 = vset.pattern.permute.xlu0 0
        %738 = vperm.xlu0 %737, %v408
        %v739 = vpop.permute.xlu0 %738
        %742 = vset.pattern.permute.xlu0 0
        %743 = vperm.xlu0 %742, %v409
        %v744 = vpop.permute.xlu0 %743
        %747 = vset.pattern.permute.xlu0 0
        %748 = vperm.xlu0 %747, %v410
        %v749 = vpop.permute.xlu0 %748
        %752 = vset.pattern.permute.xlu0 0
        %753 = vperm.xlu0 %752, %v411
        %v754 = vpop.permute.xlu0 %753
        %757 = vset.pattern.permute.xlu0 0
        %758 = vperm.xlu0 %757, %v412
        %v759 = vpop.permute.xlu0 %758
        %762 = vset.pattern.permute.xlu0 0
        %763 = vperm.xlu0 %762, %v413
        %v764 = vpop.permute.xlu0 %763
        %767 = vset.pattern.permute.xlu0 0
        %768 = vperm.xlu0 %767, %v414
        %v769 = vpop.permute.xlu0 %768
        %772 = vset.pattern.permute.xlu0 0
        %773 = vperm.xlu0 %772, %v415
        %v774 = vpop.permute.xlu0 %773
        %777 = vset.pattern.permute.xlu0 0
        %778 = vperm.xlu0 %777, %v416
        %v779 = vpop.permute.xlu0 %778
        %782 = vset.pattern.permute.xlu0 0
        %783 = vperm.xlu0 %782, %v417
        %v784 = vpop.permute.xlu0 %783
        %787 = vset.pattern.permute.xlu0 0
        %788 = vperm.xlu0 %787, %v418
        %v789 = vpop.permute.xlu0 %788
        %792 = vset.pattern.permute.xlu0 0
        %793 = vperm.xlu0 %792, %v419
        %v794 = vpop.permute.xlu0 %793
        %797 = vset.pattern.permute.xlu0 0
        %798 = vperm.xlu0 %797, %v420
        %v799 = vpop.permute.xlu0 %798
        %802 = vset.pattern.permute.xlu0 0
        %803 = vperm.xlu0 %802, %v421
        %v804 = vpop.permute.xlu0 %803
        %807 = vset.pattern.permute.xlu0 0
        %808 = vperm.xlu0 %807, %v422
        %v809 = vpop.permute.xlu0 %808
        %812 = vset.pattern.permute.xlu0 0
        %813 = vperm.xlu0 %812, %v423
        %v814 = vpop.permute.xlu0 %813
        %817 = vset.pattern.permute.xlu0 0
        %818 = vperm.xlu0 %817, %v424
        %v819 = vpop.permute.xlu0 %818
        %822 = vset.pattern.permute.xlu0 0
        %823 = vperm.xlu0 %822, %v425
        %v824 = vpop.permute.xlu0 %823
        %827 = vset.pattern.permute.xlu0 0
        %828 = vperm.xlu0 %827, %v426
        %v829 = vpop.permute.xlu0 %828
        %832 = vset.pattern.permute.xlu0 0
        %833 = vperm.xlu0 %832, %v427
        %v834 = vpop.permute.xlu0 %833
        %837 = vset.pattern.permute.xlu0 0
        %838 = vperm.xlu0 %837, %v428
        %v839 = vpop.permute.xlu0 %838
        %842 = vset.pattern.permute.xlu0 0
        %843 = vperm.xlu0 %842, %v429
        %v844 = vpop.permute.xlu0 %843
        %847 = vset.pattern.permute.xlu0 0
        %848 = vperm.xlu0 %847, %v430
        %v849 = vpop.permute.xlu0 %848
        %852 = vset.pattern.permute.xlu0 0
        %853 = vperm.xlu0 %852, %v431
        %v854 = vpop.permute.xlu0 %853
        %857 = vset.pattern.permute.xlu0 0
        %858 = vperm.xlu0 %857, %v432
        %v859 = vpop.permute.xlu0 %858
        %862 = vset.pattern.permute.xlu0 0
        %863 = vperm.xlu0 %862, %v433
        %v864 = vpop.permute.xlu0 %863
        %867 = vset.pattern.permute.xlu0 0
        %868 = vperm.xlu0 %867, %v434
        %v869 = vpop.permute.xlu0 %868
        %872 = vset.pattern.permute.xlu0 0
        %873 = vperm.xlu0 %872, %v435
        %v874 = vpop.permute.xlu0 %873
        %877 = vset.pattern.permute.xlu0 0
        %878 = vperm.xlu0 %877, %v436
        %v879 = vpop.permute.xlu0 %878
        %882 = vset.pattern.permute.xlu0 0
        %883 = vperm.xlu0 %882, %v437
        %v884 = vpop.permute.xlu0 %883
        %887 = vset.pattern.permute.xlu0 0
        %888 = vperm.xlu0 %887, %v438
        %v889 = vpop.permute.xlu0 %888
        %892 = vset.pattern.permute.xlu0 0
        %893 = vperm.xlu0 %892, %v439
        %v894 = vpop.permute.xlu0 %893
        %897 = vset.pattern.permute.xlu0 0
        %898 = vperm.xlu0 %897, %v440
        %v899 = vpop.permute.xlu0 %898
        %902 = vset.pattern.permute.xlu0 0
        %903 = vperm.xlu0 %902, %v441
        %v904 = vpop.permute.xlu0 %903
        %907 = vset.pattern.permute.xlu0 0
        %908 = vperm.xlu0 %907, %v442
        %v909 = vpop.permute.xlu0 %908
        %912 = vset.pattern.permute.xlu0 0
        %913 = vperm.xlu0 %912, %v443
        %v914 = vpop.permute.xlu0 %913
        %917 = vset.pattern.permute.xlu0 0
        %918 = vperm.xlu0 %917, %v444
        %v919 = vpop.permute.xlu0 %918
        %922 = vset.pattern.permute.xlu0 0
        %923 = vperm.xlu0 %922, %v445
        %v924 = vpop.permute.xlu0 %923
        %v926 = vsub.f32 %v686, %v729
        %v927 = vsub.f32 %v687, %v734
        %v928 = vsub.f32 %v688, %v739
        %v929 = vsub.f32 %v689, %v744
        %v930 = vsub.f32 %v690, %v749
        %v931 = vsub.f32 %v691, %v754
        %v932 = vsub.f32 %v692, %v759
        %v933 = vsub.f32 %v693, %v764
        %v934 = vsub.f32 %v694, %v769
        %v935 = vsub.f32 %v695, %v774
        %v936 = vsub.f32 %v696, %v779
        %v937 = vsub.f32 %v697, %v784
        %v938 = vsub.f32 %v698, %v789
        %v939 = vsub.f32 %v699, %v794
        %v940 = vsub.f32 %v700, %v799
        %v941 = vsub.f32 %v701, %v804
        %v942 = vsub.f32 %v702, %v809
        %v943 = vsub.f32 %v703, %v814
        %v944 = vsub.f32 %v704, %v819
        %v945 = vsub.f32 %v705, %v824
        %v946 = vsub.f32 %v706, %v829
        %v947 = vsub.f32 %v707, %v834
        %v948 = vsub.f32 %v708, %v839
        %v949 = vsub.f32 %v709, %v844
        %v950 = vsub.f32 %v710, %v849
        %v951 = vsub.f32 %v711, %v854
        %v952 = vsub.f32 %v712, %v859
        %v953 = vsub.f32 %v713, %v864
        %v954 = vsub.f32 %v714, %v869
        %v955 = vsub.f32 %v715, %v874
        %v956 = vsub.f32 %v716, %v879
        %v957 = vsub.f32 %v717, %v884
        %v958 = vsub.f32 %v718, %v889
        %v959 = vsub.f32 %v719, %v894
        %v960 = vsub.f32 %v720, %v899
        %v961 = vsub.f32 %v721, %v904
        %v962 = vsub.f32 %v722, %v909
        %v963 = vsub.f32 %v723, %v914
        %v964 = vsub.f32 %v724, %v919
        %v965 = vsub.f32 %v725, %v924
        %v966 = vtanh.pop %v926
        %v967 = vtanh.pop %v927
        %v968 = vtanh.pop %v928
        %v969 = vtanh.pop %v929
        %v970 = vtanh.pop %v930
        %v971 = vtanh.pop %v931
        %v972 = vtanh.pop %v932
        %v973 = vtanh.pop %v933
        %v974 = vtanh.pop %v934
        %v975 = vtanh.pop %v935
        %v976 = vtanh.pop %v936
        %v977 = vtanh.pop %v937
        %v978 = vtanh.pop %v938
        %v979 = vtanh.pop %v939
        %v980 = vtanh.pop %v940
        %v981 = vtanh.pop %v941
        %v982 = vtanh.pop %v942
        %v983 = vtanh.pop %v943
        %v984 = vtanh.pop %v944
        %v985 = vtanh.pop %v945
        %v986 = vtanh.pop %v946
        %v987 = vtanh.pop %v947
        %v988 = vtanh.pop %v948
        %v989 = vtanh.pop %v949
        %v990 = vtanh.pop %v950
        %v991 = vtanh.pop %v951
        %v992 = vtanh.pop %v952
        %v993 = vtanh.pop %v953
        %v994 = vtanh.pop %v954
        %v995 = vtanh.pop %v955
        %v996 = vtanh.pop %v956
        %v997 = vtanh.pop %v957
        %v998 = vtanh.pop %v958
        %v999 = vtanh.pop %v959
        %v1000 = vtanh.pop %v960
        %v1001 = vtanh.pop %v961
        %v1002 = vtanh.pop %v962
        %v1003 = vtanh.pop %v963
        %v1004 = vtanh.pop %v964
        %v1005 = vtanh.pop %v965
        %1007 = vset.pattern.permute.xlu0 0
        %1008 = vperm.xlu0 %1007, %v446
        %v1009 = vpop.permute.xlu0 %1008
        %1012 = vset.pattern.permute.xlu0 0
        %1013 = vperm.xlu0 %1012, %v447
        %v1014 = vpop.permute.xlu0 %1013
        %1017 = vset.pattern.permute.xlu0 0
        %1018 = vperm.xlu0 %1017, %v448
        %v1019 = vpop.permute.xlu0 %1018
        %1022 = vset.pattern.permute.xlu0 0
        %1023 = vperm.xlu0 %1022, %v449
        %v1024 = vpop.permute.xlu0 %1023
        %1027 = vset.pattern.permute.xlu0 0
        %1028 = vperm.xlu0 %1027, %v450
        %v1029 = vpop.permute.xlu0 %1028
        %1032 = vset.pattern.permute.xlu0 0
        %1033 = vperm.xlu0 %1032, %v451
        %v1034 = vpop.permute.xlu0 %1033
        %1037 = vset.pattern.permute.xlu0 0
        %1038 = vperm.xlu0 %1037, %v452
        %v1039 = vpop.permute.xlu0 %1038
        %1042 = vset.pattern.permute.xlu0 0
        %1043 = vperm.xlu0 %1042, %v453
        %v1044 = vpop.permute.xlu0 %1043
        %1047 = vset.pattern.permute.xlu0 0
        %1048 = vperm.xlu0 %1047, %v454
        %v1049 = vpop.permute.xlu0 %1048
        %1052 = vset.pattern.permute.xlu0 0
        %1053 = vperm.xlu0 %1052, %v455
        %v1054 = vpop.permute.xlu0 %1053
        %1057 = vset.pattern.permute.xlu0 0
        %1058 = vperm.xlu0 %1057, %v456
        %v1059 = vpop.permute.xlu0 %1058
        %1062 = vset.pattern.permute.xlu0 0
        %1063 = vperm.xlu0 %1062, %v457
        %v1064 = vpop.permute.xlu0 %1063
        %1067 = vset.pattern.permute.xlu0 0
        %1068 = vperm.xlu0 %1067, %v458
        %v1069 = vpop.permute.xlu0 %1068
        %1072 = vset.pattern.permute.xlu0 0
        %1073 = vperm.xlu0 %1072, %v459
        %v1074 = vpop.permute.xlu0 %1073
        %1077 = vset.pattern.permute.xlu0 0
        %1078 = vperm.xlu0 %1077, %v460
        %v1079 = vpop.permute.xlu0 %1078
        %1082 = vset.pattern.permute.xlu0 0
        %1083 = vperm.xlu0 %1082, %v461
        %v1084 = vpop.permute.xlu0 %1083
        %1087 = vset.pattern.permute.xlu0 0
        %1088 = vperm.xlu0 %1087, %v462
        %v1089 = vpop.permute.xlu0 %1088
        %1092 = vset.pattern.permute.xlu0 0
        %1093 = vperm.xlu0 %1092, %v463
        %v1094 = vpop.permute.xlu0 %1093
        %1097 = vset.pattern.permute.xlu0 0
        %1098 = vperm.xlu0 %1097, %v464
        %v1099 = vpop.permute.xlu0 %1098
        %1102 = vset.pattern.permute.xlu0 0
        %1103 = vperm.xlu0 %1102, %v465
        %v1104 = vpop.permute.xlu0 %1103
        %1107 = vset.pattern.permute.xlu0 0
        %1108 = vperm.xlu0 %1107, %v466
        %v1109 = vpop.permute.xlu0 %1108
        %1112 = vset.pattern.permute.xlu0 0
        %1113 = vperm.xlu0 %1112, %v467
        %v1114 = vpop.permute.xlu0 %1113
        %1117 = vset.pattern.permute.xlu0 0
        %1118 = vperm.xlu0 %1117, %v468
        %v1119 = vpop.permute.xlu0 %1118
        %1122 = vset.pattern.permute.xlu0 0
        %1123 = vperm.xlu0 %1122, %v469
        %v1124 = vpop.permute.xlu0 %1123
        %1127 = vset.pattern.permute.xlu0 0
        %1128 = vperm.xlu0 %1127, %v470
        %v1129 = vpop.permute.xlu0 %1128
        %1132 = vset.pattern.permute.xlu0 0
        %1133 = vperm.xlu0 %1132, %v471
        %v1134 = vpop.permute.xlu0 %1133
        %1137 = vset.pattern.permute.xlu0 0
        %1138 = vperm.xlu0 %1137, %v472
        %v1139 = vpop.permute.xlu0 %1138
        %1142 = vset.pattern.permute.xlu0 0
        %1143 = vperm.xlu0 %1142, %v473
        %v1144 = vpop.permute.xlu0 %1143
        %1147 = vset.pattern.permute.xlu0 0
        %1148 = vperm.xlu0 %1147, %v474
        %v1149 = vpop.permute.xlu0 %1148
        %1152 = vset.pattern.permute.xlu0 0
        %1153 = vperm.xlu0 %1152, %v475
        %v1154 = vpop.permute.xlu0 %1153
        %1157 = vset.pattern.permute.xlu0 0
        %1158 = vperm.xlu0 %1157, %v476
        %v1159 = vpop.permute.xlu0 %1158
        %1162 = vset.pattern.permute.xlu0 0
        %1163 = vperm.xlu0 %1162, %v477
        %v1164 = vpop.permute.xlu0 %1163
        %1167 = vset.pattern.permute.xlu0 0
        %1168 = vperm.xlu0 %1167, %v478
        %v1169 = vpop.permute.xlu0 %1168
        %1172 = vset.pattern.permute.xlu0 0
        %1173 = vperm.xlu0 %1172, %v479
        %v1174 = vpop.permute.xlu0 %1173
        %1177 = vset.pattern.permute.xlu0 0
        %1178 = vperm.xlu0 %1177, %v480
        %v1179 = vpop.permute.xlu0 %1178
        %1182 = vset.pattern.permute.xlu0 0
        %1183 = vperm.xlu0 %1182, %v481
        %v1184 = vpop.permute.xlu0 %1183
        %1187 = vset.pattern.permute.xlu0 0
        %1188 = vperm.xlu0 %1187, %v482
        %v1189 = vpop.permute.xlu0 %1188
        %1192 = vset.pattern.permute.xlu0 0
        %1193 = vperm.xlu0 %1192, %v483
        %v1194 = vpop.permute.xlu0 %1193
        %1197 = vset.pattern.permute.xlu0 0
        %1198 = vperm.xlu0 %1197, %v484
        %v1199 = vpop.permute.xlu0 %1198
        %1202 = vset.pattern.permute.xlu0 0
        %1203 = vperm.xlu0 %1202, %v485
        %v1204 = vpop.permute.xlu0 %1203
        %v1206 = vmul.f32 %v1009, %v966
        %v1207 = vmul.f32 %v1014, %v967
        %v1208 = vmul.f32 %v1019, %v968
        %v1209 = vmul.f32 %v1024, %v969
        %v1210 = vmul.f32 %v1029, %v970
        %v1211 = vmul.f32 %v1034, %v971
        %v1212 = vmul.f32 %v1039, %v972
        %v1213 = vmul.f32 %v1044, %v973
        %v1214 = vmul.f32 %v1049, %v974
        %v1215 = vmul.f32 %v1054, %v975
        %v1216 = vmul.f32 %v1059, %v976
        %v1217 = vmul.f32 %v1064, %v977
        %v1218 = vmul.f32 %v1069, %v978
        %v1219 = vmul.f32 %v1074, %v979
        %v1220 = vmul.f32 %v1079, %v980
        %v1221 = vmul.f32 %v1084, %v981
        %v1222 = vmul.f32 %v1089, %v982
        %v1223 = vmul.f32 %v1094, %v983
        %v1224 = vmul.f32 %v1099, %v984
        %v1225 = vmul.f32 %v1104, %v985
        %v1226 = vmul.f32 %v1109, %v986
        %v1227 = vmul.f32 %v1114, %v987
        %v1228 = vmul.f32 %v1119, %v988
        %v1229 = vmul.f32 %v1124, %v989
        %v1230 = vmul.f32 %v1129, %v990
        %v1231 = vmul.f32 %v1134, %v991
        %v1232 = vmul.f32 %v1139, %v992
        %v1233 = vmul.f32 %v1144, %v993
        %v1234 = vmul.f32 %v1149, %v994
        %v1235 = vmul.f32 %v1154, %v995
        %v1236 = vmul.f32 %v1159, %v996
        %v1237 = vmul.f32 %v1164, %v997
        %v1238 = vmul.f32 %v1169, %v998
        %v1239 = vmul.f32 %v1174, %v999
        %v1240 = vmul.f32 %v1179, %v1000
        %v1241 = vmul.f32 %v1184, %v1001
        %v1242 = vmul.f32 %v1189, %v1002
        %v1243 = vmul.f32 %v1194, %v1003
        %v1244 = vmul.f32 %v1199, %v1004
        %v1245 = vmul.f32 %v1204, %v1005
        %v1246 = vadd.f32 %v1206, %v1207
        %v1247 = vadd.f32 %v1246, %v1208
        %v1248 = vadd.f32 %v1247, %v1209
        %v1249 = vrot.slane %v1248, 4
        %v1250 = vadd.f32 %v1248, %v1249
        %v1251 = vrot.slane %v1250, 2
        %v1252 = vadd.f32 %v1250, %v1251
        %v1253 = vrot.slane %v1252, 1
        %v1254 = vadd.f32 %v1252, %v1253
        %v1255 = vadd.f32 %v1210, %v1211
        %v1256 = vadd.f32 %v1255, %v1212
        %v1257 = vadd.f32 %v1256, %v1213
        %v1258 = vrot.slane %v1257, 4
        %v1259 = vadd.f32 %v1257, %v1258
        %v1260 = vrot.slane %v1259, 2
        %v1261 = vadd.f32 %v1259, %v1260
        %v1262 = vrot.slane %v1261, 1
        %v1263 = vadd.f32 %v1261, %v1262
        %v1264 = vadd.f32 %v1214, %v1215
        %v1265 = vadd.f32 %v1264, %v1216
        %v1266 = vadd.f32 %v1265, %v1217
        %v1267 = vrot.slane %v1266, 4
        %v1268 = vadd.f32 %v1266, %v1267
        %v1269 = vrot.slane %v1268, 2
        %v1270 = vadd.f32 %v1268, %v1269
        %v1271 = vrot.slane %v1270, 1
        %v1272 = vadd.f32 %v1270, %v1271
        %v1273 = vadd.f32 %v1218, %v1219
        %v1274 = vadd.f32 %v1273, %v1220
        %v1275 = vadd.f32 %v1274, %v1221
        %v1276 = vrot.slane %v1275, 4
        %v1277 = vadd.f32 %v1275, %v1276
        %v1278 = vrot.slane %v1277, 2
        %v1279 = vadd.f32 %v1277, %v1278
        %v1280 = vrot.slane %v1279, 1
        %v1281 = vadd.f32 %v1279, %v1280
        %v1282 = vadd.f32 %v1222, %v1223
        %v1283 = vadd.f32 %v1282, %v1224
        %v1284 = vadd.f32 %v1283, %v1225
        %v1285 = vrot.slane %v1284, 4
        %v1286 = vadd.f32 %v1284, %v1285
        %v1287 = vrot.slane %v1286, 2
        %v1288 = vadd.f32 %v1286, %v1287
        %v1289 = vrot.slane %v1288, 1
        %v1290 = vadd.f32 %v1288, %v1289
        %v1291 = vadd.f32 %v1226, %v1227
        %v1292 = vadd.f32 %v1291, %v1228
        %v1293 = vadd.f32 %v1292, %v1229
        %v1294 = vrot.slane %v1293, 4
        %v1295 = vadd.f32 %v1293, %v1294
        %v1296 = vrot.slane %v1295, 2
        %v1297 = vadd.f32 %v1295, %v1296
        %v1298 = vrot.slane %v1297, 1
        %v1299 = vadd.f32 %v1297, %v1298
        %v1300 = vadd.f32 %v1230, %v1231
        %v1301 = vadd.f32 %v1300, %v1232
        %v1302 = vadd.f32 %v1301, %v1233
        %v1303 = vrot.slane %v1302, 4
        %v1304 = vadd.f32 %v1302, %v1303
        %v1305 = vrot.slane %v1304, 2
        %v1306 = vadd.f32 %v1304, %v1305
        %v1307 = vrot.slane %v1306, 1
        %v1308 = vadd.f32 %v1306, %v1307
        %v1309 = vadd.f32 %v1234, %v1235
        %v1310 = vadd.f32 %v1309, %v1236
        %v1311 = vadd.f32 %v1310, %v1237
        %v1312 = vrot.slane %v1311, 4
        %v1313 = vadd.f32 %v1311, %v1312
        %v1314 = vrot.slane %v1313, 2
        %v1315 = vadd.f32 %v1313, %v1314
        %v1316 = vrot.slane %v1315, 1
        %v1317 = vadd.f32 %v1315, %v1316
        %v1318 = vadd.f32 %v1238, %v1239
        %v1319 = vadd.f32 %v1318, %v1240
        %v1320 = vadd.f32 %v1319, %v1241
        %v1321 = vrot.slane %v1320, 4
        %v1322 = vadd.f32 %v1320, %v1321
        %v1323 = vrot.slane %v1322, 2
        %v1324 = vadd.f32 %v1322, %v1323
        %v1325 = vrot.slane %v1324, 1
        %v1326 = vadd.f32 %v1324, %v1325
        %v1327 = vadd.f32 %v1242, %v1243
        %v1328 = vadd.f32 %v1327, %v1244
        %v1329 = vadd.f32 %v1328, %v1245
        %v1330 = vrot.slane %v1329, 4
        %v1331 = vadd.f32 %v1329, %v1330
        %v1332 = vrot.slane %v1331, 2
        %v1333 = vadd.f32 %v1331, %v1332
        %v1334 = vrot.slane %v1333, 1
        %v1335 = vadd.f32 %v1333, %v1334
        %vm1346 = vcmask 1041409
        %v1347 = vsel %vm1346, %v1263, %v1254
        %vm1348 = vcmask 1042434
        %v1349 = vsel %vm1348, %v1272, %v1347
        %vm1350 = vcmask 1043459
        %v1351 = vsel %vm1350, %v1281, %v1349
        %vm1352 = vcmask 1044484
        %v1353 = vsel %vm1352, %v1290, %v1351
        %vm1354 = vcmask 1045509
        %v1355 = vsel %vm1354, %v1299, %v1353
        %vm1356 = vcmask 1046534
        %v1357 = vsel %vm1356, %v1308, %v1355
        %vm1358 = vcmask 1047559
        %v1359 = vsel %vm1358, %v1317, %v1357
        %v1360 = vsel %vm1346, %v1335, %v1326
        %v1363 = vadd.f32 %v279, %v1359
        %v1364 = vadd.f32 %v284, %v1360
        %s1365 = scalar_lea.vmem %s1, 320
        %v1366 = vld [vmem:[%s1365] sm:$0xff]
        %v1367 = vld [vmem:[%s1365 + $0x8] sm:$0xff]
        %v1368 = vld [vmem:[%s1365 + $0x10] sm:$0xff]
        %v1369 = vld [vmem:[%s1365 + $0x18] sm:$0xff]
        %v1370 = vld [vmem:[%s1365 + $0x20] sm:$0xff]
        %v1371 = vld [vmem:[%s1365 + $0x28] sm:$0xff]
        %v1372 = vld [vmem:[%s1365 + $0x30] sm:$0xff]
        %v1373 = vld [vmem:[%s1365 + $0x38] sm:$0xff]
        %v1374 = vld [vmem:[%s1365 + $0x40] sm:$0xff]
        %v1375 = vld [vmem:[%s1365 + $0x48] sm:$0xff]
        %v1376 = vld [vmem:[%s1365 + $0x50] sm:$0xff]
        %v1377 = vld [vmem:[%s1365 + $0x58] sm:$0xff]
        %v1378 = vld [vmem:[%s1365 + $0x60] sm:$0xff]
        %v1379 = vld [vmem:[%s1365 + $0x68] sm:$0xff]
        %v1380 = vld [vmem:[%s1365 + $0x70] sm:$0xff]
        %v1381 = vld [vmem:[%s1365 + $0x78] sm:$0xff]
        %v1382 = vld [vmem:[%s1365 + $0x80] sm:$0xff]
        %v1383 = vld [vmem:[%s1365 + $0x88] sm:$0xff]
        %v1384 = vld [vmem:[%s1365 + $0x90] sm:$0xff]
        %v1385 = vld [vmem:[%s1365 + $0x98] sm:$0xff]
        %v1386 = vld [vmem:[%s1365 + $0xa0] sm:$0xff]
        %v1387 = vld [vmem:[%s1365 + $0xa8] sm:$0xff]
        %v1388 = vld [vmem:[%s1365 + $0xb0] sm:$0xff]
        %v1389 = vld [vmem:[%s1365 + $0xb8] sm:$0xff]
        %v1390 = vld [vmem:[%s1365 + $0xc0] sm:$0xff]
        %v1391 = vld [vmem:[%s1365 + $0xc8] sm:$0xff]
        %v1392 = vld [vmem:[%s1365 + $0xd0] sm:$0xff]
        %v1393 = vld [vmem:[%s1365 + $0xd8] sm:$0xff]
        %v1394 = vld [vmem:[%s1365 + $0xe0] sm:$0xff]
        %v1395 = vld [vmem:[%s1365 + $0xe8] sm:$0xff]
        %v1396 = vld [vmem:[%s1365 + $0xf0] sm:$0xff]
        %v1397 = vld [vmem:[%s1365 + $0xf8] sm:$0xff]
        %v1398 = vld [vmem:[%s1365 + $0x100] sm:$0xff]
        %v1399 = vld [vmem:[%s1365 + $0x108] sm:$0xff]
        %v1400 = vld [vmem:[%s1365 + $0x110] sm:$0xff]
        %v1401 = vld [vmem:[%s1365 + $0x118] sm:$0xff]
        %v1402 = vld [vmem:[%s1365 + $0x120] sm:$0xff]
        %v1403 = vld [vmem:[%s1365 + $0x128] sm:$0xff]
        %v1404 = vld [vmem:[%s1365 + $0x130] sm:$0xff]
        %v1405 = vld [vmem:[%s1365 + $0x138] sm:$0xff]
        %s1406 = scalar_lea.vmem %s2, 320
        %v1407 = vld [vmem:[%s1406] sm:$0xff]
        %v1408 = vld [vmem:[%s1406 + $0x8] sm:$0xff]
        %v1409 = vld [vmem:[%s1406 + $0x10] sm:$0xff]
        %v1410 = vld [vmem:[%s1406 + $0x18] sm:$0xff]
        %v1411 = vld [vmem:[%s1406 + $0x20] sm:$0xff]
        %v1412 = vld [vmem:[%s1406 + $0x28] sm:$0xff]
        %v1413 = vld [vmem:[%s1406 + $0x30] sm:$0xff]
        %v1414 = vld [vmem:[%s1406 + $0x38] sm:$0xff]
        %v1415 = vld [vmem:[%s1406 + $0x40] sm:$0xff]
        %v1416 = vld [vmem:[%s1406 + $0x48] sm:$0xff]
        %v1417 = vld [vmem:[%s1406 + $0x50] sm:$0xff]
        %v1418 = vld [vmem:[%s1406 + $0x58] sm:$0xff]
        %v1419 = vld [vmem:[%s1406 + $0x60] sm:$0xff]
        %v1420 = vld [vmem:[%s1406 + $0x68] sm:$0xff]
        %v1421 = vld [vmem:[%s1406 + $0x70] sm:$0xff]
        %v1422 = vld [vmem:[%s1406 + $0x78] sm:$0xff]
        %v1423 = vld [vmem:[%s1406 + $0x80] sm:$0xff]
        %v1424 = vld [vmem:[%s1406 + $0x88] sm:$0xff]
        %v1425 = vld [vmem:[%s1406 + $0x90] sm:$0xff]
        %v1426 = vld [vmem:[%s1406 + $0x98] sm:$0xff]
        %v1427 = vld [vmem:[%s1406 + $0xa0] sm:$0xff]
        %v1428 = vld [vmem:[%s1406 + $0xa8] sm:$0xff]
        %v1429 = vld [vmem:[%s1406 + $0xb0] sm:$0xff]
        %v1430 = vld [vmem:[%s1406 + $0xb8] sm:$0xff]
        %v1431 = vld [vmem:[%s1406 + $0xc0] sm:$0xff]
        %v1432 = vld [vmem:[%s1406 + $0xc8] sm:$0xff]
        %v1433 = vld [vmem:[%s1406 + $0xd0] sm:$0xff]
        %v1434 = vld [vmem:[%s1406 + $0xd8] sm:$0xff]
        %v1435 = vld [vmem:[%s1406 + $0xe0] sm:$0xff]
        %v1436 = vld [vmem:[%s1406 + $0xe8] sm:$0xff]
        %v1437 = vld [vmem:[%s1406 + $0xf0] sm:$0xff]
        %v1438 = vld [vmem:[%s1406 + $0xf8] sm:$0xff]
        %v1439 = vld [vmem:[%s1406 + $0x100] sm:$0xff]
        %v1440 = vld [vmem:[%s1406 + $0x108] sm:$0xff]
        %v1441 = vld [vmem:[%s1406 + $0x110] sm:$0xff]
        %v1442 = vld [vmem:[%s1406 + $0x118] sm:$0xff]
        %v1443 = vld [vmem:[%s1406 + $0x120] sm:$0xff]
        %v1444 = vld [vmem:[%s1406 + $0x128] sm:$0xff]
        %v1445 = vld [vmem:[%s1406 + $0x130] sm:$0xff]
        %v1446 = vld [vmem:[%s1406 + $0x138] sm:$0xff]
        %s1447 = scalar_lea.vmem %s3, 320
        %v1448 = vld [vmem:[%s1447] sm:$0xff]
        %v1449 = vld [vmem:[%s1447 + $0x8] sm:$0xff]
        %v1450 = vld [vmem:[%s1447 + $0x10] sm:$0xff]
        %v1451 = vld [vmem:[%s1447 + $0x18] sm:$0xff]
        %v1452 = vld [vmem:[%s1447 + $0x20] sm:$0xff]
        %v1453 = vld [vmem:[%s1447 + $0x28] sm:$0xff]
        %v1454 = vld [vmem:[%s1447 + $0x30] sm:$0xff]
        %v1455 = vld [vmem:[%s1447 + $0x38] sm:$0xff]
        %v1456 = vld [vmem:[%s1447 + $0x40] sm:$0xff]
        %v1457 = vld [vmem:[%s1447 + $0x48] sm:$0xff]
        %v1458 = vld [vmem:[%s1447 + $0x50] sm:$0xff]
        %v1459 = vld [vmem:[%s1447 + $0x58] sm:$0xff]
        %v1460 = vld [vmem:[%s1447 + $0x60] sm:$0xff]
        %v1461 = vld [vmem:[%s1447 + $0x68] sm:$0xff]
        %v1462 = vld [vmem:[%s1447 + $0x70] sm:$0xff]
        %v1463 = vld [vmem:[%s1447 + $0x78] sm:$0xff]
        %v1464 = vld [vmem:[%s1447 + $0x80] sm:$0xff]
        %v1465 = vld [vmem:[%s1447 + $0x88] sm:$0xff]
        %v1466 = vld [vmem:[%s1447 + $0x90] sm:$0xff]
        %v1467 = vld [vmem:[%s1447 + $0x98] sm:$0xff]
        %v1468 = vld [vmem:[%s1447 + $0xa0] sm:$0xff]
        %v1469 = vld [vmem:[%s1447 + $0xa8] sm:$0xff]
        %v1470 = vld [vmem:[%s1447 + $0xb0] sm:$0xff]
        %v1471 = vld [vmem:[%s1447 + $0xb8] sm:$0xff]
        %v1472 = vld [vmem:[%s1447 + $0xc0] sm:$0xff]
        %v1473 = vld [vmem:[%s1447 + $0xc8] sm:$0xff]
        %v1474 = vld [vmem:[%s1447 + $0xd0] sm:$0xff]
        %v1475 = vld [vmem:[%s1447 + $0xd8] sm:$0xff]
        %v1476 = vld [vmem:[%s1447 + $0xe0] sm:$0xff]
        %v1477 = vld [vmem:[%s1447 + $0xe8] sm:$0xff]
        %v1478 = vld [vmem:[%s1447 + $0xf0] sm:$0xff]
        %v1479 = vld [vmem:[%s1447 + $0xf8] sm:$0xff]
        %v1480 = vld [vmem:[%s1447 + $0x100] sm:$0xff]
        %v1481 = vld [vmem:[%s1447 + $0x108] sm:$0xff]
        %v1482 = vld [vmem:[%s1447 + $0x110] sm:$0xff]
        %v1483 = vld [vmem:[%s1447 + $0x118] sm:$0xff]
        %v1484 = vld [vmem:[%s1447 + $0x120] sm:$0xff]
        %v1485 = vld [vmem:[%s1447 + $0x128] sm:$0xff]
        %v1486 = vld [vmem:[%s1447 + $0x130] sm:$0xff]
        %v1487 = vld [vmem:[%s1447 + $0x138] sm:$0xff]
        %v1488 = vmul.f32 %v1366, %v1407
        %v1489 = vmul.f32 %v1367, %v1408
        %v1490 = vmul.f32 %v1368, %v1409
        %v1491 = vmul.f32 %v1369, %v1410
        %v1492 = vmul.f32 %v1370, %v1411
        %v1493 = vmul.f32 %v1371, %v1412
        %v1494 = vmul.f32 %v1372, %v1413
        %v1495 = vmul.f32 %v1373, %v1414
        %v1496 = vmul.f32 %v1374, %v1415
        %v1497 = vmul.f32 %v1375, %v1416
        %v1498 = vmul.f32 %v1376, %v1417
        %v1499 = vmul.f32 %v1377, %v1418
        %v1500 = vmul.f32 %v1378, %v1419
        %v1501 = vmul.f32 %v1379, %v1420
        %v1502 = vmul.f32 %v1380, %v1421
        %v1503 = vmul.f32 %v1381, %v1422
        %v1504 = vmul.f32 %v1382, %v1423
        %v1505 = vmul.f32 %v1383, %v1424
        %v1506 = vmul.f32 %v1384, %v1425
        %v1507 = vmul.f32 %v1385, %v1426
        %v1508 = vmul.f32 %v1386, %v1427
        %v1509 = vmul.f32 %v1387, %v1428
        %v1510 = vmul.f32 %v1388, %v1429
        %v1511 = vmul.f32 %v1389, %v1430
        %v1512 = vmul.f32 %v1390, %v1431
        %v1513 = vmul.f32 %v1391, %v1432
        %v1514 = vmul.f32 %v1392, %v1433
        %v1515 = vmul.f32 %v1393, %v1434
        %v1516 = vmul.f32 %v1394, %v1435
        %v1517 = vmul.f32 %v1395, %v1436
        %v1518 = vmul.f32 %v1396, %v1437
        %v1519 = vmul.f32 %v1397, %v1438
        %v1520 = vmul.f32 %v1398, %v1439
        %v1521 = vmul.f32 %v1399, %v1440
        %v1522 = vmul.f32 %v1400, %v1441
        %v1523 = vmul.f32 %v1401, %v1442
        %v1524 = vmul.f32 %v1402, %v1443
        %v1525 = vmul.f32 %v1403, %v1444
        %v1526 = vmul.f32 %v1404, %v1445
        %v1527 = vmul.f32 %v1405, %v1446
        %v1528 = vmul.f32 %v1448, %v1448
        %v1529 = vmul.f32 %v1449, %v1449
        %v1530 = vmul.f32 %v1450, %v1450
        %v1531 = vmul.f32 %v1451, %v1451
        %v1532 = vmul.f32 %v1452, %v1452
        %v1533 = vmul.f32 %v1453, %v1453
        %v1534 = vmul.f32 %v1454, %v1454
        %v1535 = vmul.f32 %v1455, %v1455
        %v1536 = vmul.f32 %v1456, %v1456
        %v1537 = vmul.f32 %v1457, %v1457
        %v1538 = vmul.f32 %v1458, %v1458
        %v1539 = vmul.f32 %v1459, %v1459
        %v1540 = vmul.f32 %v1460, %v1460
        %v1541 = vmul.f32 %v1461, %v1461
        %v1542 = vmul.f32 %v1462, %v1462
        %v1543 = vmul.f32 %v1463, %v1463
        %v1544 = vmul.f32 %v1464, %v1464
        %v1545 = vmul.f32 %v1465, %v1465
        %v1546 = vmul.f32 %v1466, %v1466
        %v1547 = vmul.f32 %v1467, %v1467
        %v1548 = vmul.f32 %v1468, %v1468
        %v1549 = vmul.f32 %v1469, %v1469
        %v1550 = vmul.f32 %v1470, %v1470
        %v1551 = vmul.f32 %v1471, %v1471
        %v1552 = vmul.f32 %v1472, %v1472
        %v1553 = vmul.f32 %v1473, %v1473
        %v1554 = vmul.f32 %v1474, %v1474
        %v1555 = vmul.f32 %v1475, %v1475
        %v1556 = vmul.f32 %v1476, %v1476
        %v1557 = vmul.f32 %v1477, %v1477
        %v1558 = vmul.f32 %v1478, %v1478
        %v1559 = vmul.f32 %v1479, %v1479
        %v1560 = vmul.f32 %v1480, %v1480
        %v1561 = vmul.f32 %v1481, %v1481
        %v1562 = vmul.f32 %v1482, %v1482
        %v1563 = vmul.f32 %v1483, %v1483
        %v1564 = vmul.f32 %v1484, %v1484
        %v1565 = vmul.f32 %v1485, %v1485
        %v1566 = vmul.f32 %v1486, %v1486
        %v1567 = vmul.f32 %v1487, %v1487
        %1569 = vset.pattern.permute.xlu0 0
        %1570 = vperm.xlu0 %1569, %v1366
        %v1571 = vpop.permute.xlu0 %1570
        %1574 = vset.pattern.permute.xlu0 0
        %1575 = vperm.xlu0 %1574, %v1367
        %v1576 = vpop.permute.xlu0 %1575
        %1579 = vset.pattern.permute.xlu0 0
        %1580 = vperm.xlu0 %1579, %v1368
        %v1581 = vpop.permute.xlu0 %1580
        %1584 = vset.pattern.permute.xlu0 0
        %1585 = vperm.xlu0 %1584, %v1369
        %v1586 = vpop.permute.xlu0 %1585
        %1589 = vset.pattern.permute.xlu0 0
        %1590 = vperm.xlu0 %1589, %v1370
        %v1591 = vpop.permute.xlu0 %1590
        %1594 = vset.pattern.permute.xlu0 0
        %1595 = vperm.xlu0 %1594, %v1371
        %v1596 = vpop.permute.xlu0 %1595
        %1599 = vset.pattern.permute.xlu0 0
        %1600 = vperm.xlu0 %1599, %v1372
        %v1601 = vpop.permute.xlu0 %1600
        %1604 = vset.pattern.permute.xlu0 0
        %1605 = vperm.xlu0 %1604, %v1373
        %v1606 = vpop.permute.xlu0 %1605
        %1609 = vset.pattern.permute.xlu0 0
        %1610 = vperm.xlu0 %1609, %v1374
        %v1611 = vpop.permute.xlu0 %1610
        %1614 = vset.pattern.permute.xlu0 0
        %1615 = vperm.xlu0 %1614, %v1375
        %v1616 = vpop.permute.xlu0 %1615
        %1619 = vset.pattern.permute.xlu0 0
        %1620 = vperm.xlu0 %1619, %v1376
        %v1621 = vpop.permute.xlu0 %1620
        %1624 = vset.pattern.permute.xlu0 0
        %1625 = vperm.xlu0 %1624, %v1377
        %v1626 = vpop.permute.xlu0 %1625
        %1629 = vset.pattern.permute.xlu0 0
        %1630 = vperm.xlu0 %1629, %v1378
        %v1631 = vpop.permute.xlu0 %1630
        %1634 = vset.pattern.permute.xlu0 0
        %1635 = vperm.xlu0 %1634, %v1379
        %v1636 = vpop.permute.xlu0 %1635
        %1639 = vset.pattern.permute.xlu0 0
        %1640 = vperm.xlu0 %1639, %v1380
        %v1641 = vpop.permute.xlu0 %1640
        %1644 = vset.pattern.permute.xlu0 0
        %1645 = vperm.xlu0 %1644, %v1381
        %v1646 = vpop.permute.xlu0 %1645
        %1649 = vset.pattern.permute.xlu0 0
        %1650 = vperm.xlu0 %1649, %v1382
        %v1651 = vpop.permute.xlu0 %1650
        %1654 = vset.pattern.permute.xlu0 0
        %1655 = vperm.xlu0 %1654, %v1383
        %v1656 = vpop.permute.xlu0 %1655
        %1659 = vset.pattern.permute.xlu0 0
        %1660 = vperm.xlu0 %1659, %v1384
        %v1661 = vpop.permute.xlu0 %1660
        %1664 = vset.pattern.permute.xlu0 0
        %1665 = vperm.xlu0 %1664, %v1385
        %v1666 = vpop.permute.xlu0 %1665
        %1669 = vset.pattern.permute.xlu0 0
        %1670 = vperm.xlu0 %1669, %v1386
        %v1671 = vpop.permute.xlu0 %1670
        %1674 = vset.pattern.permute.xlu0 0
        %1675 = vperm.xlu0 %1674, %v1387
        %v1676 = vpop.permute.xlu0 %1675
        %1679 = vset.pattern.permute.xlu0 0
        %1680 = vperm.xlu0 %1679, %v1388
        %v1681 = vpop.permute.xlu0 %1680
        %1684 = vset.pattern.permute.xlu0 0
        %1685 = vperm.xlu0 %1684, %v1389
        %v1686 = vpop.permute.xlu0 %1685
        %1689 = vset.pattern.permute.xlu0 0
        %1690 = vperm.xlu0 %1689, %v1390
        %v1691 = vpop.permute.xlu0 %1690
        %1694 = vset.pattern.permute.xlu0 0
        %1695 = vperm.xlu0 %1694, %v1391
        %v1696 = vpop.permute.xlu0 %1695
        %1699 = vset.pattern.permute.xlu0 0
        %1700 = vperm.xlu0 %1699, %v1392
        %v1701 = vpop.permute.xlu0 %1700
        %1704 = vset.pattern.permute.xlu0 0
        %1705 = vperm.xlu0 %1704, %v1393
        %v1706 = vpop.permute.xlu0 %1705
        %1709 = vset.pattern.permute.xlu0 0
        %1710 = vperm.xlu0 %1709, %v1394
        %v1711 = vpop.permute.xlu0 %1710
        %1714 = vset.pattern.permute.xlu0 0
        %1715 = vperm.xlu0 %1714, %v1395
        %v1716 = vpop.permute.xlu0 %1715
        %1719 = vset.pattern.permute.xlu0 0
        %1720 = vperm.xlu0 %1719, %v1396
        %v1721 = vpop.permute.xlu0 %1720
        %1724 = vset.pattern.permute.xlu0 0
        %1725 = vperm.xlu0 %1724, %v1397
        %v1726 = vpop.permute.xlu0 %1725
        %1729 = vset.pattern.permute.xlu0 0
        %1730 = vperm.xlu0 %1729, %v1398
        %v1731 = vpop.permute.xlu0 %1730
        %1734 = vset.pattern.permute.xlu0 0
        %1735 = vperm.xlu0 %1734, %v1399
        %v1736 = vpop.permute.xlu0 %1735
        %1739 = vset.pattern.permute.xlu0 0
        %1740 = vperm.xlu0 %1739, %v1400
        %v1741 = vpop.permute.xlu0 %1740
        %1744 = vset.pattern.permute.xlu0 0
        %1745 = vperm.xlu0 %1744, %v1401
        %v1746 = vpop.permute.xlu0 %1745
        %1749 = vset.pattern.permute.xlu0 0
        %1750 = vperm.xlu0 %1749, %v1402
        %v1751 = vpop.permute.xlu0 %1750
        %1754 = vset.pattern.permute.xlu0 0
        %1755 = vperm.xlu0 %1754, %v1403
        %v1756 = vpop.permute.xlu0 %1755
        %1759 = vset.pattern.permute.xlu0 0
        %1760 = vperm.xlu0 %1759, %v1404
        %v1761 = vpop.permute.xlu0 %1760
        %1764 = vset.pattern.permute.xlu0 0
        %1765 = vperm.xlu0 %1764, %v1405
        %v1766 = vpop.permute.xlu0 %1765
        %v1768 = vmul.f32 %v1571, %v270
        %v1769 = vmul.f32 %v1576, %v271
        %v1770 = vmul.f32 %v1581, %v272
        %v1771 = vmul.f32 %v1586, %v273
        %v1772 = vmul.f32 %v1591, %v270
        %v1773 = vmul.f32 %v1596, %v271
        %v1774 = vmul.f32 %v1601, %v272
        %v1775 = vmul.f32 %v1606, %v273
        %v1776 = vmul.f32 %v1611, %v270
        %v1777 = vmul.f32 %v1616, %v271
        %v1778 = vmul.f32 %v1621, %v272
        %v1779 = vmul.f32 %v1626, %v273
        %v1780 = vmul.f32 %v1631, %v270
        %v1781 = vmul.f32 %v1636, %v271
        %v1782 = vmul.f32 %v1641, %v272
        %v1783 = vmul.f32 %v1646, %v273
        %v1784 = vmul.f32 %v1651, %v270
        %v1785 = vmul.f32 %v1656, %v271
        %v1786 = vmul.f32 %v1661, %v272
        %v1787 = vmul.f32 %v1666, %v273
        %v1788 = vmul.f32 %v1671, %v270
        %v1789 = vmul.f32 %v1676, %v271
        %v1790 = vmul.f32 %v1681, %v272
        %v1791 = vmul.f32 %v1686, %v273
        %v1792 = vmul.f32 %v1691, %v270
        %v1793 = vmul.f32 %v1696, %v271
        %v1794 = vmul.f32 %v1701, %v272
        %v1795 = vmul.f32 %v1706, %v273
        %v1796 = vmul.f32 %v1711, %v270
        %v1797 = vmul.f32 %v1716, %v271
        %v1798 = vmul.f32 %v1721, %v272
        %v1799 = vmul.f32 %v1726, %v273
        %v1800 = vmul.f32 %v1731, %v270
        %v1801 = vmul.f32 %v1736, %v271
        %v1802 = vmul.f32 %v1741, %v272
        %v1803 = vmul.f32 %v1746, %v273
        %v1804 = vmul.f32 %v1751, %v270
        %v1805 = vmul.f32 %v1756, %v271
        %v1806 = vmul.f32 %v1761, %v272
        %v1807 = vmul.f32 %v1766, %v273
        %1809 = vset.pattern.permute.xlu0 0
        %1810 = vperm.xlu0 %1809, %v1488
        %v1811 = vpop.permute.xlu0 %1810
        %1814 = vset.pattern.permute.xlu0 0
        %1815 = vperm.xlu0 %1814, %v1489
        %v1816 = vpop.permute.xlu0 %1815
        %1819 = vset.pattern.permute.xlu0 0
        %1820 = vperm.xlu0 %1819, %v1490
        %v1821 = vpop.permute.xlu0 %1820
        %1824 = vset.pattern.permute.xlu0 0
        %1825 = vperm.xlu0 %1824, %v1491
        %v1826 = vpop.permute.xlu0 %1825
        %1829 = vset.pattern.permute.xlu0 0
        %1830 = vperm.xlu0 %1829, %v1492
        %v1831 = vpop.permute.xlu0 %1830
        %1834 = vset.pattern.permute.xlu0 0
        %1835 = vperm.xlu0 %1834, %v1493
        %v1836 = vpop.permute.xlu0 %1835
        %1839 = vset.pattern.permute.xlu0 0
        %1840 = vperm.xlu0 %1839, %v1494
        %v1841 = vpop.permute.xlu0 %1840
        %1844 = vset.pattern.permute.xlu0 0
        %1845 = vperm.xlu0 %1844, %v1495
        %v1846 = vpop.permute.xlu0 %1845
        %1849 = vset.pattern.permute.xlu0 0
        %1850 = vperm.xlu0 %1849, %v1496
        %v1851 = vpop.permute.xlu0 %1850
        %1854 = vset.pattern.permute.xlu0 0
        %1855 = vperm.xlu0 %1854, %v1497
        %v1856 = vpop.permute.xlu0 %1855
        %1859 = vset.pattern.permute.xlu0 0
        %1860 = vperm.xlu0 %1859, %v1498
        %v1861 = vpop.permute.xlu0 %1860
        %1864 = vset.pattern.permute.xlu0 0
        %1865 = vperm.xlu0 %1864, %v1499
        %v1866 = vpop.permute.xlu0 %1865
        %1869 = vset.pattern.permute.xlu0 0
        %1870 = vperm.xlu0 %1869, %v1500
        %v1871 = vpop.permute.xlu0 %1870
        %1874 = vset.pattern.permute.xlu0 0
        %1875 = vperm.xlu0 %1874, %v1501
        %v1876 = vpop.permute.xlu0 %1875
        %1879 = vset.pattern.permute.xlu0 0
        %1880 = vperm.xlu0 %1879, %v1502
        %v1881 = vpop.permute.xlu0 %1880
        %1884 = vset.pattern.permute.xlu0 0
        %1885 = vperm.xlu0 %1884, %v1503
        %v1886 = vpop.permute.xlu0 %1885
        %1889 = vset.pattern.permute.xlu0 0
        %1890 = vperm.xlu0 %1889, %v1504
        %v1891 = vpop.permute.xlu0 %1890
        %1894 = vset.pattern.permute.xlu0 0
        %1895 = vperm.xlu0 %1894, %v1505
        %v1896 = vpop.permute.xlu0 %1895
        %1899 = vset.pattern.permute.xlu0 0
        %1900 = vperm.xlu0 %1899, %v1506
        %v1901 = vpop.permute.xlu0 %1900
        %1904 = vset.pattern.permute.xlu0 0
        %1905 = vperm.xlu0 %1904, %v1507
        %v1906 = vpop.permute.xlu0 %1905
        %1909 = vset.pattern.permute.xlu0 0
        %1910 = vperm.xlu0 %1909, %v1508
        %v1911 = vpop.permute.xlu0 %1910
        %1914 = vset.pattern.permute.xlu0 0
        %1915 = vperm.xlu0 %1914, %v1509
        %v1916 = vpop.permute.xlu0 %1915
        %1919 = vset.pattern.permute.xlu0 0
        %1920 = vperm.xlu0 %1919, %v1510
        %v1921 = vpop.permute.xlu0 %1920
        %1924 = vset.pattern.permute.xlu0 0
        %1925 = vperm.xlu0 %1924, %v1511
        %v1926 = vpop.permute.xlu0 %1925
        %1929 = vset.pattern.permute.xlu0 0
        %1930 = vperm.xlu0 %1929, %v1512
        %v1931 = vpop.permute.xlu0 %1930
        %1934 = vset.pattern.permute.xlu0 0
        %1935 = vperm.xlu0 %1934, %v1513
        %v1936 = vpop.permute.xlu0 %1935
        %1939 = vset.pattern.permute.xlu0 0
        %1940 = vperm.xlu0 %1939, %v1514
        %v1941 = vpop.permute.xlu0 %1940
        %1944 = vset.pattern.permute.xlu0 0
        %1945 = vperm.xlu0 %1944, %v1515
        %v1946 = vpop.permute.xlu0 %1945
        %1949 = vset.pattern.permute.xlu0 0
        %1950 = vperm.xlu0 %1949, %v1516
        %v1951 = vpop.permute.xlu0 %1950
        %1954 = vset.pattern.permute.xlu0 0
        %1955 = vperm.xlu0 %1954, %v1517
        %v1956 = vpop.permute.xlu0 %1955
        %1959 = vset.pattern.permute.xlu0 0
        %1960 = vperm.xlu0 %1959, %v1518
        %v1961 = vpop.permute.xlu0 %1960
        %1964 = vset.pattern.permute.xlu0 0
        %1965 = vperm.xlu0 %1964, %v1519
        %v1966 = vpop.permute.xlu0 %1965
        %1969 = vset.pattern.permute.xlu0 0
        %1970 = vperm.xlu0 %1969, %v1520
        %v1971 = vpop.permute.xlu0 %1970
        %1974 = vset.pattern.permute.xlu0 0
        %1975 = vperm.xlu0 %1974, %v1521
        %v1976 = vpop.permute.xlu0 %1975
        %1979 = vset.pattern.permute.xlu0 0
        %1980 = vperm.xlu0 %1979, %v1522
        %v1981 = vpop.permute.xlu0 %1980
        %1984 = vset.pattern.permute.xlu0 0
        %1985 = vperm.xlu0 %1984, %v1523
        %v1986 = vpop.permute.xlu0 %1985
        %1989 = vset.pattern.permute.xlu0 0
        %1990 = vperm.xlu0 %1989, %v1524
        %v1991 = vpop.permute.xlu0 %1990
        %1994 = vset.pattern.permute.xlu0 0
        %1995 = vperm.xlu0 %1994, %v1525
        %v1996 = vpop.permute.xlu0 %1995
        %1999 = vset.pattern.permute.xlu0 0
        %2000 = vperm.xlu0 %1999, %v1526
        %v2001 = vpop.permute.xlu0 %2000
        %2004 = vset.pattern.permute.xlu0 0
        %2005 = vperm.xlu0 %2004, %v1527
        %v2006 = vpop.permute.xlu0 %2005
        %v2008 = vsub.f32 %v1768, %v1811
        %v2009 = vsub.f32 %v1769, %v1816
        %v2010 = vsub.f32 %v1770, %v1821
        %v2011 = vsub.f32 %v1771, %v1826
        %v2012 = vsub.f32 %v1772, %v1831
        %v2013 = vsub.f32 %v1773, %v1836
        %v2014 = vsub.f32 %v1774, %v1841
        %v2015 = vsub.f32 %v1775, %v1846
        %v2016 = vsub.f32 %v1776, %v1851
        %v2017 = vsub.f32 %v1777, %v1856
        %v2018 = vsub.f32 %v1778, %v1861
        %v2019 = vsub.f32 %v1779, %v1866
        %v2020 = vsub.f32 %v1780, %v1871
        %v2021 = vsub.f32 %v1781, %v1876
        %v2022 = vsub.f32 %v1782, %v1881
        %v2023 = vsub.f32 %v1783, %v1886
        %v2024 = vsub.f32 %v1784, %v1891
        %v2025 = vsub.f32 %v1785, %v1896
        %v2026 = vsub.f32 %v1786, %v1901
        %v2027 = vsub.f32 %v1787, %v1906
        %v2028 = vsub.f32 %v1788, %v1911
        %v2029 = vsub.f32 %v1789, %v1916
        %v2030 = vsub.f32 %v1790, %v1921
        %v2031 = vsub.f32 %v1791, %v1926
        %v2032 = vsub.f32 %v1792, %v1931
        %v2033 = vsub.f32 %v1793, %v1936
        %v2034 = vsub.f32 %v1794, %v1941
        %v2035 = vsub.f32 %v1795, %v1946
        %v2036 = vsub.f32 %v1796, %v1951
        %v2037 = vsub.f32 %v1797, %v1956
        %v2038 = vsub.f32 %v1798, %v1961
        %v2039 = vsub.f32 %v1799, %v1966
        %v2040 = vsub.f32 %v1800, %v1971
        %v2041 = vsub.f32 %v1801, %v1976
        %v2042 = vsub.f32 %v1802, %v1981
        %v2043 = vsub.f32 %v1803, %v1986
        %v2044 = vsub.f32 %v1804, %v1991
        %v2045 = vsub.f32 %v1805, %v1996
        %v2046 = vsub.f32 %v1806, %v2001
        %v2047 = vsub.f32 %v1807, %v2006
        %v2048 = vtanh.pop %v2008
        %v2049 = vtanh.pop %v2009
        %v2050 = vtanh.pop %v2010
        %v2051 = vtanh.pop %v2011
        %v2052 = vtanh.pop %v2012
        %v2053 = vtanh.pop %v2013
        %v2054 = vtanh.pop %v2014
        %v2055 = vtanh.pop %v2015
        %v2056 = vtanh.pop %v2016
        %v2057 = vtanh.pop %v2017
        %v2058 = vtanh.pop %v2018
        %v2059 = vtanh.pop %v2019
        %v2060 = vtanh.pop %v2020
        %v2061 = vtanh.pop %v2021
        %v2062 = vtanh.pop %v2022
        %v2063 = vtanh.pop %v2023
        %v2064 = vtanh.pop %v2024
        %v2065 = vtanh.pop %v2025
        %v2066 = vtanh.pop %v2026
        %v2067 = vtanh.pop %v2027
        %v2068 = vtanh.pop %v2028
        %v2069 = vtanh.pop %v2029
        %v2070 = vtanh.pop %v2030
        %v2071 = vtanh.pop %v2031
        %v2072 = vtanh.pop %v2032
        %v2073 = vtanh.pop %v2033
        %v2074 = vtanh.pop %v2034
        %v2075 = vtanh.pop %v2035
        %v2076 = vtanh.pop %v2036
        %v2077 = vtanh.pop %v2037
        %v2078 = vtanh.pop %v2038
        %v2079 = vtanh.pop %v2039
        %v2080 = vtanh.pop %v2040
        %v2081 = vtanh.pop %v2041
        %v2082 = vtanh.pop %v2042
        %v2083 = vtanh.pop %v2043
        %v2084 = vtanh.pop %v2044
        %v2085 = vtanh.pop %v2045
        %v2086 = vtanh.pop %v2046
        %v2087 = vtanh.pop %v2047
        %2089 = vset.pattern.permute.xlu0 0
        %2090 = vperm.xlu0 %2089, %v1528
        %v2091 = vpop.permute.xlu0 %2090
        %2094 = vset.pattern.permute.xlu0 0
        %2095 = vperm.xlu0 %2094, %v1529
        %v2096 = vpop.permute.xlu0 %2095
        %2099 = vset.pattern.permute.xlu0 0
        %2100 = vperm.xlu0 %2099, %v1530
        %v2101 = vpop.permute.xlu0 %2100
        %2104 = vset.pattern.permute.xlu0 0
        %2105 = vperm.xlu0 %2104, %v1531
        %v2106 = vpop.permute.xlu0 %2105
        %2109 = vset.pattern.permute.xlu0 0
        %2110 = vperm.xlu0 %2109, %v1532
        %v2111 = vpop.permute.xlu0 %2110
        %2114 = vset.pattern.permute.xlu0 0
        %2115 = vperm.xlu0 %2114, %v1533
        %v2116 = vpop.permute.xlu0 %2115
        %2119 = vset.pattern.permute.xlu0 0
        %2120 = vperm.xlu0 %2119, %v1534
        %v2121 = vpop.permute.xlu0 %2120
        %2124 = vset.pattern.permute.xlu0 0
        %2125 = vperm.xlu0 %2124, %v1535
        %v2126 = vpop.permute.xlu0 %2125
        %2129 = vset.pattern.permute.xlu0 0
        %2130 = vperm.xlu0 %2129, %v1536
        %v2131 = vpop.permute.xlu0 %2130
        %2134 = vset.pattern.permute.xlu0 0
        %2135 = vperm.xlu0 %2134, %v1537
        %v2136 = vpop.permute.xlu0 %2135
        %2139 = vset.pattern.permute.xlu0 0
        %2140 = vperm.xlu0 %2139, %v1538
        %v2141 = vpop.permute.xlu0 %2140
        %2144 = vset.pattern.permute.xlu0 0
        %2145 = vperm.xlu0 %2144, %v1539
        %v2146 = vpop.permute.xlu0 %2145
        %2149 = vset.pattern.permute.xlu0 0
        %2150 = vperm.xlu0 %2149, %v1540
        %v2151 = vpop.permute.xlu0 %2150
        %2154 = vset.pattern.permute.xlu0 0
        %2155 = vperm.xlu0 %2154, %v1541
        %v2156 = vpop.permute.xlu0 %2155
        %2159 = vset.pattern.permute.xlu0 0
        %2160 = vperm.xlu0 %2159, %v1542
        %v2161 = vpop.permute.xlu0 %2160
        %2164 = vset.pattern.permute.xlu0 0
        %2165 = vperm.xlu0 %2164, %v1543
        %v2166 = vpop.permute.xlu0 %2165
        %2169 = vset.pattern.permute.xlu0 0
        %2170 = vperm.xlu0 %2169, %v1544
        %v2171 = vpop.permute.xlu0 %2170
        %2174 = vset.pattern.permute.xlu0 0
        %2175 = vperm.xlu0 %2174, %v1545
        %v2176 = vpop.permute.xlu0 %2175
        %2179 = vset.pattern.permute.xlu0 0
        %2180 = vperm.xlu0 %2179, %v1546
        %v2181 = vpop.permute.xlu0 %2180
        %2184 = vset.pattern.permute.xlu0 0
        %2185 = vperm.xlu0 %2184, %v1547
        %v2186 = vpop.permute.xlu0 %2185
        %2189 = vset.pattern.permute.xlu0 0
        %2190 = vperm.xlu0 %2189, %v1548
        %v2191 = vpop.permute.xlu0 %2190
        %2194 = vset.pattern.permute.xlu0 0
        %2195 = vperm.xlu0 %2194, %v1549
        %v2196 = vpop.permute.xlu0 %2195
        %2199 = vset.pattern.permute.xlu0 0
        %2200 = vperm.xlu0 %2199, %v1550
        %v2201 = vpop.permute.xlu0 %2200
        %2204 = vset.pattern.permute.xlu0 0
        %2205 = vperm.xlu0 %2204, %v1551
        %v2206 = vpop.permute.xlu0 %2205
        %2209 = vset.pattern.permute.xlu0 0
        %2210 = vperm.xlu0 %2209, %v1552
        %v2211 = vpop.permute.xlu0 %2210
        %2214 = vset.pattern.permute.xlu0 0
        %2215 = vperm.xlu0 %2214, %v1553
        %v2216 = vpop.permute.xlu0 %2215
        %2219 = vset.pattern.permute.xlu0 0
        %2220 = vperm.xlu0 %2219, %v1554
        %v2221 = vpop.permute.xlu0 %2220
        %2224 = vset.pattern.permute.xlu0 0
        %2225 = vperm.xlu0 %2224, %v1555
        %v2226 = vpop.permute.xlu0 %2225
        %2229 = vset.pattern.permute.xlu0 0
        %2230 = vperm.xlu0 %2229, %v1556
        %v2231 = vpop.permute.xlu0 %2230
        %2234 = vset.pattern.permute.xlu0 0
        %2235 = vperm.xlu0 %2234, %v1557
        %v2236 = vpop.permute.xlu0 %2235
        %2239 = vset.pattern.permute.xlu0 0
        %2240 = vperm.xlu0 %2239, %v1558
        %v2241 = vpop.permute.xlu0 %2240
        %2244 = vset.pattern.permute.xlu0 0
        %2245 = vperm.xlu0 %2244, %v1559
        %v2246 = vpop.permute.xlu0 %2245
        %2249 = vset.pattern.permute.xlu0 0
        %2250 = vperm.xlu0 %2249, %v1560
        %v2251 = vpop.permute.xlu0 %2250
        %2254 = vset.pattern.permute.xlu0 0
        %2255 = vperm.xlu0 %2254, %v1561
        %v2256 = vpop.permute.xlu0 %2255
        %2259 = vset.pattern.permute.xlu0 0
        %2260 = vperm.xlu0 %2259, %v1562
        %v2261 = vpop.permute.xlu0 %2260
        %2264 = vset.pattern.permute.xlu0 0
        %2265 = vperm.xlu0 %2264, %v1563
        %v2266 = vpop.permute.xlu0 %2265
        %2269 = vset.pattern.permute.xlu0 0
        %2270 = vperm.xlu0 %2269, %v1564
        %v2271 = vpop.permute.xlu0 %2270
        %2274 = vset.pattern.permute.xlu0 0
        %2275 = vperm.xlu0 %2274, %v1565
        %v2276 = vpop.permute.xlu0 %2275
        %2279 = vset.pattern.permute.xlu0 0
        %2280 = vperm.xlu0 %2279, %v1566
        %v2281 = vpop.permute.xlu0 %2280
        %2284 = vset.pattern.permute.xlu0 0
        %2285 = vperm.xlu0 %2284, %v1567
        %v2286 = vpop.permute.xlu0 %2285
        %v2288 = vmul.f32 %v2091, %v2048
        %v2289 = vmul.f32 %v2096, %v2049
        %v2290 = vmul.f32 %v2101, %v2050
        %v2291 = vmul.f32 %v2106, %v2051
        %v2292 = vmul.f32 %v2111, %v2052
        %v2293 = vmul.f32 %v2116, %v2053
        %v2294 = vmul.f32 %v2121, %v2054
        %v2295 = vmul.f32 %v2126, %v2055
        %v2296 = vmul.f32 %v2131, %v2056
        %v2297 = vmul.f32 %v2136, %v2057
        %v2298 = vmul.f32 %v2141, %v2058
        %v2299 = vmul.f32 %v2146, %v2059
        %v2300 = vmul.f32 %v2151, %v2060
        %v2301 = vmul.f32 %v2156, %v2061
        %v2302 = vmul.f32 %v2161, %v2062
        %v2303 = vmul.f32 %v2166, %v2063
        %v2304 = vmul.f32 %v2171, %v2064
        %v2305 = vmul.f32 %v2176, %v2065
        %v2306 = vmul.f32 %v2181, %v2066
        %v2307 = vmul.f32 %v2186, %v2067
        %v2308 = vmul.f32 %v2191, %v2068
        %v2309 = vmul.f32 %v2196, %v2069
        %v2310 = vmul.f32 %v2201, %v2070
        %v2311 = vmul.f32 %v2206, %v2071
        %v2312 = vmul.f32 %v2211, %v2072
        %v2313 = vmul.f32 %v2216, %v2073
        %v2314 = vmul.f32 %v2221, %v2074
        %v2315 = vmul.f32 %v2226, %v2075
        %v2316 = vmul.f32 %v2231, %v2076
        %v2317 = vmul.f32 %v2236, %v2077
        %v2318 = vmul.f32 %v2241, %v2078
        %v2319 = vmul.f32 %v2246, %v2079
        %v2320 = vmul.f32 %v2251, %v2080
        %v2321 = vmul.f32 %v2256, %v2081
        %v2322 = vmul.f32 %v2261, %v2082
        %v2323 = vmul.f32 %v2266, %v2083
        %v2324 = vmul.f32 %v2271, %v2084
        %v2325 = vmul.f32 %v2276, %v2085
        %v2326 = vmul.f32 %v2281, %v2086
        %v2327 = vmul.f32 %v2286, %v2087
        %v2328 = vadd.f32 %v2288, %v2289
        %v2329 = vadd.f32 %v2328, %v2290
        %v2330 = vadd.f32 %v2329, %v2291
        %v2331 = vrot.slane %v2330, 4
        %v2332 = vadd.f32 %v2330, %v2331
        %v2333 = vrot.slane %v2332, 2
        %v2334 = vadd.f32 %v2332, %v2333
        %v2335 = vrot.slane %v2334, 1
        %v2336 = vadd.f32 %v2334, %v2335
        %v2337 = vadd.f32 %v2292, %v2293
        %v2338 = vadd.f32 %v2337, %v2294
        %v2339 = vadd.f32 %v2338, %v2295
        %v2340 = vrot.slane %v2339, 4
        %v2341 = vadd.f32 %v2339, %v2340
        %v2342 = vrot.slane %v2341, 2
        %v2343 = vadd.f32 %v2341, %v2342
        %v2344 = vrot.slane %v2343, 1
        %v2345 = vadd.f32 %v2343, %v2344
        %v2346 = vadd.f32 %v2296, %v2297
        %v2347 = vadd.f32 %v2346, %v2298
        %v2348 = vadd.f32 %v2347, %v2299
        %v2349 = vrot.slane %v2348, 4
        %v2350 = vadd.f32 %v2348, %v2349
        %v2351 = vrot.slane %v2350, 2
        %v2352 = vadd.f32 %v2350, %v2351
        %v2353 = vrot.slane %v2352, 1
        %v2354 = vadd.f32 %v2352, %v2353
        %v2355 = vadd.f32 %v2300, %v2301
        %v2356 = vadd.f32 %v2355, %v2302
        %v2357 = vadd.f32 %v2356, %v2303
        %v2358 = vrot.slane %v2357, 4
        %v2359 = vadd.f32 %v2357, %v2358
        %v2360 = vrot.slane %v2359, 2
        %v2361 = vadd.f32 %v2359, %v2360
        %v2362 = vrot.slane %v2361, 1
        %v2363 = vadd.f32 %v2361, %v2362
        %v2364 = vadd.f32 %v2304, %v2305
        %v2365 = vadd.f32 %v2364, %v2306
        %v2366 = vadd.f32 %v2365, %v2307
        %v2367 = vrot.slane %v2366, 4
        %v2368 = vadd.f32 %v2366, %v2367
        %v2369 = vrot.slane %v2368, 2
        %v2370 = vadd.f32 %v2368, %v2369
        %v2371 = vrot.slane %v2370, 1
        %v2372 = vadd.f32 %v2370, %v2371
        %v2373 = vadd.f32 %v2308, %v2309
        %v2374 = vadd.f32 %v2373, %v2310
        %v2375 = vadd.f32 %v2374, %v2311
        %v2376 = vrot.slane %v2375, 4
        %v2377 = vadd.f32 %v2375, %v2376
        %v2378 = vrot.slane %v2377, 2
        %v2379 = vadd.f32 %v2377, %v2378
        %v2380 = vrot.slane %v2379, 1
        %v2381 = vadd.f32 %v2379, %v2380
        %v2382 = vadd.f32 %v2312, %v2313
        %v2383 = vadd.f32 %v2382, %v2314
        %v2384 = vadd.f32 %v2383, %v2315
        %v2385 = vrot.slane %v2384, 4
        %v2386 = vadd.f32 %v2384, %v2385
        %v2387 = vrot.slane %v2386, 2
        %v2388 = vadd.f32 %v2386, %v2387
        %v2389 = vrot.slane %v2388, 1
        %v2390 = vadd.f32 %v2388, %v2389
        %v2391 = vadd.f32 %v2316, %v2317
        %v2392 = vadd.f32 %v2391, %v2318
        %v2393 = vadd.f32 %v2392, %v2319
        %v2394 = vrot.slane %v2393, 4
        %v2395 = vadd.f32 %v2393, %v2394
        %v2396 = vrot.slane %v2395, 2
        %v2397 = vadd.f32 %v2395, %v2396
        %v2398 = vrot.slane %v2397, 1
        %v2399 = vadd.f32 %v2397, %v2398
        %v2400 = vadd.f32 %v2320, %v2321
        %v2401 = vadd.f32 %v2400, %v2322
        %v2402 = vadd.f32 %v2401, %v2323
        %v2403 = vrot.slane %v2402, 4
        %v2404 = vadd.f32 %v2402, %v2403
        %v2405 = vrot.slane %v2404, 2
        %v2406 = vadd.f32 %v2404, %v2405
        %v2407 = vrot.slane %v2406, 1
        %v2408 = vadd.f32 %v2406, %v2407
        %v2409 = vadd.f32 %v2324, %v2325
        %v2410 = vadd.f32 %v2409, %v2326
        %v2411 = vadd.f32 %v2410, %v2327
        %v2412 = vrot.slane %v2411, 4
        %v2413 = vadd.f32 %v2411, %v2412
        %v2414 = vrot.slane %v2413, 2
        %v2415 = vadd.f32 %v2413, %v2414
        %v2416 = vrot.slane %v2415, 1
        %v2417 = vadd.f32 %v2415, %v2416
        %v2428 = vsel %vm1346, %v2345, %v2336
        %v2429 = vsel %vm1348, %v2354, %v2428
        %v2430 = vsel %vm1350, %v2363, %v2429
        %v2431 = vsel %vm1352, %v2372, %v2430
        %v2432 = vsel %vm1354, %v2381, %v2431
        %v2433 = vsel %vm1356, %v2390, %v2432
        %v2434 = vsel %vm1358, %v2399, %v2433
        %v2435 = vsel %vm1346, %v2417, %v2408
        %v2438 = vadd.f32 %v1363, %v2434
        %v2439 = vadd.f32 %v1364, %v2435
        %s2440 = scalar_lea.vmem %s1, 640
        %v2441 = vld [vmem:[%s2440] sm:$0xff]
        %v2442 = vld [vmem:[%s2440 + $0x8] sm:$0xff]
        %v2443 = vld [vmem:[%s2440 + $0x10] sm:$0xff]
        %v2444 = vld [vmem:[%s2440 + $0x18] sm:$0xff]
        %v2445 = vld [vmem:[%s2440 + $0x20] sm:$0xff]
        %v2446 = vld [vmem:[%s2440 + $0x28] sm:$0xff]
        %v2447 = vld [vmem:[%s2440 + $0x30] sm:$0xff]
        %v2448 = vld [vmem:[%s2440 + $0x38] sm:$0xff]
        %v2449 = vld [vmem:[%s2440 + $0x40] sm:$0xff]
        %v2450 = vld [vmem:[%s2440 + $0x48] sm:$0xff]
        %v2451 = vld [vmem:[%s2440 + $0x50] sm:$0xff]
        %v2452 = vld [vmem:[%s2440 + $0x58] sm:$0xff]
        %v2453 = vld [vmem:[%s2440 + $0x60] sm:$0xff]
        %v2454 = vld [vmem:[%s2440 + $0x68] sm:$0xff]
        %v2455 = vld [vmem:[%s2440 + $0x70] sm:$0xff]
        %v2456 = vld [vmem:[%s2440 + $0x78] sm:$0xff]
        %v2457 = vld [vmem:[%s2440 + $0x80] sm:$0xff]
        %v2458 = vld [vmem:[%s2440 + $0x88] sm:$0xff]
        %v2459 = vld [vmem:[%s2440 + $0x90] sm:$0xff]
        %v2460 = vld [vmem:[%s2440 + $0x98] sm:$0xff]
        %v2461 = vld [vmem:[%s2440 + $0xa0] sm:$0xff]
        %v2462 = vld [vmem:[%s2440 + $0xa8] sm:$0xff]
        %v2463 = vld [vmem:[%s2440 + $0xb0] sm:$0xff]
        %v2464 = vld [vmem:[%s2440 + $0xb8] sm:$0xff]
        %v2465 = vld [vmem:[%s2440 + $0xc0] sm:$0xff]
        %v2466 = vld [vmem:[%s2440 + $0xc8] sm:$0xff]
        %v2467 = vld [vmem:[%s2440 + $0xd0] sm:$0xff]
        %v2468 = vld [vmem:[%s2440 + $0xd8] sm:$0xff]
        %v2469 = vld [vmem:[%s2440 + $0xe0] sm:$0xff]
        %v2470 = vld [vmem:[%s2440 + $0xe8] sm:$0xff]
        %v2471 = vld [vmem:[%s2440 + $0xf0] sm:$0xff]
        %v2472 = vld [vmem:[%s2440 + $0xf8] sm:$0xff]
        %v2473 = vld [vmem:[%s2440 + $0x100] sm:$0xff]
        %v2474 = vld [vmem:[%s2440 + $0x108] sm:$0xff]
        %v2475 = vld [vmem:[%s2440 + $0x110] sm:$0xff]
        %v2476 = vld [vmem:[%s2440 + $0x118] sm:$0xff]
        %v2477 = vld [vmem:[%s2440 + $0x120] sm:$0xff]
        %v2478 = vld [vmem:[%s2440 + $0x128] sm:$0xff]
        %v2479 = vld [vmem:[%s2440 + $0x130] sm:$0xff]
        %v2480 = vld [vmem:[%s2440 + $0x138] sm:$0xff]
        %s2481 = scalar_lea.vmem %s2, 640
        %v2482 = vld [vmem:[%s2481] sm:$0xff]
        %v2483 = vld [vmem:[%s2481 + $0x8] sm:$0xff]
        %v2484 = vld [vmem:[%s2481 + $0x10] sm:$0xff]
        %v2485 = vld [vmem:[%s2481 + $0x18] sm:$0xff]
        %v2486 = vld [vmem:[%s2481 + $0x20] sm:$0xff]
        %v2487 = vld [vmem:[%s2481 + $0x28] sm:$0xff]
        %v2488 = vld [vmem:[%s2481 + $0x30] sm:$0xff]
        %v2489 = vld [vmem:[%s2481 + $0x38] sm:$0xff]
        %v2490 = vld [vmem:[%s2481 + $0x40] sm:$0xff]
        %v2491 = vld [vmem:[%s2481 + $0x48] sm:$0xff]
        %v2492 = vld [vmem:[%s2481 + $0x50] sm:$0xff]
        %v2493 = vld [vmem:[%s2481 + $0x58] sm:$0xff]
        %v2494 = vld [vmem:[%s2481 + $0x60] sm:$0xff]
        %v2495 = vld [vmem:[%s2481 + $0x68] sm:$0xff]
        %v2496 = vld [vmem:[%s2481 + $0x70] sm:$0xff]
        %v2497 = vld [vmem:[%s2481 + $0x78] sm:$0xff]
        %v2498 = vld [vmem:[%s2481 + $0x80] sm:$0xff]
        %v2499 = vld [vmem:[%s2481 + $0x88] sm:$0xff]
        %v2500 = vld [vmem:[%s2481 + $0x90] sm:$0xff]
        %v2501 = vld [vmem:[%s2481 + $0x98] sm:$0xff]
        %v2502 = vld [vmem:[%s2481 + $0xa0] sm:$0xff]
        %v2503 = vld [vmem:[%s2481 + $0xa8] sm:$0xff]
        %v2504 = vld [vmem:[%s2481 + $0xb0] sm:$0xff]
        %v2505 = vld [vmem:[%s2481 + $0xb8] sm:$0xff]
        %v2506 = vld [vmem:[%s2481 + $0xc0] sm:$0xff]
        %v2507 = vld [vmem:[%s2481 + $0xc8] sm:$0xff]
        %v2508 = vld [vmem:[%s2481 + $0xd0] sm:$0xff]
        %v2509 = vld [vmem:[%s2481 + $0xd8] sm:$0xff]
        %v2510 = vld [vmem:[%s2481 + $0xe0] sm:$0xff]
        %v2511 = vld [vmem:[%s2481 + $0xe8] sm:$0xff]
        %v2512 = vld [vmem:[%s2481 + $0xf0] sm:$0xff]
        %v2513 = vld [vmem:[%s2481 + $0xf8] sm:$0xff]
        %v2514 = vld [vmem:[%s2481 + $0x100] sm:$0xff]
        %v2515 = vld [vmem:[%s2481 + $0x108] sm:$0xff]
        %v2516 = vld [vmem:[%s2481 + $0x110] sm:$0xff]
        %v2517 = vld [vmem:[%s2481 + $0x118] sm:$0xff]
        %v2518 = vld [vmem:[%s2481 + $0x120] sm:$0xff]
        %v2519 = vld [vmem:[%s2481 + $0x128] sm:$0xff]
        %v2520 = vld [vmem:[%s2481 + $0x130] sm:$0xff]
        %v2521 = vld [vmem:[%s2481 + $0x138] sm:$0xff]
        %s2522 = scalar_lea.vmem %s3, 640
        %v2523 = vld [vmem:[%s2522] sm:$0xff]
        %v2524 = vld [vmem:[%s2522 + $0x8] sm:$0xff]
        %v2525 = vld [vmem:[%s2522 + $0x10] sm:$0xff]
        %v2526 = vld [vmem:[%s2522 + $0x18] sm:$0xff]
        %v2527 = vld [vmem:[%s2522 + $0x20] sm:$0xff]
        %v2528 = vld [vmem:[%s2522 + $0x28] sm:$0xff]
        %v2529 = vld [vmem:[%s2522 + $0x30] sm:$0xff]
        %v2530 = vld [vmem:[%s2522 + $0x38] sm:$0xff]
        %v2531 = vld [vmem:[%s2522 + $0x40] sm:$0xff]
        %v2532 = vld [vmem:[%s2522 + $0x48] sm:$0xff]
        %v2533 = vld [vmem:[%s2522 + $0x50] sm:$0xff]
        %v2534 = vld [vmem:[%s2522 + $0x58] sm:$0xff]
        %v2535 = vld [vmem:[%s2522 + $0x60] sm:$0xff]
        %v2536 = vld [vmem:[%s2522 + $0x68] sm:$0xff]
        %v2537 = vld [vmem:[%s2522 + $0x70] sm:$0xff]
        %v2538 = vld [vmem:[%s2522 + $0x78] sm:$0xff]
        %v2539 = vld [vmem:[%s2522 + $0x80] sm:$0xff]
        %v2540 = vld [vmem:[%s2522 + $0x88] sm:$0xff]
        %v2541 = vld [vmem:[%s2522 + $0x90] sm:$0xff]
        %v2542 = vld [vmem:[%s2522 + $0x98] sm:$0xff]
        %v2543 = vld [vmem:[%s2522 + $0xa0] sm:$0xff]
        %v2544 = vld [vmem:[%s2522 + $0xa8] sm:$0xff]
        %v2545 = vld [vmem:[%s2522 + $0xb0] sm:$0xff]
        %v2546 = vld [vmem:[%s2522 + $0xb8] sm:$0xff]
        %v2547 = vld [vmem:[%s2522 + $0xc0] sm:$0xff]
        %v2548 = vld [vmem:[%s2522 + $0xc8] sm:$0xff]
        %v2549 = vld [vmem:[%s2522 + $0xd0] sm:$0xff]
        %v2550 = vld [vmem:[%s2522 + $0xd8] sm:$0xff]
        %v2551 = vld [vmem:[%s2522 + $0xe0] sm:$0xff]
        %v2552 = vld [vmem:[%s2522 + $0xe8] sm:$0xff]
        %v2553 = vld [vmem:[%s2522 + $0xf0] sm:$0xff]
        %v2554 = vld [vmem:[%s2522 + $0xf8] sm:$0xff]
        %v2555 = vld [vmem:[%s2522 + $0x100] sm:$0xff]
        %v2556 = vld [vmem:[%s2522 + $0x108] sm:$0xff]
        %v2557 = vld [vmem:[%s2522 + $0x110] sm:$0xff]
        %v2558 = vld [vmem:[%s2522 + $0x118] sm:$0xff]
        %v2559 = vld [vmem:[%s2522 + $0x120] sm:$0xff]
        %v2560 = vld [vmem:[%s2522 + $0x128] sm:$0xff]
        %v2561 = vld [vmem:[%s2522 + $0x130] sm:$0xff]
        %v2562 = vld [vmem:[%s2522 + $0x138] sm:$0xff]
        %v2563 = vmul.f32 %v2441, %v2482
        %v2564 = vmul.f32 %v2442, %v2483
        %v2565 = vmul.f32 %v2443, %v2484
        %v2566 = vmul.f32 %v2444, %v2485
        %v2567 = vmul.f32 %v2445, %v2486
        %v2568 = vmul.f32 %v2446, %v2487
        %v2569 = vmul.f32 %v2447, %v2488
        %v2570 = vmul.f32 %v2448, %v2489
        %v2571 = vmul.f32 %v2449, %v2490
        %v2572 = vmul.f32 %v2450, %v2491
        %v2573 = vmul.f32 %v2451, %v2492
        %v2574 = vmul.f32 %v2452, %v2493
        %v2575 = vmul.f32 %v2453, %v2494
        %v2576 = vmul.f32 %v2454, %v2495
        %v2577 = vmul.f32 %v2455, %v2496
        %v2578 = vmul.f32 %v2456, %v2497
        %v2579 = vmul.f32 %v2457, %v2498
        %v2580 = vmul.f32 %v2458, %v2499
        %v2581 = vmul.f32 %v2459, %v2500
        %v2582 = vmul.f32 %v2460, %v2501
        %v2583 = vmul.f32 %v2461, %v2502
        %v2584 = vmul.f32 %v2462, %v2503
        %v2585 = vmul.f32 %v2463, %v2504
        %v2586 = vmul.f32 %v2464, %v2505
        %v2587 = vmul.f32 %v2465, %v2506
        %v2588 = vmul.f32 %v2466, %v2507
        %v2589 = vmul.f32 %v2467, %v2508
        %v2590 = vmul.f32 %v2468, %v2509
        %v2591 = vmul.f32 %v2469, %v2510
        %v2592 = vmul.f32 %v2470, %v2511
        %v2593 = vmul.f32 %v2471, %v2512
        %v2594 = vmul.f32 %v2472, %v2513
        %v2595 = vmul.f32 %v2473, %v2514
        %v2596 = vmul.f32 %v2474, %v2515
        %v2597 = vmul.f32 %v2475, %v2516
        %v2598 = vmul.f32 %v2476, %v2517
        %v2599 = vmul.f32 %v2477, %v2518
        %v2600 = vmul.f32 %v2478, %v2519
        %v2601 = vmul.f32 %v2479, %v2520
        %v2602 = vmul.f32 %v2480, %v2521
        %v2603 = vmul.f32 %v2523, %v2523
        %v2604 = vmul.f32 %v2524, %v2524
        %v2605 = vmul.f32 %v2525, %v2525
        %v2606 = vmul.f32 %v2526, %v2526
        %v2607 = vmul.f32 %v2527, %v2527
        %v2608 = vmul.f32 %v2528, %v2528
        %v2609 = vmul.f32 %v2529, %v2529
        %v2610 = vmul.f32 %v2530, %v2530
        %v2611 = vmul.f32 %v2531, %v2531
        %v2612 = vmul.f32 %v2532, %v2532
        %v2613 = vmul.f32 %v2533, %v2533
        %v2614 = vmul.f32 %v2534, %v2534
        %v2615 = vmul.f32 %v2535, %v2535
        %v2616 = vmul.f32 %v2536, %v2536
        %v2617 = vmul.f32 %v2537, %v2537
        %v2618 = vmul.f32 %v2538, %v2538
        %v2619 = vmul.f32 %v2539, %v2539
        %v2620 = vmul.f32 %v2540, %v2540
        %v2621 = vmul.f32 %v2541, %v2541
        %v2622 = vmul.f32 %v2542, %v2542
        %v2623 = vmul.f32 %v2543, %v2543
        %v2624 = vmul.f32 %v2544, %v2544
        %v2625 = vmul.f32 %v2545, %v2545
        %v2626 = vmul.f32 %v2546, %v2546
        %v2627 = vmul.f32 %v2547, %v2547
        %v2628 = vmul.f32 %v2548, %v2548
        %v2629 = vmul.f32 %v2549, %v2549
        %v2630 = vmul.f32 %v2550, %v2550
        %v2631 = vmul.f32 %v2551, %v2551
        %v2632 = vmul.f32 %v2552, %v2552
        %v2633 = vmul.f32 %v2553, %v2553
        %v2634 = vmul.f32 %v2554, %v2554
        %v2635 = vmul.f32 %v2555, %v2555
        %v2636 = vmul.f32 %v2556, %v2556
        %v2637 = vmul.f32 %v2557, %v2557
        %v2638 = vmul.f32 %v2558, %v2558
        %v2639 = vmul.f32 %v2559, %v2559
        %v2640 = vmul.f32 %v2560, %v2560
        %v2641 = vmul.f32 %v2561, %v2561
        %v2642 = vmul.f32 %v2562, %v2562
        %2644 = vset.pattern.permute.xlu0 0
        %2645 = vperm.xlu0 %2644, %v2441
        %v2646 = vpop.permute.xlu0 %2645
        %2649 = vset.pattern.permute.xlu0 0
        %2650 = vperm.xlu0 %2649, %v2442
        %v2651 = vpop.permute.xlu0 %2650
        %2654 = vset.pattern.permute.xlu0 0
        %2655 = vperm.xlu0 %2654, %v2443
        %v2656 = vpop.permute.xlu0 %2655
        %2659 = vset.pattern.permute.xlu0 0
        %2660 = vperm.xlu0 %2659, %v2444
        %v2661 = vpop.permute.xlu0 %2660
        %2664 = vset.pattern.permute.xlu0 0
        %2665 = vperm.xlu0 %2664, %v2445
        %v2666 = vpop.permute.xlu0 %2665
        %2669 = vset.pattern.permute.xlu0 0
        %2670 = vperm.xlu0 %2669, %v2446
        %v2671 = vpop.permute.xlu0 %2670
        %2674 = vset.pattern.permute.xlu0 0
        %2675 = vperm.xlu0 %2674, %v2447
        %v2676 = vpop.permute.xlu0 %2675
        %2679 = vset.pattern.permute.xlu0 0
        %2680 = vperm.xlu0 %2679, %v2448
        %v2681 = vpop.permute.xlu0 %2680
        %2684 = vset.pattern.permute.xlu0 0
        %2685 = vperm.xlu0 %2684, %v2449
        %v2686 = vpop.permute.xlu0 %2685
        %2689 = vset.pattern.permute.xlu0 0
        %2690 = vperm.xlu0 %2689, %v2450
        %v2691 = vpop.permute.xlu0 %2690
        %2694 = vset.pattern.permute.xlu0 0
        %2695 = vperm.xlu0 %2694, %v2451
        %v2696 = vpop.permute.xlu0 %2695
        %2699 = vset.pattern.permute.xlu0 0
        %2700 = vperm.xlu0 %2699, %v2452
        %v2701 = vpop.permute.xlu0 %2700
        %2704 = vset.pattern.permute.xlu0 0
        %2705 = vperm.xlu0 %2704, %v2453
        %v2706 = vpop.permute.xlu0 %2705
        %2709 = vset.pattern.permute.xlu0 0
        %2710 = vperm.xlu0 %2709, %v2454
        %v2711 = vpop.permute.xlu0 %2710
        %2714 = vset.pattern.permute.xlu0 0
        %2715 = vperm.xlu0 %2714, %v2455
        %v2716 = vpop.permute.xlu0 %2715
        %2719 = vset.pattern.permute.xlu0 0
        %2720 = vperm.xlu0 %2719, %v2456
        %v2721 = vpop.permute.xlu0 %2720
        %2724 = vset.pattern.permute.xlu0 0
        %2725 = vperm.xlu0 %2724, %v2457
        %v2726 = vpop.permute.xlu0 %2725
        %2729 = vset.pattern.permute.xlu0 0
        %2730 = vperm.xlu0 %2729, %v2458
        %v2731 = vpop.permute.xlu0 %2730
        %2734 = vset.pattern.permute.xlu0 0
        %2735 = vperm.xlu0 %2734, %v2459
        %v2736 = vpop.permute.xlu0 %2735
        %2739 = vset.pattern.permute.xlu0 0
        %2740 = vperm.xlu0 %2739, %v2460
        %v2741 = vpop.permute.xlu0 %2740
        %2744 = vset.pattern.permute.xlu0 0
        %2745 = vperm.xlu0 %2744, %v2461
        %v2746 = vpop.permute.xlu0 %2745
        %2749 = vset.pattern.permute.xlu0 0
        %2750 = vperm.xlu0 %2749, %v2462
        %v2751 = vpop.permute.xlu0 %2750
        %2754 = vset.pattern.permute.xlu0 0
        %2755 = vperm.xlu0 %2754, %v2463
        %v2756 = vpop.permute.xlu0 %2755
        %2759 = vset.pattern.permute.xlu0 0
        %2760 = vperm.xlu0 %2759, %v2464
        %v2761 = vpop.permute.xlu0 %2760
        %2764 = vset.pattern.permute.xlu0 0
        %2765 = vperm.xlu0 %2764, %v2465
        %v2766 = vpop.permute.xlu0 %2765
        %2769 = vset.pattern.permute.xlu0 0
        %2770 = vperm.xlu0 %2769, %v2466
        %v2771 = vpop.permute.xlu0 %2770
        %2774 = vset.pattern.permute.xlu0 0
        %2775 = vperm.xlu0 %2774, %v2467
        %v2776 = vpop.permute.xlu0 %2775
        %2779 = vset.pattern.permute.xlu0 0
        %2780 = vperm.xlu0 %2779, %v2468
        %v2781 = vpop.permute.xlu0 %2780
        %2784 = vset.pattern.permute.xlu0 0
        %2785 = vperm.xlu0 %2784, %v2469
        %v2786 = vpop.permute.xlu0 %2785
        %2789 = vset.pattern.permute.xlu0 0
        %2790 = vperm.xlu0 %2789, %v2470
        %v2791 = vpop.permute.xlu0 %2790
        %2794 = vset.pattern.permute.xlu0 0
        %2795 = vperm.xlu0 %2794, %v2471
        %v2796 = vpop.permute.xlu0 %2795
        %2799 = vset.pattern.permute.xlu0 0
        %2800 = vperm.xlu0 %2799, %v2472
        %v2801 = vpop.permute.xlu0 %2800
        %2804 = vset.pattern.permute.xlu0 0
        %2805 = vperm.xlu0 %2804, %v2473
        %v2806 = vpop.permute.xlu0 %2805
        %2809 = vset.pattern.permute.xlu0 0
        %2810 = vperm.xlu0 %2809, %v2474
        %v2811 = vpop.permute.xlu0 %2810
        %2814 = vset.pattern.permute.xlu0 0
        %2815 = vperm.xlu0 %2814, %v2475
        %v2816 = vpop.permute.xlu0 %2815
        %2819 = vset.pattern.permute.xlu0 0
        %2820 = vperm.xlu0 %2819, %v2476
        %v2821 = vpop.permute.xlu0 %2820
        %2824 = vset.pattern.permute.xlu0 0
        %2825 = vperm.xlu0 %2824, %v2477
        %v2826 = vpop.permute.xlu0 %2825
        %2829 = vset.pattern.permute.xlu0 0
        %2830 = vperm.xlu0 %2829, %v2478
        %v2831 = vpop.permute.xlu0 %2830
        %2834 = vset.pattern.permute.xlu0 0
        %2835 = vperm.xlu0 %2834, %v2479
        %v2836 = vpop.permute.xlu0 %2835
        %2839 = vset.pattern.permute.xlu0 0
        %2840 = vperm.xlu0 %2839, %v2480
        %v2841 = vpop.permute.xlu0 %2840
        %v2843 = vmul.f32 %v2646, %v270
        %v2844 = vmul.f32 %v2651, %v271
        %v2845 = vmul.f32 %v2656, %v272
        %v2846 = vmul.f32 %v2661, %v273
        %v2847 = vmul.f32 %v2666, %v270
        %v2848 = vmul.f32 %v2671, %v271
        %v2849 = vmul.f32 %v2676, %v272
        %v2850 = vmul.f32 %v2681, %v273
        %v2851 = vmul.f32 %v2686, %v270
        %v2852 = vmul.f32 %v2691, %v271
        %v2853 = vmul.f32 %v2696, %v272
        %v2854 = vmul.f32 %v2701, %v273
        %v2855 = vmul.f32 %v2706, %v270
        %v2856 = vmul.f32 %v2711, %v271
        %v2857 = vmul.f32 %v2716, %v272
        %v2858 = vmul.f32 %v2721, %v273
        %v2859 = vmul.f32 %v2726, %v270
        %v2860 = vmul.f32 %v2731, %v271
        %v2861 = vmul.f32 %v2736, %v272
        %v2862 = vmul.f32 %v2741, %v273
        %v2863 = vmul.f32 %v2746, %v270
        %v2864 = vmul.f32 %v2751, %v271
        %v2865 = vmul.f32 %v2756, %v272
        %v2866 = vmul.f32 %v2761, %v273
        %v2867 = vmul.f32 %v2766, %v270
        %v2868 = vmul.f32 %v2771, %v271
        %v2869 = vmul.f32 %v2776, %v272
        %v2870 = vmul.f32 %v2781, %v273
        %v2871 = vmul.f32 %v2786, %v270
        %v2872 = vmul.f32 %v2791, %v271
        %v2873 = vmul.f32 %v2796, %v272
        %v2874 = vmul.f32 %v2801, %v273
        %v2875 = vmul.f32 %v2806, %v270
        %v2876 = vmul.f32 %v2811, %v271
        %v2877 = vmul.f32 %v2816, %v272
        %v2878 = vmul.f32 %v2821, %v273
        %v2879 = vmul.f32 %v2826, %v270
        %v2880 = vmul.f32 %v2831, %v271
        %v2881 = vmul.f32 %v2836, %v272
        %v2882 = vmul.f32 %v2841, %v273
        %2884 = vset.pattern.permute.xlu0 0
        %2885 = vperm.xlu0 %2884, %v2563
        %v2886 = vpop.permute.xlu0 %2885
        %2889 = vset.pattern.permute.xlu0 0
        %2890 = vperm.xlu0 %2889, %v2564
        %v2891 = vpop.permute.xlu0 %2890
        %2894 = vset.pattern.permute.xlu0 0
        %2895 = vperm.xlu0 %2894, %v2565
        %v2896 = vpop.permute.xlu0 %2895
        %2899 = vset.pattern.permute.xlu0 0
        %2900 = vperm.xlu0 %2899, %v2566
        %v2901 = vpop.permute.xlu0 %2900
        %2904 = vset.pattern.permute.xlu0 0
        %2905 = vperm.xlu0 %2904, %v2567
        %v2906 = vpop.permute.xlu0 %2905
        %2909 = vset.pattern.permute.xlu0 0
        %2910 = vperm.xlu0 %2909, %v2568
        %v2911 = vpop.permute.xlu0 %2910
        %2914 = vset.pattern.permute.xlu0 0
        %2915 = vperm.xlu0 %2914, %v2569
        %v2916 = vpop.permute.xlu0 %2915
        %2919 = vset.pattern.permute.xlu0 0
        %2920 = vperm.xlu0 %2919, %v2570
        %v2921 = vpop.permute.xlu0 %2920
        %2924 = vset.pattern.permute.xlu0 0
        %2925 = vperm.xlu0 %2924, %v2571
        %v2926 = vpop.permute.xlu0 %2925
        %2929 = vset.pattern.permute.xlu0 0
        %2930 = vperm.xlu0 %2929, %v2572
        %v2931 = vpop.permute.xlu0 %2930
        %2934 = vset.pattern.permute.xlu0 0
        %2935 = vperm.xlu0 %2934, %v2573
        %v2936 = vpop.permute.xlu0 %2935
        %2939 = vset.pattern.permute.xlu0 0
        %2940 = vperm.xlu0 %2939, %v2574
        %v2941 = vpop.permute.xlu0 %2940
        %2944 = vset.pattern.permute.xlu0 0
        %2945 = vperm.xlu0 %2944, %v2575
        %v2946 = vpop.permute.xlu0 %2945
        %2949 = vset.pattern.permute.xlu0 0
        %2950 = vperm.xlu0 %2949, %v2576
        %v2951 = vpop.permute.xlu0 %2950
        %2954 = vset.pattern.permute.xlu0 0
        %2955 = vperm.xlu0 %2954, %v2577
        %v2956 = vpop.permute.xlu0 %2955
        %2959 = vset.pattern.permute.xlu0 0
        %2960 = vperm.xlu0 %2959, %v2578
        %v2961 = vpop.permute.xlu0 %2960
        %2964 = vset.pattern.permute.xlu0 0
        %2965 = vperm.xlu0 %2964, %v2579
        %v2966 = vpop.permute.xlu0 %2965
        %2969 = vset.pattern.permute.xlu0 0
        %2970 = vperm.xlu0 %2969, %v2580
        %v2971 = vpop.permute.xlu0 %2970
        %2974 = vset.pattern.permute.xlu0 0
        %2975 = vperm.xlu0 %2974, %v2581
        %v2976 = vpop.permute.xlu0 %2975
        %2979 = vset.pattern.permute.xlu0 0
        %2980 = vperm.xlu0 %2979, %v2582
        %v2981 = vpop.permute.xlu0 %2980
        %2984 = vset.pattern.permute.xlu0 0
        %2985 = vperm.xlu0 %2984, %v2583
        %v2986 = vpop.permute.xlu0 %2985
        %2989 = vset.pattern.permute.xlu0 0
        %2990 = vperm.xlu0 %2989, %v2584
        %v2991 = vpop.permute.xlu0 %2990
        %2994 = vset.pattern.permute.xlu0 0
        %2995 = vperm.xlu0 %2994, %v2585
        %v2996 = vpop.permute.xlu0 %2995
        %2999 = vset.pattern.permute.xlu0 0
        %3000 = vperm.xlu0 %2999, %v2586
        %v3001 = vpop.permute.xlu0 %3000
        %3004 = vset.pattern.permute.xlu0 0
        %3005 = vperm.xlu0 %3004, %v2587
        %v3006 = vpop.permute.xlu0 %3005
        %3009 = vset.pattern.permute.xlu0 0
        %3010 = vperm.xlu0 %3009, %v2588
        %v3011 = vpop.permute.xlu0 %3010
        %3014 = vset.pattern.permute.xlu0 0
        %3015 = vperm.xlu0 %3014, %v2589
        %v3016 = vpop.permute.xlu0 %3015
        %3019 = vset.pattern.permute.xlu0 0
        %3020 = vperm.xlu0 %3019, %v2590
        %v3021 = vpop.permute.xlu0 %3020
        %3024 = vset.pattern.permute.xlu0 0
        %3025 = vperm.xlu0 %3024, %v2591
        %v3026 = vpop.permute.xlu0 %3025
        %3029 = vset.pattern.permute.xlu0 0
        %3030 = vperm.xlu0 %3029, %v2592
        %v3031 = vpop.permute.xlu0 %3030
        %3034 = vset.pattern.permute.xlu0 0
        %3035 = vperm.xlu0 %3034, %v2593
        %v3036 = vpop.permute.xlu0 %3035
        %3039 = vset.pattern.permute.xlu0 0
        %3040 = vperm.xlu0 %3039, %v2594
        %v3041 = vpop.permute.xlu0 %3040
        %3044 = vset.pattern.permute.xlu0 0
        %3045 = vperm.xlu0 %3044, %v2595
        %v3046 = vpop.permute.xlu0 %3045
        %3049 = vset.pattern.permute.xlu0 0
        %3050 = vperm.xlu0 %3049, %v2596
        %v3051 = vpop.permute.xlu0 %3050
        %3054 = vset.pattern.permute.xlu0 0
        %3055 = vperm.xlu0 %3054, %v2597
        %v3056 = vpop.permute.xlu0 %3055
        %3059 = vset.pattern.permute.xlu0 0
        %3060 = vperm.xlu0 %3059, %v2598
        %v3061 = vpop.permute.xlu0 %3060
        %3064 = vset.pattern.permute.xlu0 0
        %3065 = vperm.xlu0 %3064, %v2599
        %v3066 = vpop.permute.xlu0 %3065
        %3069 = vset.pattern.permute.xlu0 0
        %3070 = vperm.xlu0 %3069, %v2600
        %v3071 = vpop.permute.xlu0 %3070
        %3074 = vset.pattern.permute.xlu0 0
        %3075 = vperm.xlu0 %3074, %v2601
        %v3076 = vpop.permute.xlu0 %3075
        %3079 = vset.pattern.permute.xlu0 0
        %3080 = vperm.xlu0 %3079, %v2602
        %v3081 = vpop.permute.xlu0 %3080
        %v3083 = vsub.f32 %v2843, %v2886
        %v3084 = vsub.f32 %v2844, %v2891
        %v3085 = vsub.f32 %v2845, %v2896
        %v3086 = vsub.f32 %v2846, %v2901
        %v3087 = vsub.f32 %v2847, %v2906
        %v3088 = vsub.f32 %v2848, %v2911
        %v3089 = vsub.f32 %v2849, %v2916
        %v3090 = vsub.f32 %v2850, %v2921
        %v3091 = vsub.f32 %v2851, %v2926
        %v3092 = vsub.f32 %v2852, %v2931
        %v3093 = vsub.f32 %v2853, %v2936
        %v3094 = vsub.f32 %v2854, %v2941
        %v3095 = vsub.f32 %v2855, %v2946
        %v3096 = vsub.f32 %v2856, %v2951
        %v3097 = vsub.f32 %v2857, %v2956
        %v3098 = vsub.f32 %v2858, %v2961
        %v3099 = vsub.f32 %v2859, %v2966
        %v3100 = vsub.f32 %v2860, %v2971
        %v3101 = vsub.f32 %v2861, %v2976
        %v3102 = vsub.f32 %v2862, %v2981
        %v3103 = vsub.f32 %v2863, %v2986
        %v3104 = vsub.f32 %v2864, %v2991
        %v3105 = vsub.f32 %v2865, %v2996
        %v3106 = vsub.f32 %v2866, %v3001
        %v3107 = vsub.f32 %v2867, %v3006
        %v3108 = vsub.f32 %v2868, %v3011
        %v3109 = vsub.f32 %v2869, %v3016
        %v3110 = vsub.f32 %v2870, %v3021
        %v3111 = vsub.f32 %v2871, %v3026
        %v3112 = vsub.f32 %v2872, %v3031
        %v3113 = vsub.f32 %v2873, %v3036
        %v3114 = vsub.f32 %v2874, %v3041
        %v3115 = vsub.f32 %v2875, %v3046
        %v3116 = vsub.f32 %v2876, %v3051
        %v3117 = vsub.f32 %v2877, %v3056
        %v3118 = vsub.f32 %v2878, %v3061
        %v3119 = vsub.f32 %v2879, %v3066
        %v3120 = vsub.f32 %v2880, %v3071
        %v3121 = vsub.f32 %v2881, %v3076
        %v3122 = vsub.f32 %v2882, %v3081
        %v3123 = vtanh.pop %v3083
        %v3124 = vtanh.pop %v3084
        %v3125 = vtanh.pop %v3085
        %v3126 = vtanh.pop %v3086
        %v3127 = vtanh.pop %v3087
        %v3128 = vtanh.pop %v3088
        %v3129 = vtanh.pop %v3089
        %v3130 = vtanh.pop %v3090
        %v3131 = vtanh.pop %v3091
        %v3132 = vtanh.pop %v3092
        %v3133 = vtanh.pop %v3093
        %v3134 = vtanh.pop %v3094
        %v3135 = vtanh.pop %v3095
        %v3136 = vtanh.pop %v3096
        %v3137 = vtanh.pop %v3097
        %v3138 = vtanh.pop %v3098
        %v3139 = vtanh.pop %v3099
        %v3140 = vtanh.pop %v3100
        %v3141 = vtanh.pop %v3101
        %v3142 = vtanh.pop %v3102
        %v3143 = vtanh.pop %v3103
        %v3144 = vtanh.pop %v3104
        %v3145 = vtanh.pop %v3105
        %v3146 = vtanh.pop %v3106
        %v3147 = vtanh.pop %v3107
        %v3148 = vtanh.pop %v3108
        %v3149 = vtanh.pop %v3109
        %v3150 = vtanh.pop %v3110
        %v3151 = vtanh.pop %v3111
        %v3152 = vtanh.pop %v3112
        %v3153 = vtanh.pop %v3113
        %v3154 = vtanh.pop %v3114
        %v3155 = vtanh.pop %v3115
        %v3156 = vtanh.pop %v3116
        %v3157 = vtanh.pop %v3117
        %v3158 = vtanh.pop %v3118
        %v3159 = vtanh.pop %v3119
        %v3160 = vtanh.pop %v3120
        %v3161 = vtanh.pop %v3121
        %v3162 = vtanh.pop %v3122
        %3164 = vset.pattern.permute.xlu0 0
        %3165 = vperm.xlu0 %3164, %v2603
        %v3166 = vpop.permute.xlu0 %3165
        %3169 = vset.pattern.permute.xlu0 0
        %3170 = vperm.xlu0 %3169, %v2604
        %v3171 = vpop.permute.xlu0 %3170
        %3174 = vset.pattern.permute.xlu0 0
        %3175 = vperm.xlu0 %3174, %v2605
        %v3176 = vpop.permute.xlu0 %3175
        %3179 = vset.pattern.permute.xlu0 0
        %3180 = vperm.xlu0 %3179, %v2606
        %v3181 = vpop.permute.xlu0 %3180
        %3184 = vset.pattern.permute.xlu0 0
        %3185 = vperm.xlu0 %3184, %v2607
        %v3186 = vpop.permute.xlu0 %3185
        %3189 = vset.pattern.permute.xlu0 0
        %3190 = vperm.xlu0 %3189, %v2608
        %v3191 = vpop.permute.xlu0 %3190
        %3194 = vset.pattern.permute.xlu0 0
        %3195 = vperm.xlu0 %3194, %v2609
        %v3196 = vpop.permute.xlu0 %3195
        %3199 = vset.pattern.permute.xlu0 0
        %3200 = vperm.xlu0 %3199, %v2610
        %v3201 = vpop.permute.xlu0 %3200
        %3204 = vset.pattern.permute.xlu0 0
        %3205 = vperm.xlu0 %3204, %v2611
        %v3206 = vpop.permute.xlu0 %3205
        %3209 = vset.pattern.permute.xlu0 0
        %3210 = vperm.xlu0 %3209, %v2612
        %v3211 = vpop.permute.xlu0 %3210
        %3214 = vset.pattern.permute.xlu0 0
        %3215 = vperm.xlu0 %3214, %v2613
        %v3216 = vpop.permute.xlu0 %3215
        %3219 = vset.pattern.permute.xlu0 0
        %3220 = vperm.xlu0 %3219, %v2614
        %v3221 = vpop.permute.xlu0 %3220
        %3224 = vset.pattern.permute.xlu0 0
        %3225 = vperm.xlu0 %3224, %v2615
        %v3226 = vpop.permute.xlu0 %3225
        %3229 = vset.pattern.permute.xlu0 0
        %3230 = vperm.xlu0 %3229, %v2616
        %v3231 = vpop.permute.xlu0 %3230
        %3234 = vset.pattern.permute.xlu0 0
        %3235 = vperm.xlu0 %3234, %v2617
        %v3236 = vpop.permute.xlu0 %3235
        %3239 = vset.pattern.permute.xlu0 0
        %3240 = vperm.xlu0 %3239, %v2618
        %v3241 = vpop.permute.xlu0 %3240
        %3244 = vset.pattern.permute.xlu0 0
        %3245 = vperm.xlu0 %3244, %v2619
        %v3246 = vpop.permute.xlu0 %3245
        %3249 = vset.pattern.permute.xlu0 0
        %3250 = vperm.xlu0 %3249, %v2620
        %v3251 = vpop.permute.xlu0 %3250
        %3254 = vset.pattern.permute.xlu0 0
        %3255 = vperm.xlu0 %3254, %v2621
        %v3256 = vpop.permute.xlu0 %3255
        %3259 = vset.pattern.permute.xlu0 0
        %3260 = vperm.xlu0 %3259, %v2622
        %v3261 = vpop.permute.xlu0 %3260
        %3264 = vset.pattern.permute.xlu0 0
        %3265 = vperm.xlu0 %3264, %v2623
        %v3266 = vpop.permute.xlu0 %3265
        %3269 = vset.pattern.permute.xlu0 0
        %3270 = vperm.xlu0 %3269, %v2624
        %v3271 = vpop.permute.xlu0 %3270
        %3274 = vset.pattern.permute.xlu0 0
        %3275 = vperm.xlu0 %3274, %v2625
        %v3276 = vpop.permute.xlu0 %3275
        %3279 = vset.pattern.permute.xlu0 0
        %3280 = vperm.xlu0 %3279, %v2626
        %v3281 = vpop.permute.xlu0 %3280
        %3284 = vset.pattern.permute.xlu0 0
        %3285 = vperm.xlu0 %3284, %v2627
        %v3286 = vpop.permute.xlu0 %3285
        %3289 = vset.pattern.permute.xlu0 0
        %3290 = vperm.xlu0 %3289, %v2628
        %v3291 = vpop.permute.xlu0 %3290
        %3294 = vset.pattern.permute.xlu0 0
        %3295 = vperm.xlu0 %3294, %v2629
        %v3296 = vpop.permute.xlu0 %3295
        %3299 = vset.pattern.permute.xlu0 0
        %3300 = vperm.xlu0 %3299, %v2630
        %v3301 = vpop.permute.xlu0 %3300
        %3304 = vset.pattern.permute.xlu0 0
        %3305 = vperm.xlu0 %3304, %v2631
        %v3306 = vpop.permute.xlu0 %3305
        %3309 = vset.pattern.permute.xlu0 0
        %3310 = vperm.xlu0 %3309, %v2632
        %v3311 = vpop.permute.xlu0 %3310
        %3314 = vset.pattern.permute.xlu0 0
        %3315 = vperm.xlu0 %3314, %v2633
        %v3316 = vpop.permute.xlu0 %3315
        %3319 = vset.pattern.permute.xlu0 0
        %3320 = vperm.xlu0 %3319, %v2634
        %v3321 = vpop.permute.xlu0 %3320
        %3324 = vset.pattern.permute.xlu0 0
        %3325 = vperm.xlu0 %3324, %v2635
        %v3326 = vpop.permute.xlu0 %3325
        %3329 = vset.pattern.permute.xlu0 0
        %3330 = vperm.xlu0 %3329, %v2636
        %v3331 = vpop.permute.xlu0 %3330
        %3334 = vset.pattern.permute.xlu0 0
        %3335 = vperm.xlu0 %3334, %v2637
        %v3336 = vpop.permute.xlu0 %3335
        %3339 = vset.pattern.permute.xlu0 0
        %3340 = vperm.xlu0 %3339, %v2638
        %v3341 = vpop.permute.xlu0 %3340
        %3344 = vset.pattern.permute.xlu0 0
        %3345 = vperm.xlu0 %3344, %v2639
        %v3346 = vpop.permute.xlu0 %3345
        %3349 = vset.pattern.permute.xlu0 0
        %3350 = vperm.xlu0 %3349, %v2640
        %v3351 = vpop.permute.xlu0 %3350
        %3354 = vset.pattern.permute.xlu0 0
        %3355 = vperm.xlu0 %3354, %v2641
        %v3356 = vpop.permute.xlu0 %3355
        %3359 = vset.pattern.permute.xlu0 0
        %3360 = vperm.xlu0 %3359, %v2642
        %v3361 = vpop.permute.xlu0 %3360
        %v3363 = vmul.f32 %v3166, %v3123
        %v3364 = vmul.f32 %v3171, %v3124
        %v3365 = vmul.f32 %v3176, %v3125
        %v3366 = vmul.f32 %v3181, %v3126
        %v3367 = vmul.f32 %v3186, %v3127
        %v3368 = vmul.f32 %v3191, %v3128
        %v3369 = vmul.f32 %v3196, %v3129
        %v3370 = vmul.f32 %v3201, %v3130
        %v3371 = vmul.f32 %v3206, %v3131
        %v3372 = vmul.f32 %v3211, %v3132
        %v3373 = vmul.f32 %v3216, %v3133
        %v3374 = vmul.f32 %v3221, %v3134
        %v3375 = vmul.f32 %v3226, %v3135
        %v3376 = vmul.f32 %v3231, %v3136
        %v3377 = vmul.f32 %v3236, %v3137
        %v3378 = vmul.f32 %v3241, %v3138
        %v3379 = vmul.f32 %v3246, %v3139
        %v3380 = vmul.f32 %v3251, %v3140
        %v3381 = vmul.f32 %v3256, %v3141
        %v3382 = vmul.f32 %v3261, %v3142
        %v3383 = vmul.f32 %v3266, %v3143
        %v3384 = vmul.f32 %v3271, %v3144
        %v3385 = vmul.f32 %v3276, %v3145
        %v3386 = vmul.f32 %v3281, %v3146
        %v3387 = vmul.f32 %v3286, %v3147
        %v3388 = vmul.f32 %v3291, %v3148
        %v3389 = vmul.f32 %v3296, %v3149
        %v3390 = vmul.f32 %v3301, %v3150
        %v3391 = vmul.f32 %v3306, %v3151
        %v3392 = vmul.f32 %v3311, %v3152
        %v3393 = vmul.f32 %v3316, %v3153
        %v3394 = vmul.f32 %v3321, %v3154
        %v3395 = vmul.f32 %v3326, %v3155
        %v3396 = vmul.f32 %v3331, %v3156
        %v3397 = vmul.f32 %v3336, %v3157
        %v3398 = vmul.f32 %v3341, %v3158
        %v3399 = vmul.f32 %v3346, %v3159
        %v3400 = vmul.f32 %v3351, %v3160
        %v3401 = vmul.f32 %v3356, %v3161
        %v3402 = vmul.f32 %v3361, %v3162
        %v3403 = vadd.f32 %v3363, %v3364
        %v3404 = vadd.f32 %v3403, %v3365
        %v3405 = vadd.f32 %v3404, %v3366
        %v3406 = vrot.slane %v3405, 4
        %v3407 = vadd.f32 %v3405, %v3406
        %v3408 = vrot.slane %v3407, 2
        %v3409 = vadd.f32 %v3407, %v3408
        %v3410 = vrot.slane %v3409, 1
        %v3411 = vadd.f32 %v3409, %v3410
        %v3412 = vadd.f32 %v3367, %v3368
        %v3413 = vadd.f32 %v3412, %v3369
        %v3414 = vadd.f32 %v3413, %v3370
        %v3415 = vrot.slane %v3414, 4
        %v3416 = vadd.f32 %v3414, %v3415
        %v3417 = vrot.slane %v3416, 2
        %v3418 = vadd.f32 %v3416, %v3417
        %v3419 = vrot.slane %v3418, 1
        %v3420 = vadd.f32 %v3418, %v3419
        %v3421 = vadd.f32 %v3371, %v3372
        %v3422 = vadd.f32 %v3421, %v3373
        %v3423 = vadd.f32 %v3422, %v3374
        %v3424 = vrot.slane %v3423, 4
        %v3425 = vadd.f32 %v3423, %v3424
        %v3426 = vrot.slane %v3425, 2
        %v3427 = vadd.f32 %v3425, %v3426
        %v3428 = vrot.slane %v3427, 1
        %v3429 = vadd.f32 %v3427, %v3428
        %v3430 = vadd.f32 %v3375, %v3376
        %v3431 = vadd.f32 %v3430, %v3377
        %v3432 = vadd.f32 %v3431, %v3378
        %v3433 = vrot.slane %v3432, 4
        %v3434 = vadd.f32 %v3432, %v3433
        %v3435 = vrot.slane %v3434, 2
        %v3436 = vadd.f32 %v3434, %v3435
        %v3437 = vrot.slane %v3436, 1
        %v3438 = vadd.f32 %v3436, %v3437
        %v3439 = vadd.f32 %v3379, %v3380
        %v3440 = vadd.f32 %v3439, %v3381
        %v3441 = vadd.f32 %v3440, %v3382
        %v3442 = vrot.slane %v3441, 4
        %v3443 = vadd.f32 %v3441, %v3442
        %v3444 = vrot.slane %v3443, 2
        %v3445 = vadd.f32 %v3443, %v3444
        %v3446 = vrot.slane %v3445, 1
        %v3447 = vadd.f32 %v3445, %v3446
        %v3448 = vadd.f32 %v3383, %v3384
        %v3449 = vadd.f32 %v3448, %v3385
        %v3450 = vadd.f32 %v3449, %v3386
        %v3451 = vrot.slane %v3450, 4
        %v3452 = vadd.f32 %v3450, %v3451
        %v3453 = vrot.slane %v3452, 2
        %v3454 = vadd.f32 %v3452, %v3453
        %v3455 = vrot.slane %v3454, 1
        %v3456 = vadd.f32 %v3454, %v3455
        %v3457 = vadd.f32 %v3387, %v3388
        %v3458 = vadd.f32 %v3457, %v3389
        %v3459 = vadd.f32 %v3458, %v3390
        %v3460 = vrot.slane %v3459, 4
        %v3461 = vadd.f32 %v3459, %v3460
        %v3462 = vrot.slane %v3461, 2
        %v3463 = vadd.f32 %v3461, %v3462
        %v3464 = vrot.slane %v3463, 1
        %v3465 = vadd.f32 %v3463, %v3464
        %v3466 = vadd.f32 %v3391, %v3392
        %v3467 = vadd.f32 %v3466, %v3393
        %v3468 = vadd.f32 %v3467, %v3394
        %v3469 = vrot.slane %v3468, 4
        %v3470 = vadd.f32 %v3468, %v3469
        %v3471 = vrot.slane %v3470, 2
        %v3472 = vadd.f32 %v3470, %v3471
        %v3473 = vrot.slane %v3472, 1
        %v3474 = vadd.f32 %v3472, %v3473
        %v3475 = vadd.f32 %v3395, %v3396
        %v3476 = vadd.f32 %v3475, %v3397
        %v3477 = vadd.f32 %v3476, %v3398
        %v3478 = vrot.slane %v3477, 4
        %v3479 = vadd.f32 %v3477, %v3478
        %v3480 = vrot.slane %v3479, 2
        %v3481 = vadd.f32 %v3479, %v3480
        %v3482 = vrot.slane %v3481, 1
        %v3483 = vadd.f32 %v3481, %v3482
        %v3484 = vadd.f32 %v3399, %v3400
        %v3485 = vadd.f32 %v3484, %v3401
        %v3486 = vadd.f32 %v3485, %v3402
        %v3487 = vrot.slane %v3486, 4
        %v3488 = vadd.f32 %v3486, %v3487
        %v3489 = vrot.slane %v3488, 2
        %v3490 = vadd.f32 %v3488, %v3489
        %v3491 = vrot.slane %v3490, 1
        %v3492 = vadd.f32 %v3490, %v3491
        %v3503 = vsel %vm1346, %v3420, %v3411
        %v3504 = vsel %vm1348, %v3429, %v3503
        %v3505 = vsel %vm1350, %v3438, %v3504
        %v3506 = vsel %vm1352, %v3447, %v3505
        %v3507 = vsel %vm1354, %v3456, %v3506
        %v3508 = vsel %vm1356, %v3465, %v3507
        %v3509 = vsel %vm1358, %v3474, %v3508
        %v3510 = vsel %vm1346, %v3492, %v3483
        %v3513 = vadd.f32 %v2438, %v3509
        %v3514 = vadd.f32 %v2439, %v3510
        %3515 = vst [vmem:[%s269] sm:$0xff] %v3513
        %3516 = vst [vmem:[%s269 + $0x8] sm:$0x3] %v3514
        %s3517 = sand.u32 %s137, 1
        %s3518 = scalar_lea.sflag [#allocation4], %s3517
        %s3519 = sand.u32 %s137, 1
        %s3520 = smul.addr %s3519, 16
        %s3521 = scalar_lea.vmem [#allocation3], %s3520
        // Predicated region
        $region79: #{tpu_custom_call.1} parent=73 // pred_check
          %p3522 = pneg %p147
        $region80: #{tpu_custom_call.1} parent=73 // pred_check_branch
          %3524 = sbr.rel (%p3522) target = $region82
        $region81: #{tpu_custom_call.1} parent=73 // pred_region
          %s3526 = ssub.s32 256, 256
          %3527 = vsyncadd %s3518, %s3526
          %s3528 = smul.addr %s19, 128
          %s3529 = scalar_lea.hbm %s5, %s3528
          %s3530 = sshll.u32 %s3521, 4
          %s3531 = int_to_ptr.vmem [resolvable:$true] %s3530
          %3536 = dma.vmem_to_hbm [thread:$0]  %s3531, 256, %s3529, %s3518, 128, 256, 8
        $region82: #{tpu_custom_call.1} parent=73 // pred_fallthru
          _
      $region74: #{tpu_custom_call.1} parent=5 // pred_fallthru
        _
      %p3537 = scmp.le.s32.totalorder 2, %s14
      // Predicated region
      $region83: #{tpu_custom_call.1} parent=5 // pred_check
        %p3538 = pneg %p3537
      $region84: #{tpu_custom_call.1} parent=5 // pred_check_branch
        %3540 = sbr.rel (%p3538) target = $region86
      $region85: #{tpu_custom_call.1} parent=5 // pred_region
        %s3541 = ssub.s32 %s14, 2
        // Predicated region
        $region87: #{tpu_custom_call.1} parent=85 // pred_check
          %p3542 = pneg %p153
        $region88: #{tpu_custom_call.1} parent=85 // pred_check_branch
          %3544 = sbr.rel (%p3542) target = $region90
        $region89: #{tpu_custom_call.1} parent=85 // pred_region
          %s3545 = sand.u32 %s138, 1
          %s3546 = scalar_lea.sflag [#allocation4], %s3545
          %s3547 = sand.u32 %s138, 1
          %s3548 = smul.addr %s3547, 16
          %s3549 = scalar_lea.vmem [#allocation3], %s3548
          %3550 = dma.done %s3546, 256
        $region90: #{tpu_custom_call.1} parent=85 // pred_fallthru
          _
      $region86: #{tpu_custom_call.1} parent=5 // pred_fallthru
        _
    $region6: #{tpu_custom_call.1} parent=1 // loop_footer
      %s18 = sadd.s32 1, %s14
    $region7: #{tpu_custom_call.1} parent=1 // loop_footer_branch
      %13 = sbr.rel target = $region3
    $region8: #{tpu_custom_call.1} parent=1 // loop_exit
      _
    %3551 = vsyncpa [#allocation4], 1
    %s3552 = scalar_lea.sflag [#allocation4], 1
    %3553 = vsyncpa %s3552, 1

// kernel: tpu_custom_call.1
$region0: #{tpu_custom_call.1}
  #allocation0 [shape = 'u32[]', space=smem, size = 0x4, offset = 0x4, fixed_abs, tag = 'smem constant byte address 0x4 - core index']
  #allocation1 [shape = 'u32[144,128]{1,0:T(1,128)}', space=vmem, size = 0x12000, scoped, tag = 'internal scratch']
  %s0 = inlined_call_operand.vmem [shape: f32[32,256], index: 0, kind: input, shape index: {}]
  %s1 = inlined_call_operand.vmem [shape: f32[3,10,32,1], index: 1, kind: input, shape index: {}]
  %s2 = inlined_call_operand.vmem [shape: f32[3,10,32,1], index: 2, kind: input, shape index: {}]
  %s3 = inlined_call_operand.vmem [shape: f32[3,10,32,1], index: 3, kind: input, shape index: {}]
  %s4 = inlined_call_operand.vmem [shape: f32[10,1], index: 4, kind: input, shape index: {}]
  %s5 = inlined_call_operand.hbm [shape: f32[10,256], index: 5, kind: output, shape index: {}]
  %s6 = sld [smem:[#allocation0]]
  $region91: #{tpu_custom_call.1} parent=0
    _
  %s8 = ssub.s32 1, %s6
  %s9 = scalar_select 0, %s8, %s6
  $region1: #{tpu_custom_call.1} parent=0
    #allocation2 [shape = 'u8[32768]{0}', space=vmem, size = 0x8000, scoped, tag = 'input window, operand 0']
    #allocation3 [shape = 'u8[16384]{0}', space=vmem, size = 0x4000, scoped, tag = 'output window, operand 0']
    #allocation4 [shape = 's32[2]{0}', space=sflag, size = 0x8, scoped, tag = 'scoped memory for tpu_custom_call.1']
    %10 = vsyncpa [#allocation4], 0
    %s11 = scalar_lea.sflag [#allocation4], 1
    %12 = vsyncpa %s11, 0
    loop: start=0, step=1, limit=4
    $region2: #{tpu_custom_call.1} parent=1 // loop_pre_header
      _
    $region3: #{tpu_custom_call.1} parent=1 // loop_header
      %s14 = sphi 0, %s18
      %p15 = scmp.ge.s32.totalorder %s14, 4
      %s24 = sphi 0, %s26
      %s27 = sphi 0, %s24
      %s28 = sphi 0, %s27
      %s44 = sphi 0, %s28
      %s48 = sphi 0, %s48
      %s50 = sphi 0, %s48
      %s51 = sphi 0, %s50
      %s65 = sphi 0, %s51
      %s69 = sphi 0, %s69
      %s71 = sphi 0, %s69
      %s72 = sphi 0, %s71
      %s86 = sphi 0, %s72
      %s90 = sphi 0, %s90
      %s92 = sphi 0, %s90
      %s93 = sphi 0, %s92
      %s107 = sphi 0, %s93
      %s111 = sphi 0, %s111
      %s113 = sphi 0, %s111
      %s114 = sphi 0, %s113
      %s128 = sphi 0, %s114
      %s134 = sphi 0, %s136
      %s137 = sphi 0, %s134
      %s138 = sphi 0, %s137
      %s154 = sphi 0, %s138
    $region4: #{tpu_custom_call.1} parent=1 // loop_header_branch
      %17 = sbr.rel (%p15) target = $region8
    $region5: #{tpu_custom_call.1} parent=1 // loop_body
      %s19 = ssub.s32 %s14, 1
      %s20 = ssub.s32 %s14, 2
      %s21 = sadd.s32 %s14, 1
      %s22 = ssub.s32 %s14, %s21
      %p23 = scmp.eq.s32.totalorder %s22, 0
      %s25 = sadd.s32 %s24, 1
      %s26 = scalar_select %p23, %s24, %s25
      %p29 = pneg %p23
      %p30 = scmp.eq.s32.totalorder %s14, 1
      %p31 = por %p29, %p30
      %p32 = scmp.ne.s32.totalorder %s24, %s27
      %p33 = scmp.eq.s32.totalorder %s14, 0
      %p34 = por %p32, %p33
      %p35 = scmp.ne.s32.totalorder %s24, %s27
      %p36 = scmp.eq.s32.totalorder %s19, 1
      %p37 = por %p35, %p36
      %p38 = scmp.ne.s32.totalorder %s27, %s28
      %p39 = scmp.eq.s32.totalorder %s19, 0
      %p40 = por %p38, %p39
      %p41 = scmp.ne.s32.totalorder %s27, %s28
      %p42 = scmp.eq.s32.totalorder %s20, 1
      %p43 = por %p41, %p42
      %p45 = scmp.ne.s32.totalorder %s28, %s44
      %p46 = scmp.eq.s32.totalorder %s20, 0
      %p47 = por %p45, %p46
      %s49 = sadd.s32 %s48, 1
      %p52 = scmp.eq.s32.totalorder %s14, 1
      %p53 = scmp.ne.s32.totalorder %s48, %s50
      %p54 = scmp.eq.s32.totalorder %s14, 0
      %p55 = por %p53, %p54
      %p56 = scmp.ne.s32.totalorder %s48, %s50
      %p57 = scmp.eq.s32.totalorder %s19, 1
      %p58 = por %p56, %p57
      %p59 = scmp.ne.s32.totalorder %s50, %s51
      %p60 = scmp.eq.s32.totalorder %s19, 0
      %p61 = por %p59, %p60
      %p62 = scmp.ne.s32.totalorder %s50, %s51
      %p63 = scmp.eq.s32.totalorder %s20, 1
      %p64 = por %p62, %p63
      %p66 = scmp.ne.s32.totalorder %s51, %s65
      %p67 = scmp.eq.s32.totalorder %s20, 0
      %p68 = por %p66, %p67
      %s70 = sadd.s32 %s69, 1
      %p73 = scmp.eq.s32.totalorder %s14, 1
      %p74 = scmp.ne.s32.totalorder %s69, %s71
      %p75 = scmp.eq.s32.totalorder %s14, 0
      %p76 = por %p74, %p75
      %p77 = scmp.ne.s32.totalorder %s69, %s71
      %p78 = scmp.eq.s32.totalorder %s19, 1
      %p79 = por %p77, %p78
      %p80 = scmp.ne.s32.totalorder %s71, %s72
      %p81 = scmp.eq.s32.totalorder %s19, 0
      %p82 = por %p80, %p81
      %p83 = scmp.ne.s32.totalorder %s71, %s72
      %p84 = scmp.eq.s32.totalorder %s20, 1
      %p85 = por %p83, %p84
      %p87 = scmp.ne.s32.totalorder %s72, %s86
      %p88 = scmp.eq.s32.totalorder %s20, 0
      %p89 = por %p87, %p88
      %s91 = sadd.s32 %s90, 1
      %p94 = scmp.eq.s32.totalorder %s14, 1
      %p95 = scmp.ne.s32.totalorder %s90, %s92
      %p96 = scmp.eq.s32.totalorder %s14, 0
      %p97 = por %p95, %p96
      %p98 = scmp.ne.s32.totalorder %s90, %s92
      %p99 = scmp.eq.s32.totalorder %s19, 1
      %p100 = por %p98, %p99
      %p101 = scmp.ne.s32.totalorder %s92, %s93
      %p102 = scmp.eq.s32.totalorder %s19, 0
      %p103 = por %p101, %p102
      %p104 = scmp.ne.s32.totalorder %s92, %s93
      %p105 = scmp.eq.s32.totalorder %s20, 1
      %p106 = por %p104, %p105
      %p108 = scmp.ne.s32.totalorder %s93, %s107
      %p109 = scmp.eq.s32.totalorder %s20, 0
      %p110 = por %p108, %p109
      %s112 = sadd.s32 %s111, 1
      %p115 = scmp.eq.s32.totalorder %s14, 1
      %p116 = scmp.ne.s32.totalorder %s111, %s113
      %p117 = scmp.eq.s32.totalorder %s14, 0
      %p118 = por %p116, %p117
      %p119 = scmp.ne.s32.totalorder %s111, %s113
      %p120 = scmp.eq.s32.totalorder %s19, 1
      %p121 = por %p119, %p120
      %p122 = scmp.ne.s32.totalorder %s113, %s114
      %p123 = scmp.eq.s32.totalorder %s19, 0
      %p124 = por %p122, %p123
      %p125 = scmp.ne.s32.totalorder %s113, %s114
      %p126 = scmp.eq.s32.totalorder %s20, 1
      %p127 = por %p125, %p126
      %p129 = scmp.ne.s32.totalorder %s114, %s128
      %p130 = scmp.eq.s32.totalorder %s20, 0
      %p131 = por %p129, %p130
      %s132 = ssub.s32 %s14, %s21
      %p133 = scmp.eq.s32.totalorder %s132, 0
      %s135 = sadd.s32 %s134, 1
      %s136 = scalar_select %p133, %s134, %s135
      %p139 = pneg %p133
      %p140 = scmp.eq.s32.totalorder %s14, 1
      %p141 = por %p139, %p140
      %p142 = scmp.ne.s32.totalorder %s134, %s137
      %p143 = scmp.eq.s32.totalorder %s14, 0
      %p144 = por %p142, %p143
      %p145 = scmp.ne.s32.totalorder %s134, %s137
      %p146 = scmp.eq.s32.totalorder %s19, 1
      %p147 = por %p145, %p146
      %p148 = scmp.ne.s32.totalorder %s137, %s138
      %p149 = scmp.eq.s32.totalorder %s19, 0
      %p150 = por %p148, %p149
      %p151 = scmp.ne.s32.totalorder %s137, %s138
      %p152 = scmp.eq.s32.totalorder %s20, 1
      %p153 = por %p151, %p152
      %p155 = scmp.ne.s32.totalorder %s138, %s154
      %p156 = scmp.eq.s32.totalorder %s20, 0
      %p157 = por %p155, %p156
      %p158 = scmp.le.s32.totalorder 1, %s14
      %p159 = scmp.lt.s32.totalorder %s14, 3
      %p160 = pnand %p158, %p159
      %p161 = pneg %p160
      // Predicated region
      $region9: #{tpu_custom_call.1} parent=5 // pred_check
        _
      $region10: #{tpu_custom_call.1} parent=5 // pred_check_branch
        %163 = sbr.rel (%p160) target = $region12
      $region11: #{tpu_custom_call.1} parent=5 // pred_region
        %s164 = ssub.s32 %s14, 1
        // Predicated region
        $region13: #{tpu_custom_call.1} parent=11 // pred_check
          %p165 = pneg %p61
        $region14: #{tpu_custom_call.1} parent=11 // pred_check_branch
          %167 = sbr.rel (%p165) target = $region16
        $region15: #{tpu_custom_call.1} parent=11 // pred_region
          _
        $region16: #{tpu_custom_call.1} parent=11 // pred_fallthru
          _
        // Predicated region
        $region17: #{tpu_custom_call.1} parent=11 // pred_check
          %p168 = pneg %p82
        $region18: #{tpu_custom_call.1} parent=11 // pred_check_branch
          %170 = sbr.rel (%p168) target = $region20
        $region19: #{tpu_custom_call.1} parent=11 // pred_region
          _
        $region20: #{tpu_custom_call.1} parent=11 // pred_fallthru
          _
        // Predicated region
        $region21: #{tpu_custom_call.1} parent=11 // pred_check
          %p171 = pneg %p103
        $region22: #{tpu_custom_call.1} parent=11 // pred_check_branch
          %173 = sbr.rel (%p171) target = $region24
        $region23: #{tpu_custom_call.1} parent=11 // pred_region
          _
        $region24: #{tpu_custom_call.1} parent=11 // pred_fallthru
          _
        // Predicated region
        $region25: #{tpu_custom_call.1} parent=11 // pred_check
          %p174 = pneg %p124
        $region26: #{tpu_custom_call.1} parent=11 // pred_check_branch
          %176 = sbr.rel (%p174) target = $region28
        $region27: #{tpu_custom_call.1} parent=11 // pred_region
          _
        $region28: #{tpu_custom_call.1} parent=11 // pred_fallthru
          _
      $region12: #{tpu_custom_call.1} parent=5 // pred_fallthru
        _
      %p177 = scmp.lt.s32.totalorder %s14, 2
      // Predicated region
      $region29: #{tpu_custom_call.1} parent=5 // pred_check
        %p178 = pneg %p177
      $region30: #{tpu_custom_call.1} parent=5 // pred_check_branch
        %180 = sbr.rel (%p178) target = $region32
      $region31: #{tpu_custom_call.1} parent=5 // pred_region
        // Predicated region
        $region33: #{tpu_custom_call.1} parent=31 // pred_check
          %p181 = pneg %p34
        $region34: #{tpu_custom_call.1} parent=31 // pred_check_branch
          %183 = sbr.rel (%p181) target = $region36
        $region35: #{tpu_custom_call.1} parent=31 // pred_region
          %s184 = sand.u32 %s24, 1
          %s185 = sand.u32 %s24, 1
          %s186 = smul.addr %s185, 32
          %s187 = scalar_lea.vmem [#allocation2], %s186
          %s188 = smul.addr %s14, 8
          %s189 = scalar_lea.vmem %s0, %s188
          // Predicated region
          $region37: #{tpu_custom_call.1} parent=35 // pred_check
            _
          $region38: #{tpu_custom_call.1} parent=35 // pred_check_branch
            %191 = sbr.rel (0) target = $region40
          $region39: #{tpu_custom_call.1} parent=35 // pred_region
            // Predicated region
            $region41: #{tpu_custom_call.1} parent=39 // pred_check
              _
            $region42: #{tpu_custom_call.1} parent=39 // pred_check_branch
              %193 = sbr.rel (0) target = $region44
            $region43: #{tpu_custom_call.1} parent=39 // pred_region
              // Predicated region
              $region56: #{tpu_custom_call.1} parent=43 // pred_check
                _
              $region57: #{tpu_custom_call.1} parent=43 // pred_check_branch
                %215 = sbr.rel (0) target = $region59
              $region58: #{tpu_custom_call.1} parent=43 // pred_region
                loop: start=0, step=1, limit=1
                $region60: #{tpu_custom_call.1} parent=58 // loop_pre_header
                  _
                $region61: #{tpu_custom_call.1} parent=58 // loop_header
                  %s217 = sphi 0, %s221
                  %p218 = scmp.ge.s32.totalorder %s217, 1
                  %s222 = sphi %s189, %s189
                  %s223 = sphi %s187, %s187
                $region62: #{tpu_custom_call.1} parent=58 // loop_header_branch
                  %220 = sbr.rel (%p218) target = $region66
                $region63: #{tpu_custom_call.1} parent=58 // loop_body
                  %v224 = vld [vmem:[%s222] sm:$0xff]
                  %225 = vst [vmem:[%s223] sm:$0xff] %v224
                  %v226 = vld [vmem:[%s222 + $0x10] sm:$0xff]
                  %227 = vst [vmem:[%s223 + $0x8] sm:$0xff] %v226
                  %v228 = vld [vmem:[%s222 + $0x20] sm:$0xff]
                  %229 = vst [vmem:[%s223 + $0x10] sm:$0xff] %v228
                  %v230 = vld [vmem:[%s222 + $0x30] sm:$0xff]
                  %231 = vst [vmem:[%s223 + $0x18] sm:$0xff] %v230
                $region64: #{tpu_custom_call.1} parent=58 // loop_footer
                  %s221 = sadd.s32 1, %s217
                $region65: #{tpu_custom_call.1} parent=58 // loop_footer_branch
                  %216 = sbr.rel target = $region61
                $region66: #{tpu_custom_call.1} parent=58 // loop_exit
                  _
              $region59: #{tpu_custom_call.1} parent=43 // pred_fallthru
                _
              // Predicated region
              $region67: #{tpu_custom_call.1} parent=43 // pred_check
                _
              $region68: #{tpu_custom_call.1} parent=43 // pred_check_branch
                %233 = sbr.rel target = $region70
              $region69: #{tpu_custom_call.1} parent=43 // pred_region
                _
              $region70: #{tpu_custom_call.1} parent=43 // pred_fallthru
                _
            $region44: #{tpu_custom_call.1} parent=39 // pred_fallthru
              _
            // Predicated region
            $region45: #{tpu_custom_call.1} parent=39 // pred_check
              _
            $region46: #{tpu_custom_call.1} parent=39 // pred_check_branch
              %195 = sbr.rel target = $region48
            $region47: #{tpu_custom_call.1} parent=39 // pred_region
              %s197 = ssub.s32 256, 1
              loop: start=0, step=1, limit=1
              $region49: #{tpu_custom_call.1} parent=47 // loop_pre_header
                _
              $region50: #{tpu_custom_call.1} parent=47 // loop_header
                %s199 = sphi 0, %s203
                %p200 = scmp.ge.s32.totalorder %s199, 1
                %s204 = sphi %s189, %s189
                %s205 = sphi %s187, %s187
              $region51: #{tpu_custom_call.1} parent=47 // loop_header_branch
                %202 = sbr.rel (%p200) target = $region55
              $region52: #{tpu_custom_call.1} parent=47 // loop_body
                %v206 = vld [vmem:[%s204] sm:%s197]
                %207 = vst [vmem:[%s205] sm:%s197] %v206
                %v208 = vld [vmem:[%s204 + $0x10] sm:%s197]
                %209 = vst [vmem:[%s205 + $0x8] sm:%s197] %v208
                %v210 = vld [vmem:[%s204 + $0x20] sm:%s197]
                %211 = vst [vmem:[%s205 + $0x10] sm:%s197] %v210
                %v212 = vld [vmem:[%s204 + $0x30] sm:%s197]
                %213 = vst [vmem:[%s205 + $0x18] sm:%s197] %v212
              $region53: #{tpu_custom_call.1} parent=47 // loop_footer
                %s203 = sadd.s32 1, %s199
              $region54: #{tpu_custom_call.1} parent=47 // loop_footer_branch
                %198 = sbr.rel target = $region50
              $region55: #{tpu_custom_call.1} parent=47 // loop_exit
                _
            $region48: #{tpu_custom_call.1} parent=39 // pred_fallthru
              _
          $region40: #{tpu_custom_call.1} parent=35 // pred_fallthru
            _
          %234 = vnop
        $region36: #{tpu_custom_call.1} parent=31 // pred_fallthru
          _
      $region32: #{tpu_custom_call.1} parent=5 // pred_fallthru
        _
      %p235 = scmp.le.s32.totalorder 1, %s14
      %p236 = scmp.lt.s32.totalorder %s14, 3
      %p237 = pnand %p235, %p236
      %p238 = pneg %p237
      // Predicated region
      $region71: #{tpu_custom_call.1} parent=5 // pred_check
        _
      $region72: #{tpu_custom_call.1} parent=5 // pred_check_branch
        %240 = sbr.rel (%p237) target = $region74
      $region73: #{tpu_custom_call.1} parent=5 // pred_region
        %s241 = ssub.s32 %s14, 1
        %s242 = sand.u32 %s27, 1
        %s243 = sand.u32 %s27, 1
        %s244 = smul.addr %s243, 32
        %s245 = scalar_lea.vmem [#allocation2], %s244
        // Predicated region
        $region75: #{tpu_custom_call.1} parent=73 // pred_check
          %p246 = pneg %p40
        $region76: #{tpu_custom_call.1} parent=73 // pred_check_branch
          %248 = sbr.rel (%p246) target = $region78
        $region77: #{tpu_custom_call.1} parent=73 // pred_region
          _
        $region78: #{tpu_custom_call.1} parent=73 // pred_fallthru
          _
        %s249 = sand.u32 %s27, 1
        %s250 = sand.u32 %s27, 1
        %s251 = smul.addr %s250, 32
        %s252 = scalar_lea.vmem [#allocation2], %s251
        %p253 = pneg %p40
        %p254 = pneg %p37
        %p255 = pneg %p61
        %p256 = pneg %p58
        %p257 = pneg %p82
        %p258 = pneg %p79
        %p259 = pneg %p103
        %p260 = pneg %p100
        %p261 = pneg %p124
        %p262 = pneg %p121
        %p263 = pneg %p150
        %p264 = pneg %p147
        %s265 = sand.u32 %s137, 1
        %s266 = scalar_lea.sflag [#allocation4], %s265
        %s267 = sand.u32 %s137, 1
        %s268 = smul.addr %s267, 16
        %s269 = scalar_lea.vmem [#allocation3], %s268
        %v270 = vld [vmem:[%s245] sm:$0xff]
        %v271 = vld [vmem:[%s245 + $0x8] sm:$0xff]
        %v272 = vld [vmem:[%s245 + $0x10] sm:$0xff]
        %v273 = vld [vmem:[%s245 + $0x18] sm:$0xff]
        %v274 = vld [vmem:[%s4] sm:$0xff]
        %v275 = vld [vmem:[%s4 + $0x8] sm:$0x3]
        %277 = vset.pattern.permute.xlu0 0
        %278 = vperm.xlu0 %277, %v274
        %v279 = vpop.permute.xlu0 %278
        %282 = vset.pattern.permute.xlu0 0
        %283 = vperm.xlu0 %282, %v275
        %v284 = vpop.permute.xlu0 %283
        %v286 = vld [vmem:[%s1] sm:$0xff]
        %v287 = vld [vmem:[%s1 + $0x8] sm:$0xff]
        %v288 = vld [vmem:[%s1 + $0x10] sm:$0xff]
        %v289 = vld [vmem:[%s1 + $0x18] sm:$0xff]
        %v290 = vld [vmem:[%s1 + $0x20] sm:$0xff]
        %v291 = vld [vmem:[%s1 + $0x28] sm:$0xff]
        %v292 = vld [vmem:[%s1 + $0x30] sm:$0xff]
        %v293 = vld [vmem:[%s1 + $0x38] sm:$0xff]
        %v294 = vld [vmem:[%s1 + $0x40] sm:$0xff]
        %v295 = vld [vmem:[%s1 + $0x48] sm:$0xff]
        %v296 = vld [vmem:[%s1 + $0x50] sm:$0xff]
        %v297 = vld [vmem:[%s1 + $0x58] sm:$0xff]
        %v298 = vld [vmem:[%s1 + $0x60] sm:$0xff]
        %v299 = vld [vmem:[%s1 + $0x68] sm:$0xff]
        %v300 = vld [vmem:[%s1 + $0x70] sm:$0xff]
        %v301 = vld [vmem:[%s1 + $0x78] sm:$0xff]
        %v302 = vld [vmem:[%s1 + $0x80] sm:$0xff]
        %v303 = vld [vmem:[%s1 + $0x88] sm:$0xff]
        %v304 = vld [vmem:[%s1 + $0x90] sm:$0xff]
        %v305 = vld [vmem:[%s1 + $0x98] sm:$0xff]
        %v306 = vld [vmem:[%s1 + $0xa0] sm:$0xff]
        %v307 = vld [vmem:[%s1 + $0xa8] sm:$0xff]
        %v308 = vld [vmem:[%s1 + $0xb0] sm:$0xff]
        %v309 = vld [vmem:[%s1 + $0xb8] sm:$0xff]
        %v310 = vld [vmem:[%s1 + $0xc0] sm:$0xff]
        %v311 = vld [vmem:[%s1 + $0xc8] sm:$0xff]
        %v312 = vld [vmem:[%s1 + $0xd0] sm:$0xff]
        %v313 = vld [vmem:[%s1 + $0xd8] sm:$0xff]
        %v314 = vld [vmem:[%s1 + $0xe0] sm:$0xff]
        %v315 = vld [vmem:[%s1 + $0xe8] sm:$0xff]
        %v316 = vld [vmem:[%s1 + $0xf0] sm:$0xff]
        %v317 = vld [vmem:[%s1 + $0xf8] sm:$0xff]
        %v318 = vld [vmem:[%s1 + $0x100] sm:$0xff]
        %v319 = vld [vmem:[%s1 + $0x108] sm:$0xff]
        %v320 = vld [vmem:[%s1 + $0x110] sm:$0xff]
        %v321 = vld [vmem:[%s1 + $0x118] sm:$0xff]
        %v322 = vld [vmem:[%s1 + $0x120] sm:$0xff]
        %v323 = vld [vmem:[%s1 + $0x128] sm:$0xff]
        %v324 = vld [vmem:[%s1 + $0x130] sm:$0xff]
        %v325 = vld [vmem:[%s1 + $0x138] sm:$0xff]
        %v326 = vld [vmem:[%s2] sm:$0xff]
        %v327 = vld [vmem:[%s2 + $0x8] sm:$0xff]
        %v328 = vld [vmem:[%s2 + $0x10] sm:$0xff]
        %v329 = vld [vmem:[%s2 + $0x18] sm:$0xff]
        %v330 = vld [vmem:[%s2 + $0x20] sm:$0xff]
        %v331 = vld [vmem:[%s2 + $0x28] sm:$0xff]
        %v332 = vld [vmem:[%s2 + $0x30] sm:$0xff]
        %v333 = vld [vmem:[%s2 + $0x38] sm:$0xff]
        %v334 = vld [vmem:[%s2 + $0x40] sm:$0xff]
        %v335 = vld [vmem:[%s2 + $0x48] sm:$0xff]
        %v336 = vld [vmem:[%s2 + $0x50] sm:$0xff]
        %v337 = vld [vmem:[%s2 + $0x58] sm:$0xff]
        %v338 = vld [vmem:[%s2 + $0x60] sm:$0xff]
        %v339 = vld [vmem:[%s2 + $0x68] sm:$0xff]
        %v340 = vld [vmem:[%s2 + $0x70] sm:$0xff]
        %v341 = vld [vmem:[%s2 + $0x78] sm:$0xff]
        %v342 = vld [vmem:[%s2 + $0x80] sm:$0xff]
        %v343 = vld [vmem:[%s2 + $0x88] sm:$0xff]
        %v344 = vld [vmem:[%s2 + $0x90] sm:$0xff]
        %v345 = vld [vmem:[%s2 + $0x98] sm:$0xff]
        %v346 = vld [vmem:[%s2 + $0xa0] sm:$0xff]
        %v347 = vld [vmem:[%s2 + $0xa8] sm:$0xff]
        %v348 = vld [vmem:[%s2 + $0xb0] sm:$0xff]
        %v349 = vld [vmem:[%s2 + $0xb8] sm:$0xff]
        %v350 = vld [vmem:[%s2 + $0xc0] sm:$0xff]
        %v351 = vld [vmem:[%s2 + $0xc8] sm:$0xff]
        %v352 = vld [vmem:[%s2 + $0xd0] sm:$0xff]
        %v353 = vld [vmem:[%s2 + $0xd8] sm:$0xff]
        %v354 = vld [vmem:[%s2 + $0xe0] sm:$0xff]
        %v355 = vld [vmem:[%s2 + $0xe8] sm:$0xff]
        %v356 = vld [vmem:[%s2 + $0xf0] sm:$0xff]
        %v357 = vld [vmem:[%s2 + $0xf8] sm:$0xff]
        %v358 = vld [vmem:[%s2 + $0x100] sm:$0xff]
        %v359 = vld [vmem:[%s2 + $0x108] sm:$0xff]
        %v360 = vld [vmem:[%s2 + $0x110] sm:$0xff]
        %v361 = vld [vmem:[%s2 + $0x118] sm:$0xff]
        %v362 = vld [vmem:[%s2 + $0x120] sm:$0xff]
        %v363 = vld [vmem:[%s2 + $0x128] sm:$0xff]
        %v364 = vld [vmem:[%s2 + $0x130] sm:$0xff]
        %v365 = vld [vmem:[%s2 + $0x138] sm:$0xff]
        %v366 = vld [vmem:[%s3] sm:$0xff]
        %v367 = vld [vmem:[%s3 + $0x8] sm:$0xff]
        %v368 = vld [vmem:[%s3 + $0x10] sm:$0xff]
        %v369 = vld [vmem:[%s3 + $0x18] sm:$0xff]
        %v370 = vld [vmem:[%s3 + $0x20] sm:$0xff]
        %v371 = vld [vmem:[%s3 + $0x28] sm:$0xff]
        %v372 = vld [vmem:[%s3 + $0x30] sm:$0xff]
        %v373 = vld [vmem:[%s3 + $0x38] sm:$0xff]
        %v374 = vld [vmem:[%s3 + $0x40] sm:$0xff]
        %v375 = vld [vmem:[%s3 + $0x48] sm:$0xff]
        %v376 = vld [vmem:[%s3 + $0x50] sm:$0xff]
        %v377 = vld [vmem:[%s3 + $0x58] sm:$0xff]
        %v378 = vld [vmem:[%s3 + $0x60] sm:$0xff]
        %v379 = vld [vmem:[%s3 + $0x68] sm:$0xff]
        %v380 = vld [vmem:[%s3 + $0x70] sm:$0xff]
        %v381 = vld [vmem:[%s3 + $0x78] sm:$0xff]
        %v382 = vld [vmem:[%s3 + $0x80] sm:$0xff]
        %v383 = vld [vmem:[%s3 + $0x88] sm:$0xff]
        %v384 = vld [vmem:[%s3 + $0x90] sm:$0xff]
        %v385 = vld [vmem:[%s3 + $0x98] sm:$0xff]
        %v386 = vld [vmem:[%s3 + $0xa0] sm:$0xff]
        %v387 = vld [vmem:[%s3 + $0xa8] sm:$0xff]
        %v388 = vld [vmem:[%s3 + $0xb0] sm:$0xff]
        %v389 = vld [vmem:[%s3 + $0xb8] sm:$0xff]
        %v390 = vld [vmem:[%s3 + $0xc0] sm:$0xff]
        %v391 = vld [vmem:[%s3 + $0xc8] sm:$0xff]
        %v392 = vld [vmem:[%s3 + $0xd0] sm:$0xff]
        %v393 = vld [vmem:[%s3 + $0xd8] sm:$0xff]
        %v394 = vld [vmem:[%s3 + $0xe0] sm:$0xff]
        %v395 = vld [vmem:[%s3 + $0xe8] sm:$0xff]
        %v396 = vld [vmem:[%s3 + $0xf0] sm:$0xff]
        %v397 = vld [vmem:[%s3 + $0xf8] sm:$0xff]
        %v398 = vld [vmem:[%s3 + $0x100] sm:$0xff]
        %v399 = vld [vmem:[%s3 + $0x108] sm:$0xff]
        %v400 = vld [vmem:[%s3 + $0x110] sm:$0xff]
        %v401 = vld [vmem:[%s3 + $0x118] sm:$0xff]
        %v402 = vld [vmem:[%s3 + $0x120] sm:$0xff]
        %v403 = vld [vmem:[%s3 + $0x128] sm:$0xff]
        %v404 = vld [vmem:[%s3 + $0x130] sm:$0xff]
        %v405 = vld [vmem:[%s3 + $0x138] sm:$0xff]
        %v406 = vmul.f32 %v286, %v326
        %v407 = vmul.f32 %v287, %v327
        %v408 = vmul.f32 %v288, %v328
        %v409 = vmul.f32 %v289, %v329
        %v410 = vmul.f32 %v290, %v330
        %v411 = vmul.f32 %v291, %v331
        %v412 = vmul.f32 %v292, %v332
        %v413 = vmul.f32 %v293, %v333
        %v414 = vmul.f32 %v294, %v334
        %v415 = vmul.f32 %v295, %v335
        %v416 = vmul.f32 %v296, %v336
        %v417 = vmul.f32 %v297, %v337
        %v418 = vmul.f32 %v298, %v338
        %v419 = vmul.f32 %v299, %v339
        %v420 = vmul.f32 %v300, %v340
        %v421 = vmul.f32 %v301, %v341
        %v422 = vmul.f32 %v302, %v342
        %v423 = vmul.f32 %v303, %v343
        %v424 = vmul.f32 %v304, %v344
        %v425 = vmul.f32 %v305, %v345
        %v426 = vmul.f32 %v306, %v346
        %v427 = vmul.f32 %v307, %v347
        %v428 = vmul.f32 %v308, %v348
        %v429 = vmul.f32 %v309, %v349
        %v430 = vmul.f32 %v310, %v350
        %v431 = vmul.f32 %v311, %v351
        %v432 = vmul.f32 %v312, %v352
        %v433 = vmul.f32 %v313, %v353
        %v434 = vmul.f32 %v314, %v354
        %v435 = vmul.f32 %v315, %v355
        %v436 = vmul.f32 %v316, %v356
        %v437 = vmul.f32 %v317, %v357
        %v438 = vmul.f32 %v318, %v358
        %v439 = vmul.f32 %v319, %v359
        %v440 = vmul.f32 %v320, %v360
        %v441 = vmul.f32 %v321, %v361
        %v442 = vmul.f32 %v322, %v362
        %v443 = vmul.f32 %v323, %v363
        %v444 = vmul.f32 %v324, %v364
        %v445 = vmul.f32 %v325, %v365
        %v446 = vmul.f32 %v366, %v366
        %v447 = vmul.f32 %v367, %v367
        %v448 = vmul.f32 %v368, %v368
        %v449 = vmul.f32 %v369, %v369
        %v450 = vmul.f32 %v370, %v370
        %v451 = vmul.f32 %v371, %v371
        %v452 = vmul.f32 %v372, %v372
        %v453 = vmul.f32 %v373, %v373
        %v454 = vmul.f32 %v374, %v374
        %v455 = vmul.f32 %v375, %v375
        %v456 = vmul.f32 %v376, %v376
        %v457 = vmul.f32 %v377, %v377
        %v458 = vmul.f32 %v378, %v378
        %v459 = vmul.f32 %v379, %v379
        %v460 = vmul.f32 %v380, %v380
        %v461 = vmul.f32 %v381, %v381
        %v462 = vmul.f32 %v382, %v382
        %v463 = vmul.f32 %v383, %v383
        %v464 = vmul.f32 %v384, %v384
        %v465 = vmul.f32 %v385, %v385
        %v466 = vmul.f32 %v386, %v386
        %v467 = vmul.f32 %v387, %v387
        %v468 = vmul.f32 %v388, %v388
        %v469 = vmul.f32 %v389, %v389
        %v470 = vmul.f32 %v390, %v390
        %v471 = vmul.f32 %v391, %v391
        %v472 = vmul.f32 %v392, %v392
        %v473 = vmul.f32 %v393, %v393
        %v474 = vmul.f32 %v394, %v394
        %v475 = vmul.f32 %v395, %v395
        %v476 = vmul.f32 %v396, %v396
        %v477 = vmul.f32 %v397, %v397
        %v478 = vmul.f32 %v398, %v398
        %v479 = vmul.f32 %v399, %v399
        %v480 = vmul.f32 %v400, %v400
        %v481 = vmul.f32 %v401, %v401
        %v482 = vmul.f32 %v402, %v402
        %v483 = vmul.f32 %v403, %v403
        %v484 = vmul.f32 %v404, %v404
        %v485 = vmul.f32 %v405, %v405
        %487 = vset.pattern.permute.xlu0 0
        %488 = vperm.xlu0 %487, %v286
        %v489 = vpop.permute.xlu0 %488
        %492 = vset.pattern.permute.xlu0 0
        %493 = vperm.xlu0 %492, %v287
        %v494 = vpop.permute.xlu0 %493
        %497 = vset.pattern.permute.xlu0 0
        %498 = vperm.xlu0 %497, %v288
        %v499 = vpop.permute.xlu0 %498
        %502 = vset.pattern.permute.xlu0 0
        %503 = vperm.xlu0 %502, %v289
        %v504 = vpop.permute.xlu0 %503
        %507 = vset.pattern.permute.xlu0 0
        %508 = vperm.xlu0 %507, %v290
        %v509 = vpop.permute.xlu0 %508
        %512 = vset.pattern.permute.xlu0 0
        %513 = vperm.xlu0 %512, %v291
        %v514 = vpop.permute.xlu0 %513
        %517 = vset.pattern.permute.xlu0 0
        %518 = vperm.xlu0 %517, %v292
        %v519 = vpop.permute.xlu0 %518
        %522 = vset.pattern.permute.xlu0 0
        %523 = vperm.xlu0 %522, %v293
        %v524 = vpop.permute.xlu0 %523
        %527 = vset.pattern.permute.xlu0 0
        %528 = vperm.xlu0 %527, %v294
        %v529 = vpop.permute.xlu0 %528
        %532 = vset.pattern.permute.xlu0 0
        %533 = vperm.xlu0 %532, %v295
        %v534 = vpop.permute.xlu0 %533
        %537 = vset.pattern.permute.xlu0 0
        %538 = vperm.xlu0 %537, %v296
        %v539 = vpop.permute.xlu0 %538
        %542 = vset.pattern.permute.xlu0 0
        %543 = vperm.xlu0 %542, %v297
        %v544 = vpop.permute.xlu0 %543
        %547 = vset.pattern.permute.xlu0 0
        %548 = vperm.xlu0 %547, %v298
        %v549 = vpop.permute.xlu0 %548
        %552 = vset.pattern.permute.xlu0 0
        %553 = vperm.xlu0 %552, %v299
        %v554 = vpop.permute.xlu0 %553
        %557 = vset.pattern.permute.xlu0 0
        %558 = vperm.xlu0 %557, %v300
        %v559 = vpop.permute.xlu0 %558
        %562 = vset.pattern.permute.xlu0 0
        %563 = vperm.xlu0 %562, %v301
        %v564 = vpop.permute.xlu0 %563
        %567 = vset.pattern.permute.xlu0 0
        %568 = vperm.xlu0 %567, %v302
        %v569 = vpop.permute.xlu0 %568
        %572 = vset.pattern.permute.xlu0 0
        %573 = vperm.xlu0 %572, %v303
        %v574 = vpop.permute.xlu0 %573
        %577 = vset.pattern.permute.xlu0 0
        %578 = vperm.xlu0 %577, %v304
        %v579 = vpop.permute.xlu0 %578
        %582 = vset.pattern.permute.xlu0 0
        %583 = vperm.xlu0 %582, %v305
        %v584 = vpop.permute.xlu0 %583
        %587 = vset.pattern.permute.xlu0 0
        %588 = vperm.xlu0 %587, %v306
        %v589 = vpop.permute.xlu0 %588
        %592 = vset.pattern.permute.xlu0 0
        %593 = vperm.xlu0 %592, %v307
        %v594 = vpop.permute.xlu0 %593
        %597 = vset.pattern.permute.xlu0 0
        %598 = vperm.xlu0 %597, %v308
        %v599 = vpop.permute.xlu0 %598
        %602 = vset.pattern.permute.xlu0 0
        %603 = vperm.xlu0 %602, %v309
        %v604 = vpop.permute.xlu0 %603
        %607 = vset.pattern.permute.xlu0 0
        %608 = vperm.xlu0 %607, %v310
        %v609 = vpop.permute.xlu0 %608
        %612 = vset.pattern.permute.xlu0 0
        %613 = vperm.xlu0 %612, %v311
        %v614 = vpop.permute.xlu0 %613
        %617 = vset.pattern.permute.xlu0 0
        %618 = vperm.xlu0 %617, %v312
        %v619 = vpop.permute.xlu0 %618
        %622 = vset.pattern.permute.xlu0 0
        %623 = vperm.xlu0 %622, %v313
        %v624 = vpop.permute.xlu0 %623
        %627 = vset.pattern.permute.xlu0 0
        %628 = vperm.xlu0 %627, %v314
        %v629 = vpop.permute.xlu0 %628
        %632 = vset.pattern.permute.xlu0 0
        %633 = vperm.xlu0 %632, %v315
        %v634 = vpop.permute.xlu0 %633
        %637 = vset.pattern.permute.xlu0 0
        %638 = vperm.xlu0 %637, %v316
        %v639 = vpop.permute.xlu0 %638
        %642 = vset.pattern.permute.xlu0 0
        %643 = vperm.xlu0 %642, %v317
        %v644 = vpop.permute.xlu0 %643
        %647 = vset.pattern.permute.xlu0 0
        %648 = vperm.xlu0 %647, %v318
        %v649 = vpop.permute.xlu0 %648
        %652 = vset.pattern.permute.xlu0 0
        %653 = vperm.xlu0 %652, %v319
        %v654 = vpop.permute.xlu0 %653
        %657 = vset.pattern.permute.xlu0 0
        %658 = vperm.xlu0 %657, %v320
        %v659 = vpop.permute.xlu0 %658
        %662 = vset.pattern.permute.xlu0 0
        %663 = vperm.xlu0 %662, %v321
        %v664 = vpop.permute.xlu0 %663
        %667 = vset.pattern.permute.xlu0 0
        %668 = vperm.xlu0 %667, %v322
        %v669 = vpop.permute.xlu0 %668
        %672 = vset.pattern.permute.xlu0 0
        %673 = vperm.xlu0 %672, %v323
        %v674 = vpop.permute.xlu0 %673
        %677 = vset.pattern.permute.xlu0 0
        %678 = vperm.xlu0 %677, %v324
        %v679 = vpop.permute.xlu0 %678
        %682 = vset.pattern.permute.xlu0 0
        %683 = vperm.xlu0 %682, %v325
        %v684 = vpop.permute.xlu0 %683
        %v686 = vmul.f32 %v489, %v270
        %v687 = vmul.f32 %v494, %v271
        %v688 = vmul.f32 %v499, %v272
        %v689 = vmul.f32 %v504, %v273
        %v690 = vmul.f32 %v509, %v270
        %v691 = vmul.f32 %v514, %v271
        %v692 = vmul.f32 %v519, %v272
        %v693 = vmul.f32 %v524, %v273
        %v694 = vmul.f32 %v529, %v270
        %v695 = vmul.f32 %v534, %v271
        %v696 = vmul.f32 %v539, %v272
        %v697 = vmul.f32 %v544, %v273
        %v698 = vmul.f32 %v549, %v270
        %v699 = vmul.f32 %v554, %v271
        %v700 = vmul.f32 %v559, %v272
        %v701 = vmul.f32 %v564, %v273
        %v702 = vmul.f32 %v569, %v270
        %v703 = vmul.f32 %v574, %v271
        %v704 = vmul.f32 %v579, %v272
        %v705 = vmul.f32 %v584, %v273
        %v706 = vmul.f32 %v589, %v270
        %v707 = vmul.f32 %v594, %v271
        %v708 = vmul.f32 %v599, %v272
        %v709 = vmul.f32 %v604, %v273
        %v710 = vmul.f32 %v609, %v270
        %v711 = vmul.f32 %v614, %v271
        %v712 = vmul.f32 %v619, %v272
        %v713 = vmul.f32 %v624, %v273
        %v714 = vmul.f32 %v629, %v270
        %v715 = vmul.f32 %v634, %v271
        %v716 = vmul.f32 %v639, %v272
        %v717 = vmul.f32 %v644, %v273
        %v718 = vmul.f32 %v649, %v270
        %v719 = vmul.f32 %v654, %v271
        %v720 = vmul.f32 %v659, %v272
        %v721 = vmul.f32 %v664, %v273
        %v722 = vmul.f32 %v669, %v270
        %v723 = vmul.f32 %v674, %v271
        %v724 = vmul.f32 %v679, %v272
        %v725 = vmul.f32 %v684, %v273
        %727 = vset.pattern.permute.xlu0 0
        %728 = vperm.xlu0 %727, %v406
        %v729 = vpop.permute.xlu0 %728
        %732 = vset.pattern.permute.xlu0 0
        %733 = vperm.xlu0 %732, %v407
        %v734 = vpop.permute.xlu0 %733
        %737 = vset.pattern.permute.xlu0 0
        %738 = vperm.xlu0 %737, %v408
        %v739 = vpop.permute.xlu0 %738
        %742 = vset.pattern.permute.xlu0 0
        %743 = vperm.xlu0 %742, %v409
        %v744 = vpop.permute.xlu0 %743
        %747 = vset.pattern.permute.xlu0 0
        %748 = vperm.xlu0 %747, %v410
        %v749 = vpop.permute.xlu0 %748
        %752 = vset.pattern.permute.xlu0 0
        %753 = vperm.xlu0 %752, %v411
        %v754 = vpop.permute.xlu0 %753
        %757 = vset.pattern.permute.xlu0 0
        %758 = vperm.xlu0 %757, %v412
        %v759 = vpop.permute.xlu0 %758
        %762 = vset.pattern.permute.xlu0 0
        %763 = vperm.xlu0 %762, %v413
        %v764 = vpop.permute.xlu0 %763
        %767 = vset.pattern.permute.xlu0 0
        %768 = vperm.xlu0 %767, %v414
        %v769 = vpop.permute.xlu0 %768
        %772 = vset.pattern.permute.xlu0 0
        %773 = vperm.xlu0 %772, %v415
        %v774 = vpop.permute.xlu0 %773
        %777 = vset.pattern.permute.xlu0 0
        %778 = vperm.xlu0 %777, %v416
        %v779 = vpop.permute.xlu0 %778
        %782 = vset.pattern.permute.xlu0 0
        %783 = vperm.xlu0 %782, %v417
        %v784 = vpop.permute.xlu0 %783
        %787 = vset.pattern.permute.xlu0 0
        %788 = vperm.xlu0 %787, %v418
        %v789 = vpop.permute.xlu0 %788
        %792 = vset.pattern.permute.xlu0 0
        %793 = vperm.xlu0 %792, %v419
        %v794 = vpop.permute.xlu0 %793
        %797 = vset.pattern.permute.xlu0 0
        %798 = vperm.xlu0 %797, %v420
        %v799 = vpop.permute.xlu0 %798
        %802 = vset.pattern.permute.xlu0 0
        %803 = vperm.xlu0 %802, %v421
        %v804 = vpop.permute.xlu0 %803
        %807 = vset.pattern.permute.xlu0 0
        %808 = vperm.xlu0 %807, %v422
        %v809 = vpop.permute.xlu0 %808
        %812 = vset.pattern.permute.xlu0 0
        %813 = vperm.xlu0 %812, %v423
        %v814 = vpop.permute.xlu0 %813
        %817 = vset.pattern.permute.xlu0 0
        %818 = vperm.xlu0 %817, %v424
        %v819 = vpop.permute.xlu0 %818
        %822 = vset.pattern.permute.xlu0 0
        %823 = vperm.xlu0 %822, %v425
        %v824 = vpop.permute.xlu0 %823
        %827 = vset.pattern.permute.xlu0 0
        %828 = vperm.xlu0 %827, %v426
        %v829 = vpop.permute.xlu0 %828
        %832 = vset.pattern.permute.xlu0 0
        %833 = vperm.xlu0 %832, %v427
        %v834 = vpop.permute.xlu0 %833
        %837 = vset.pattern.permute.xlu0 0
        %838 = vperm.xlu0 %837, %v428
        %v839 = vpop.permute.xlu0 %838
        %842 = vset.pattern.permute.xlu0 0
        %843 = vperm.xlu0 %842, %v429
        %v844 = vpop.permute.xlu0 %843
        %847 = vset.pattern.permute.xlu0 0
        %848 = vperm.xlu0 %847, %v430
        %v849 = vpop.permute.xlu0 %848
        %852 = vset.pattern.permute.xlu0 0
        %853 = vperm.xlu0 %852, %v431
        %v854 = vpop.permute.xlu0 %853
        %857 = vset.pattern.permute.xlu0 0
        %858 = vperm.xlu0 %857, %v432
        %v859 = vpop.permute.xlu0 %858
        %862 = vset.pattern.permute.xlu0 0
        %863 = vperm.xlu0 %862, %v433
        %v864 = vpop.permute.xlu0 %863
        %867 = vset.pattern.permute.xlu0 0
        %868 = vperm.xlu0 %867, %v434
        %v869 = vpop.permute.xlu0 %868
        %872 = vset.pattern.permute.xlu0 0
        %873 = vperm.xlu0 %872, %v435
        %v874 = vpop.permute.xlu0 %873
        %877 = vset.pattern.permute.xlu0 0
        %878 = vperm.xlu0 %877, %v436
        %v879 = vpop.permute.xlu0 %878
        %882 = vset.pattern.permute.xlu0 0
        %883 = vperm.xlu0 %882, %v437
        %v884 = vpop.permute.xlu0 %883
        %887 = vset.pattern.permute.xlu0 0
        %888 = vperm.xlu0 %887, %v438
        %v889 = vpop.permute.xlu0 %888
        %892 = vset.pattern.permute.xlu0 0
        %893 = vperm.xlu0 %892, %v439
        %v894 = vpop.permute.xlu0 %893
        %897 = vset.pattern.permute.xlu0 0
        %898 = vperm.xlu0 %897, %v440
        %v899 = vpop.permute.xlu0 %898
        %902 = vset.pattern.permute.xlu0 0
        %903 = vperm.xlu0 %902, %v441
        %v904 = vpop.permute.xlu0 %903
        %907 = vset.pattern.permute.xlu0 0
        %908 = vperm.xlu0 %907, %v442
        %v909 = vpop.permute.xlu0 %908
        %912 = vset.pattern.permute.xlu0 0
        %913 = vperm.xlu0 %912, %v443
        %v914 = vpop.permute.xlu0 %913
        %917 = vset.pattern.permute.xlu0 0
        %918 = vperm.xlu0 %917, %v444
        %v919 = vpop.permute.xlu0 %918
        %922 = vset.pattern.permute.xlu0 0
        %923 = vperm.xlu0 %922, %v445
        %v924 = vpop.permute.xlu0 %923
        %v926 = vsub.f32 %v686, %v729
        %v927 = vsub.f32 %v687, %v734
        %v928 = vsub.f32 %v688, %v739
        %v929 = vsub.f32 %v689, %v744
        %v930 = vsub.f32 %v690, %v749
        %v931 = vsub.f32 %v691, %v754
        %v932 = vsub.f32 %v692, %v759
        %v933 = vsub.f32 %v693, %v764
        %v934 = vsub.f32 %v694, %v769
        %v935 = vsub.f32 %v695, %v774
        %v936 = vsub.f32 %v696, %v779
        %v937 = vsub.f32 %v697, %v784
        %v938 = vsub.f32 %v698, %v789
        %v939 = vsub.f32 %v699, %v794
        %v940 = vsub.f32 %v700, %v799
        %v941 = vsub.f32 %v701, %v804
        %v942 = vsub.f32 %v702, %v809
        %v943 = vsub.f32 %v703, %v814
        %v944 = vsub.f32 %v704, %v819
        %v945 = vsub.f32 %v705, %v824
        %v946 = vsub.f32 %v706, %v829
        %v947 = vsub.f32 %v707, %v834
        %v948 = vsub.f32 %v708, %v839
        %v949 = vsub.f32 %v709, %v844
        %v950 = vsub.f32 %v710, %v849
        %v951 = vsub.f32 %v711, %v854
        %v952 = vsub.f32 %v712, %v859
        %v953 = vsub.f32 %v713, %v864
        %v954 = vsub.f32 %v714, %v869
        %v955 = vsub.f32 %v715, %v874
        %v956 = vsub.f32 %v716, %v879
        %v957 = vsub.f32 %v717, %v884
        %v958 = vsub.f32 %v718, %v889
        %v959 = vsub.f32 %v719, %v894
        %v960 = vsub.f32 %v720, %v899
        %v961 = vsub.f32 %v721, %v904
        %v962 = vsub.f32 %v722, %v909
        %v963 = vsub.f32 %v723, %v914
        %v964 = vsub.f32 %v724, %v919
        %v965 = vsub.f32 %v725, %v924
        %v966 = vtanh.pop %v926
        %v967 = vtanh.pop %v927
        %v968 = vtanh.pop %v928
        %v969 = vtanh.pop %v929
        %v970 = vtanh.pop %v930
        %v971 = vtanh.pop %v931
        %v972 = vtanh.pop %v932
        %v973 = vtanh.pop %v933
        %v974 = vtanh.pop %v934
        %v975 = vtanh.pop %v935
        %v976 = vtanh.pop %v936
        %v977 = vtanh.pop %v937
        %v978 = vtanh.pop %v938
        %v979 = vtanh.pop %v939
        %v980 = vtanh.pop %v940
        %v981 = vtanh.pop %v941
        %v982 = vtanh.pop %v942
        %v983 = vtanh.pop %v943
        %v984 = vtanh.pop %v944
        %v985 = vtanh.pop %v945
        %v986 = vtanh.pop %v946
        %v987 = vtanh.pop %v947
        %v988 = vtanh.pop %v948
        %v989 = vtanh.pop %v949
        %v990 = vtanh.pop %v950
        %v991 = vtanh.pop %v951
        %v992 = vtanh.pop %v952
        %v993 = vtanh.pop %v953
        %v994 = vtanh.pop %v954
        %v995 = vtanh.pop %v955
        %v996 = vtanh.pop %v956
        %v997 = vtanh.pop %v957
        %v998 = vtanh.pop %v958
        %v999 = vtanh.pop %v959
        %v1000 = vtanh.pop %v960
        %v1001 = vtanh.pop %v961
        %v1002 = vtanh.pop %v962
        %v1003 = vtanh.pop %v963
        %v1004 = vtanh.pop %v964
        %v1005 = vtanh.pop %v965
        %1007 = vset.pattern.permute.xlu0 0
        %1008 = vperm.xlu0 %1007, %v446
        %v1009 = vpop.permute.xlu0 %1008
        %1012 = vset.pattern.permute.xlu0 0
        %1013 = vperm.xlu0 %1012, %v447
        %v1014 = vpop.permute.xlu0 %1013
        %1017 = vset.pattern.permute.xlu0 0
        %1018 = vperm.xlu0 %1017, %v448
        %v1019 = vpop.permute.xlu0 %1018
        %1022 = vset.pattern.permute.xlu0 0
        %1023 = vperm.xlu0 %1022, %v449
        %v1024 = vpop.permute.xlu0 %1023
        %1027 = vset.pattern.permute.xlu0 0
        %1028 = vperm.xlu0 %1027, %v450
        %v1029 = vpop.permute.xlu0 %1028
        %1032 = vset.pattern.permute.xlu0 0
        %1033 = vperm.xlu0 %1032, %v451
        %v1034 = vpop.permute.xlu0 %1033
        %1037 = vset.pattern.permute.xlu0 0
        %1038 = vperm.xlu0 %1037, %v452
        %v1039 = vpop.permute.xlu0 %1038
        %1042 = vset.pattern.permute.xlu0 0
        %1043 = vperm.xlu0 %1042, %v453
        %v1044 = vpop.permute.xlu0 %1043
        %1047 = vset.pattern.permute.xlu0 0
        %1048 = vperm.xlu0 %1047, %v454
        %v1049 = vpop.permute.xlu0 %1048
        %1052 = vset.pattern.permute.xlu0 0
        %1053 = vperm.xlu0 %1052, %v455
        %v1054 = vpop.permute.xlu0 %1053
        %1057 = vset.pattern.permute.xlu0 0
        %1058 = vperm.xlu0 %1057, %v456
        %v1059 = vpop.permute.xlu0 %1058
        %1062 = vset.pattern.permute.xlu0 0
        %1063 = vperm.xlu0 %1062, %v457
        %v1064 = vpop.permute.xlu0 %1063
        %1067 = vset.pattern.permute.xlu0 0
        %1068 = vperm.xlu0 %1067, %v458
        %v1069 = vpop.permute.xlu0 %1068
        %1072 = vset.pattern.permute.xlu0 0
        %1073 = vperm.xlu0 %1072, %v459
        %v1074 = vpop.permute.xlu0 %1073
        %1077 = vset.pattern.permute.xlu0 0
        %1078 = vperm.xlu0 %1077, %v460
        %v1079 = vpop.permute.xlu0 %1078
        %1082 = vset.pattern.permute.xlu0 0
        %1083 = vperm.xlu0 %1082, %v461
        %v1084 = vpop.permute.xlu0 %1083
        %1087 = vset.pattern.permute.xlu0 0
        %1088 = vperm.xlu0 %1087, %v462
        %v1089 = vpop.permute.xlu0 %1088
        %1092 = vset.pattern.permute.xlu0 0
        %1093 = vperm.xlu0 %1092, %v463
        %v1094 = vpop.permute.xlu0 %1093
        %1097 = vset.pattern.permute.xlu0 0
        %1098 = vperm.xlu0 %1097, %v464
        %v1099 = vpop.permute.xlu0 %1098
        %1102 = vset.pattern.permute.xlu0 0
        %1103 = vperm.xlu0 %1102, %v465
        %v1104 = vpop.permute.xlu0 %1103
        %1107 = vset.pattern.permute.xlu0 0
        %1108 = vperm.xlu0 %1107, %v466
        %v1109 = vpop.permute.xlu0 %1108
        %1112 = vset.pattern.permute.xlu0 0
        %1113 = vperm.xlu0 %1112, %v467
        %v1114 = vpop.permute.xlu0 %1113
        %1117 = vset.pattern.permute.xlu0 0
        %1118 = vperm.xlu0 %1117, %v468
        %v1119 = vpop.permute.xlu0 %1118
        %1122 = vset.pattern.permute.xlu0 0
        %1123 = vperm.xlu0 %1122, %v469
        %v1124 = vpop.permute.xlu0 %1123
        %1127 = vset.pattern.permute.xlu0 0
        %1128 = vperm.xlu0 %1127, %v470
        %v1129 = vpop.permute.xlu0 %1128
        %1132 = vset.pattern.permute.xlu0 0
        %1133 = vperm.xlu0 %1132, %v471
        %v1134 = vpop.permute.xlu0 %1133
        %1137 = vset.pattern.permute.xlu0 0
        %1138 = vperm.xlu0 %1137, %v472
        %v1139 = vpop.permute.xlu0 %1138
        %1142 = vset.pattern.permute.xlu0 0
        %1143 = vperm.xlu0 %1142, %v473
        %v1144 = vpop.permute.xlu0 %1143
        %1147 = vset.pattern.permute.xlu0 0
        %1148 = vperm.xlu0 %1147, %v474
        %v1149 = vpop.permute.xlu0 %1148
        %1152 = vset.pattern.permute.xlu0 0
        %1153 = vperm.xlu0 %1152, %v475
        %v1154 = vpop.permute.xlu0 %1153
        %1157 = vset.pattern.permute.xlu0 0
        %1158 = vperm.xlu0 %1157, %v476
        %v1159 = vpop.permute.xlu0 %1158
        %1162 = vset.pattern.permute.xlu0 0
        %1163 = vperm.xlu0 %1162, %v477
        %v1164 = vpop.permute.xlu0 %1163
        %1167 = vset.pattern.permute.xlu0 0
        %1168 = vperm.xlu0 %1167, %v478
        %v1169 = vpop.permute.xlu0 %1168
        %1172 = vset.pattern.permute.xlu0 0
        %1173 = vperm.xlu0 %1172, %v479
        %v1174 = vpop.permute.xlu0 %1173
        %1177 = vset.pattern.permute.xlu0 0
        %1178 = vperm.xlu0 %1177, %v480
        %v1179 = vpop.permute.xlu0 %1178
        %1182 = vset.pattern.permute.xlu0 0
        %1183 = vperm.xlu0 %1182, %v481
        %v1184 = vpop.permute.xlu0 %1183
        %1187 = vset.pattern.permute.xlu0 0
        %1188 = vperm.xlu0 %1187, %v482
        %v1189 = vpop.permute.xlu0 %1188
        %1192 = vset.pattern.permute.xlu0 0
        %1193 = vperm.xlu0 %1192, %v483
        %v1194 = vpop.permute.xlu0 %1193
        %1197 = vset.pattern.permute.xlu0 0
        %1198 = vperm.xlu0 %1197, %v484
        %v1199 = vpop.permute.xlu0 %1198
        %1202 = vset.pattern.permute.xlu0 0
        %1203 = vperm.xlu0 %1202, %v485
        %v1204 = vpop.permute.xlu0 %1203
        %v1206 = vmul.f32 %v1009, %v966
        %v1207 = vmul.f32 %v1014, %v967
        %v1208 = vmul.f32 %v1019, %v968
        %v1209 = vmul.f32 %v1024, %v969
        %v1210 = vmul.f32 %v1029, %v970
        %v1211 = vmul.f32 %v1034, %v971
        %v1212 = vmul.f32 %v1039, %v972
        %v1213 = vmul.f32 %v1044, %v973
        %v1214 = vmul.f32 %v1049, %v974
        %v1215 = vmul.f32 %v1054, %v975
        %v1216 = vmul.f32 %v1059, %v976
        %v1217 = vmul.f32 %v1064, %v977
        %v1218 = vmul.f32 %v1069, %v978
        %v1219 = vmul.f32 %v1074, %v979
        %v1220 = vmul.f32 %v1079, %v980
        %v1221 = vmul.f32 %v1084, %v981
        %v1222 = vmul.f32 %v1089, %v982
        %v1223 = vmul.f32 %v1094, %v983
        %v1224 = vmul.f32 %v1099, %v984
        %v1225 = vmul.f32 %v1104, %v985
        %v1226 = vmul.f32 %v1109, %v986
        %v1227 = vmul.f32 %v1114, %v987
        %v1228 = vmul.f32 %v1119, %v988
        %v1229 = vmul.f32 %v1124, %v989
        %v1230 = vmul.f32 %v1129, %v990
        %v1231 = vmul.f32 %v1134, %v991
        %v1232 = vmul.f32 %v1139, %v992
        %v1233 = vmul.f32 %v1144, %v993
        %v1234 = vmul.f32 %v1149, %v994
        %v1235 = vmul.f32 %v1154, %v995
        %v1236 = vmul.f32 %v1159, %v996
        %v1237 = vmul.f32 %v1164, %v997
        %v1238 = vmul.f32 %v1169, %v998
        %v1239 = vmul.f32 %v1174, %v999
        %v1240 = vmul.f32 %v1179, %v1000
        %v1241 = vmul.f32 %v1184, %v1001
        %v1242 = vmul.f32 %v1189, %v1002
        %v1243 = vmul.f32 %v1194, %v1003
        %v1244 = vmul.f32 %v1199, %v1004
        %v1245 = vmul.f32 %v1204, %v1005
        %v1246 = vadd.f32 %v1206, %v1207
        %v1247 = vadd.f32 %v1246, %v1208
        %v1248 = vadd.f32 %v1247, %v1209
        %v1249 = vrot.slane %v1248, 4
        %v1250 = vadd.f32 %v1248, %v1249
        %v1251 = vrot.slane %v1250, 2
        %v1252 = vadd.f32 %v1250, %v1251
        %v1253 = vrot.slane %v1252, 1
        %v1254 = vadd.f32 %v1252, %v1253
        %v1255 = vadd.f32 %v1210, %v1211
        %v1256 = vadd.f32 %v1255, %v1212
        %v1257 = vadd.f32 %v1256, %v1213
        %v1258 = vrot.slane %v1257, 4
        %v1259 = vadd.f32 %v1257, %v1258
        %v1260 = vrot.slane %v1259, 2
        %v1261 = vadd.f32 %v1259, %v1260
        %v1262 = vrot.slane %v1261, 1
        %v1263 = vadd.f32 %v1261, %v1262
        %v1264 = vadd.f32 %v1214, %v1215
        %v1265 = vadd.f32 %v1264, %v1216
        %v1266 = vadd.f32 %v1265, %v1217
        %v1267 = vrot.slane %v1266, 4
        %v1268 = vadd.f32 %v1266, %v1267
        %v1269 = vrot.slane %v1268, 2
        %v1270 = vadd.f32 %v1268, %v1269
        %v1271 = vrot.slane %v1270, 1
        %v1272 = vadd.f32 %v1270, %v1271
        %v1273 = vadd.f32 %v1218, %v1219
        %v1274 = vadd.f32 %v1273, %v1220
        %v1275 = vadd.f32 %v1274, %v1221
        %v1276 = vrot.slane %v1275, 4
        %v1277 = vadd.f32 %v1275, %v1276
        %v1278 = vrot.slane %v1277, 2
        %v1279 = vadd.f32 %v1277, %v1278
        %v1280 = vrot.slane %v1279, 1
        %v1281 = vadd.f32 %v1279, %v1280
        %v1282 = vadd.f32 %v1222, %v1223
        %v1283 = vadd.f32 %v1282, %v1224
        %v1284 = vadd.f32 %v1283, %v1225
        %v1285 = vrot.slane %v1284, 4
        %v1286 = vadd.f32 %v1284, %v1285
        %v1287 = vrot.slane %v1286, 2
        %v1288 = vadd.f32 %v1286, %v1287
        %v1289 = vrot.slane %v1288, 1
        %v1290 = vadd.f32 %v1288, %v1289
        %v1291 = vadd.f32 %v1226, %v1227
        %v1292 = vadd.f32 %v1291, %v1228
        %v1293 = vadd.f32 %v1292, %v1229
        %v1294 = vrot.slane %v1293, 4
        %v1295 = vadd.f32 %v1293, %v1294
        %v1296 = vrot.slane %v1295, 2
        %v1297 = vadd.f32 %v1295, %v1296
        %v1298 = vrot.slane %v1297, 1
        %v1299 = vadd.f32 %v1297, %v1298
        %v1300 = vadd.f32 %v1230, %v1231
        %v1301 = vadd.f32 %v1300, %v1232
        %v1302 = vadd.f32 %v1301, %v1233
        %v1303 = vrot.slane %v1302, 4
        %v1304 = vadd.f32 %v1302, %v1303
        %v1305 = vrot.slane %v1304, 2
        %v1306 = vadd.f32 %v1304, %v1305
        %v1307 = vrot.slane %v1306, 1
        %v1308 = vadd.f32 %v1306, %v1307
        %v1309 = vadd.f32 %v1234, %v1235
        %v1310 = vadd.f32 %v1309, %v1236
        %v1311 = vadd.f32 %v1310, %v1237
        %v1312 = vrot.slane %v1311, 4
        %v1313 = vadd.f32 %v1311, %v1312
        %v1314 = vrot.slane %v1313, 2
        %v1315 = vadd.f32 %v1313, %v1314
        %v1316 = vrot.slane %v1315, 1
        %v1317 = vadd.f32 %v1315, %v1316
        %v1318 = vadd.f32 %v1238, %v1239
        %v1319 = vadd.f32 %v1318, %v1240
        %v1320 = vadd.f32 %v1319, %v1241
        %v1321 = vrot.slane %v1320, 4
        %v1322 = vadd.f32 %v1320, %v1321
        %v1323 = vrot.slane %v1322, 2
        %v1324 = vadd.f32 %v1322, %v1323
        %v1325 = vrot.slane %v1324, 1
        %v1326 = vadd.f32 %v1324, %v1325
        %v1327 = vadd.f32 %v1242, %v1243
        %v1328 = vadd.f32 %v1327, %v1244
        %v1329 = vadd.f32 %v1328, %v1245
        %v1330 = vrot.slane %v1329, 4
        %v1331 = vadd.f32 %v1329, %v1330
        %v1332 = vrot.slane %v1331, 2
        %v1333 = vadd.f32 %v1331, %v1332
        %v1334 = vrot.slane %v1333, 1
        %v1335 = vadd.f32 %v1333, %v1334
        %vm1346 = vcmask 1041409
        %v1347 = vsel %vm1346, %v1263, %v1254
        %vm1348 = vcmask 1042434
        %v1349 = vsel %vm1348, %v1272, %v1347
        %vm1350 = vcmask 1043459
        %v1351 = vsel %vm1350, %v1281, %v1349
        %vm1352 = vcmask 1044484
        %v1353 = vsel %vm1352, %v1290, %v1351
        %vm1354 = vcmask 1045509
        %v1355 = vsel %vm1354, %v1299, %v1353
        %vm1356 = vcmask 1046534
        %v1357 = vsel %vm1356, %v1308, %v1355
        %vm1358 = vcmask 1047559
        %v1359 = vsel %vm1358, %v1317, %v1357
        %v1360 = vsel %vm1346, %v1335, %v1326
        %v1363 = vadd.f32 %v279, %v1359
        %v1364 = vadd.f32 %v284, %v1360
        %s1365 = scalar_lea.vmem %s1, 320
        %v1366 = vld [vmem:[%s1365] sm:$0xff]
        %v1367 = vld [vmem:[%s1365 + $0x8] sm:$0xff]
        %v1368 = vld [vmem:[%s1365 + $0x10] sm:$0xff]
        %v1369 = vld [vmem:[%s1365 + $0x18] sm:$0xff]
        %v1370 = vld [vmem:[%s1365 + $0x20] sm:$0xff]
        %v1371 = vld [vmem:[%s1365 + $0x28] sm:$0xff]
        %v1372 = vld [vmem:[%s1365 + $0x30] sm:$0xff]
        %v1373 = vld [vmem:[%s1365 + $0x38] sm:$0xff]
        %v1374 = vld [vmem:[%s1365 + $0x40] sm:$0xff]
        %v1375 = vld [vmem:[%s1365 + $0x48] sm:$0xff]
        %v1376 = vld [vmem:[%s1365 + $0x50] sm:$0xff]
        %v1377 = vld [vmem:[%s1365 + $0x58] sm:$0xff]
        %v1378 = vld [vmem:[%s1365 + $0x60] sm:$0xff]
        %v1379 = vld [vmem:[%s1365 + $0x68] sm:$0xff]
        %v1380 = vld [vmem:[%s1365 + $0x70] sm:$0xff]
        %v1381 = vld [vmem:[%s1365 + $0x78] sm:$0xff]
        %v1382 = vld [vmem:[%s1365 + $0x80] sm:$0xff]
        %v1383 = vld [vmem:[%s1365 + $0x88] sm:$0xff]
        %v1384 = vld [vmem:[%s1365 + $0x90] sm:$0xff]
        %v1385 = vld [vmem:[%s1365 + $0x98] sm:$0xff]
        %v1386 = vld [vmem:[%s1365 + $0xa0] sm:$0xff]
        %v1387 = vld [vmem:[%s1365 + $0xa8] sm:$0xff]
        %v1388 = vld [vmem:[%s1365 + $0xb0] sm:$0xff]
        %v1389 = vld [vmem:[%s1365 + $0xb8] sm:$0xff]
        %v1390 = vld [vmem:[%s1365 + $0xc0] sm:$0xff]
        %v1391 = vld [vmem:[%s1365 + $0xc8] sm:$0xff]
        %v1392 = vld [vmem:[%s1365 + $0xd0] sm:$0xff]
        %v1393 = vld [vmem:[%s1365 + $0xd8] sm:$0xff]
        %v1394 = vld [vmem:[%s1365 + $0xe0] sm:$0xff]
        %v1395 = vld [vmem:[%s1365 + $0xe8] sm:$0xff]
        %v1396 = vld [vmem:[%s1365 + $0xf0] sm:$0xff]
        %v1397 = vld [vmem:[%s1365 + $0xf8] sm:$0xff]
        %v1398 = vld [vmem:[%s1365 + $0x100] sm:$0xff]
        %v1399 = vld [vmem:[%s1365 + $0x108] sm:$0xff]
        %v1400 = vld [vmem:[%s1365 + $0x110] sm:$0xff]
        %v1401 = vld [vmem:[%s1365 + $0x118] sm:$0xff]
        %v1402 = vld [vmem:[%s1365 + $0x120] sm:$0xff]
        %v1403 = vld [vmem:[%s1365 + $0x128] sm:$0xff]
        %v1404 = vld [vmem:[%s1365 + $0x130] sm:$0xff]
        %v1405 = vld [vmem:[%s1365 + $0x138] sm:$0xff]
        %s1406 = scalar_lea.vmem %s2, 320
        %v1407 = vld [vmem:[%s1406] sm:$0xff]
        %v1408 = vld [vmem:[%s1406 + $0x8] sm:$0xff]
        %v1409 = vld [vmem:[%s1406 + $0x10] sm:$0xff]
        %v1410 = vld [vmem:[%s1406 + $0x18] sm:$0xff]
        %v1411 = vld [vmem:[%s1406 + $0x20] sm:$0xff]
        %v1412 = vld [vmem:[%s1406 + $0x28] sm:$0xff]
        %v1413 = vld [vmem:[%s1406 + $0x30] sm:$0xff]
        %v1414 = vld [vmem:[%s1406 + $0x38] sm:$0xff]
        %v1415 = vld [vmem:[%s1406 + $0x40] sm:$0xff]
        %v1416 = vld [vmem:[%s1406 + $0x48] sm:$0xff]
        %v1417 = vld [vmem:[%s1406 + $0x50] sm:$0xff]
        %v1418 = vld [vmem:[%s1406 + $0x58] sm:$0xff]
        %v1419 = vld [vmem:[%s1406 + $0x60] sm:$0xff]
        %v1420 = vld [vmem:[%s1406 + $0x68] sm:$0xff]
        %v1421 = vld [vmem:[%s1406 + $0x70] sm:$0xff]
        %v1422 = vld [vmem:[%s1406 + $0x78] sm:$0xff]
        %v1423 = vld [vmem:[%s1406 + $0x80] sm:$0xff]
        %v1424 = vld [vmem:[%s1406 + $0x88] sm:$0xff]
        %v1425 = vld [vmem:[%s1406 + $0x90] sm:$0xff]
        %v1426 = vld [vmem:[%s1406 + $0x98] sm:$0xff]
        %v1427 = vld [vmem:[%s1406 + $0xa0] sm:$0xff]
        %v1428 = vld [vmem:[%s1406 + $0xa8] sm:$0xff]
        %v1429 = vld [vmem:[%s1406 + $0xb0] sm:$0xff]
        %v1430 = vld [vmem:[%s1406 + $0xb8] sm:$0xff]
        %v1431 = vld [vmem:[%s1406 + $0xc0] sm:$0xff]
        %v1432 = vld [vmem:[%s1406 + $0xc8] sm:$0xff]
        %v1433 = vld [vmem:[%s1406 + $0xd0] sm:$0xff]
        %v1434 = vld [vmem:[%s1406 + $0xd8] sm:$0xff]
        %v1435 = vld [vmem:[%s1406 + $0xe0] sm:$0xff]
        %v1436 = vld [vmem:[%s1406 + $0xe8] sm:$0xff]
        %v1437 = vld [vmem:[%s1406 + $0xf0] sm:$0xff]
        %v1438 = vld [vmem:[%s1406 + $0xf8] sm:$0xff]
        %v1439 = vld [vmem:[%s1406 + $0x100] sm:$0xff]
        %v1440 = vld [vmem:[%s1406 + $0x108] sm:$0xff]
        %v1441 = vld [vmem:[%s1406 + $0x110] sm:$0xff]
        %v1442 = vld [vmem:[%s1406 + $0x118] sm:$0xff]
        %v1443 = vld [vmem:[%s1406 + $0x120] sm:$0xff]
        %v1444 = vld [vmem:[%s1406 + $0x128] sm:$0xff]
        %v1445 = vld [vmem:[%s1406 + $0x130] sm:$0xff]
        %v1446 = vld [vmem:[%s1406 + $0x138] sm:$0xff]
        %s1447 = scalar_lea.vmem %s3, 320
        %v1448 = vld [vmem:[%s1447] sm:$0xff]
        %v1449 = vld [vmem:[%s1447 + $0x8] sm:$0xff]
        %v1450 = vld [vmem:[%s1447 + $0x10] sm:$0xff]
        %v1451 = vld [vmem:[%s1447 + $0x18] sm:$0xff]
        %v1452 = vld [vmem:[%s1447 + $0x20] sm:$0xff]
        %v1453 = vld [vmem:[%s1447 + $0x28] sm:$0xff]
        %v1454 = vld [vmem:[%s1447 + $0x30] sm:$0xff]
        %v1455 = vld [vmem:[%s1447 + $0x38] sm:$0xff]
        %v1456 = vld [vmem:[%s1447 + $0x40] sm:$0xff]
        %v1457 = vld [vmem:[%s1447 + $0x48] sm:$0xff]
        %v1458 = vld [vmem:[%s1447 + $0x50] sm:$0xff]
        %v1459 = vld [vmem:[%s1447 + $0x58] sm:$0xff]
        %v1460 = vld [vmem:[%s1447 + $0x60] sm:$0xff]
        %v1461 = vld [vmem:[%s1447 + $0x68] sm:$0xff]
        %v1462 = vld [vmem:[%s1447 + $0x70] sm:$0xff]
        %v1463 = vld [vmem:[%s1447 + $0x78] sm:$0xff]
        %v1464 = vld [vmem:[%s1447 + $0x80] sm:$0xff]
        %v1465 = vld [vmem:[%s1447 + $0x88] sm:$0xff]
        %v1466 = vld [vmem:[%s1447 + $0x90] sm:$0xff]
        %v1467 = vld [vmem:[%s1447 + $0x98] sm:$0xff]
        %v1468 = vld [vmem:[%s1447 + $0xa0] sm:$0xff]
        %v1469 = vld [vmem:[%s1447 + $0xa8] sm:$0xff]
        %v1470 = vld [vmem:[%s1447 + $0xb0] sm:$0xff]
        %v1471 = vld [vmem:[%s1447 + $0xb8] sm:$0xff]
        %v1472 = vld [vmem:[%s1447 + $0xc0] sm:$0xff]
        %v1473 = vld [vmem:[%s1447 + $0xc8] sm:$0xff]
        %v1474 = vld [vmem:[%s1447 + $0xd0] sm:$0xff]
        %v1475 = vld [vmem:[%s1447 + $0xd8] sm:$0xff]
        %v1476 = vld [vmem:[%s1447 + $0xe0] sm:$0xff]
        %v1477 = vld [vmem:[%s1447 + $0xe8] sm:$0xff]
        %v1478 = vld [vmem:[%s1447 + $0xf0] sm:$0xff]
        %v1479 = vld [vmem:[%s1447 + $0xf8] sm:$0xff]
        %v1480 = vld [vmem:[%s1447 + $0x100] sm:$0xff]
        %v1481 = vld [vmem:[%s1447 + $0x108] sm:$0xff]
        %v1482 = vld [vmem:[%s1447 + $0x110] sm:$0xff]
        %v1483 = vld [vmem:[%s1447 + $0x118] sm:$0xff]
        %v1484 = vld [vmem:[%s1447 + $0x120] sm:$0xff]
        %v1485 = vld [vmem:[%s1447 + $0x128] sm:$0xff]
        %v1486 = vld [vmem:[%s1447 + $0x130] sm:$0xff]
        %v1487 = vld [vmem:[%s1447 + $0x138] sm:$0xff]
        %v1488 = vmul.f32 %v1366, %v1407
        %v1489 = vmul.f32 %v1367, %v1408
        %v1490 = vmul.f32 %v1368, %v1409
        %v1491 = vmul.f32 %v1369, %v1410
        %v1492 = vmul.f32 %v1370, %v1411
        %v1493 = vmul.f32 %v1371, %v1412
        %v1494 = vmul.f32 %v1372, %v1413
        %v1495 = vmul.f32 %v1373, %v1414
        %v1496 = vmul.f32 %v1374, %v1415
        %v1497 = vmul.f32 %v1375, %v1416
        %v1498 = vmul.f32 %v1376, %v1417
        %v1499 = vmul.f32 %v1377, %v1418
        %v1500 = vmul.f32 %v1378, %v1419
        %v1501 = vmul.f32 %v1379, %v1420
        %v1502 = vmul.f32 %v1380, %v1421
        %v1503 = vmul.f32 %v1381, %v1422
        %v1504 = vmul.f32 %v1382, %v1423
        %v1505 = vmul.f32 %v1383, %v1424
        %v1506 = vmul.f32 %v1384, %v1425
        %v1507 = vmul.f32 %v1385, %v1426
        %v1508 = vmul.f32 %v1386, %v1427
        %v1509 = vmul.f32 %v1387, %v1428
        %v1510 = vmul.f32 %v1388, %v1429
        %v1511 = vmul.f32 %v1389, %v1430
        %v1512 = vmul.f32 %v1390, %v1431
        %v1513 = vmul.f32 %v1391, %v1432
        %v1514 = vmul.f32 %v1392, %v1433
        %v1515 = vmul.f32 %v1393, %v1434
        %v1516 = vmul.f32 %v1394, %v1435
        %v1517 = vmul.f32 %v1395, %v1436
        %v1518 = vmul.f32 %v1396, %v1437
        %v1519 = vmul.f32 %v1397, %v1438
        %v1520 = vmul.f32 %v1398, %v1439
        %v1521 = vmul.f32 %v1399, %v1440
        %v1522 = vmul.f32 %v1400, %v1441
        %v1523 = vmul.f32 %v1401, %v1442
        %v1524 = vmul.f32 %v1402, %v1443
        %v1525 = vmul.f32 %v1403, %v1444
        %v1526 = vmul.f32 %v1404, %v1445
        %v1527 = vmul.f32 %v1405, %v1446
        %v1528 = vmul.f32 %v1448, %v1448
        %v1529 = vmul.f32 %v1449, %v1449
        %v1530 = vmul.f32 %v1450, %v1450
        %v1531 = vmul.f32 %v1451, %v1451
        %v1532 = vmul.f32 %v1452, %v1452
        %v1533 = vmul.f32 %v1453, %v1453
        %v1534 = vmul.f32 %v1454, %v1454
        %v1535 = vmul.f32 %v1455, %v1455
        %v1536 = vmul.f32 %v1456, %v1456
        %v1537 = vmul.f32 %v1457, %v1457
        %v1538 = vmul.f32 %v1458, %v1458
        %v1539 = vmul.f32 %v1459, %v1459
        %v1540 = vmul.f32 %v1460, %v1460
        %v1541 = vmul.f32 %v1461, %v1461
        %v1542 = vmul.f32 %v1462, %v1462
        %v1543 = vmul.f32 %v1463, %v1463
        %v1544 = vmul.f32 %v1464, %v1464
        %v1545 = vmul.f32 %v1465, %v1465
        %v1546 = vmul.f32 %v1466, %v1466
        %v1547 = vmul.f32 %v1467, %v1467
        %v1548 = vmul.f32 %v1468, %v1468
        %v1549 = vmul.f32 %v1469, %v1469
        %v1550 = vmul.f32 %v1470, %v1470
        %v1551 = vmul.f32 %v1471, %v1471
        %v1552 = vmul.f32 %v1472, %v1472
        %v1553 = vmul.f32 %v1473, %v1473
        %v1554 = vmul.f32 %v1474, %v1474
        %v1555 = vmul.f32 %v1475, %v1475
        %v1556 = vmul.f32 %v1476, %v1476
        %v1557 = vmul.f32 %v1477, %v1477
        %v1558 = vmul.f32 %v1478, %v1478
        %v1559 = vmul.f32 %v1479, %v1479
        %v1560 = vmul.f32 %v1480, %v1480
        %v1561 = vmul.f32 %v1481, %v1481
        %v1562 = vmul.f32 %v1482, %v1482
        %v1563 = vmul.f32 %v1483, %v1483
        %v1564 = vmul.f32 %v1484, %v1484
        %v1565 = vmul.f32 %v1485, %v1485
        %v1566 = vmul.f32 %v1486, %v1486
        %v1567 = vmul.f32 %v1487, %v1487
        %1569 = vset.pattern.permute.xlu0 0
        %1570 = vperm.xlu0 %1569, %v1366
        %v1571 = vpop.permute.xlu0 %1570
        %1574 = vset.pattern.permute.xlu0 0
        %1575 = vperm.xlu0 %1574, %v1367
        %v1576 = vpop.permute.xlu0 %1575
        %1579 = vset.pattern.permute.xlu0 0
        %1580 = vperm.xlu0 %1579, %v1368
        %v1581 = vpop.permute.xlu0 %1580
        %1584 = vset.pattern.permute.xlu0 0
        %1585 = vperm.xlu0 %1584, %v1369
        %v1586 = vpop.permute.xlu0 %1585
        %1589 = vset.pattern.permute.xlu0 0
        %1590 = vperm.xlu0 %1589, %v1370
        %v1591 = vpop.permute.xlu0 %1590
        %1594 = vset.pattern.permute.xlu0 0
        %1595 = vperm.xlu0 %1594, %v1371
        %v1596 = vpop.permute.xlu0 %1595
        %1599 = vset.pattern.permute.xlu0 0
        %1600 = vperm.xlu0 %1599, %v1372
        %v1601 = vpop.permute.xlu0 %1600
        %1604 = vset.pattern.permute.xlu0 0
        %1605 = vperm.xlu0 %1604, %v1373
        %v1606 = vpop.permute.xlu0 %1605
        %1609 = vset.pattern.permute.xlu0 0
        %1610 = vperm.xlu0 %1609, %v1374
        %v1611 = vpop.permute.xlu0 %1610
        %1614 = vset.pattern.permute.xlu0 0
        %1615 = vperm.xlu0 %1614, %v1375
        %v1616 = vpop.permute.xlu0 %1615
        %1619 = vset.pattern.permute.xlu0 0
        %1620 = vperm.xlu0 %1619, %v1376
        %v1621 = vpop.permute.xlu0 %1620
        %1624 = vset.pattern.permute.xlu0 0
        %1625 = vperm.xlu0 %1624, %v1377
        %v1626 = vpop.permute.xlu0 %1625
        %1629 = vset.pattern.permute.xlu0 0
        %1630 = vperm.xlu0 %1629, %v1378
        %v1631 = vpop.permute.xlu0 %1630
        %1634 = vset.pattern.permute.xlu0 0
        %1635 = vperm.xlu0 %1634, %v1379
        %v1636 = vpop.permute.xlu0 %1635
        %1639 = vset.pattern.permute.xlu0 0
        %1640 = vperm.xlu0 %1639, %v1380
        %v1641 = vpop.permute.xlu0 %1640
        %1644 = vset.pattern.permute.xlu0 0
        %1645 = vperm.xlu0 %1644, %v1381
        %v1646 = vpop.permute.xlu0 %1645
        %1649 = vset.pattern.permute.xlu0 0
        %1650 = vperm.xlu0 %1649, %v1382
        %v1651 = vpop.permute.xlu0 %1650
        %1654 = vset.pattern.permute.xlu0 0
        %1655 = vperm.xlu0 %1654, %v1383
        %v1656 = vpop.permute.xlu0 %1655
        %1659 = vset.pattern.permute.xlu0 0
        %1660 = vperm.xlu0 %1659, %v1384
        %v1661 = vpop.permute.xlu0 %1660
        %1664 = vset.pattern.permute.xlu0 0
        %1665 = vperm.xlu0 %1664, %v1385
        %v1666 = vpop.permute.xlu0 %1665
        %1669 = vset.pattern.permute.xlu0 0
        %1670 = vperm.xlu0 %1669, %v1386
        %v1671 = vpop.permute.xlu0 %1670
        %1674 = vset.pattern.permute.xlu0 0
        %1675 = vperm.xlu0 %1674, %v1387
        %v1676 = vpop.permute.xlu0 %1675
        %1679 = vset.pattern.permute.xlu0 0
        %1680 = vperm.xlu0 %1679, %v1388
        %v1681 = vpop.permute.xlu0 %1680
        %1684 = vset.pattern.permute.xlu0 0
        %1685 = vperm.xlu0 %1684, %v1389
        %v1686 = vpop.permute.xlu0 %1685
        %1689 = vset.pattern.permute.xlu0 0
        %1690 = vperm.xlu0 %1689, %v1390
        %v1691 = vpop.permute.xlu0 %1690
        %1694 = vset.pattern.permute.xlu0 0
        %1695 = vperm.xlu0 %1694, %v1391
        %v1696 = vpop.permute.xlu0 %1695
        %1699 = vset.pattern.permute.xlu0 0
        %1700 = vperm.xlu0 %1699, %v1392
        %v1701 = vpop.permute.xlu0 %1700
        %1704 = vset.pattern.permute.xlu0 0
        %1705 = vperm.xlu0 %1704, %v1393
        %v1706 = vpop.permute.xlu0 %1705
        %1709 = vset.pattern.permute.xlu0 0
        %1710 = vperm.xlu0 %1709, %v1394
        %v1711 = vpop.permute.xlu0 %1710
        %1714 = vset.pattern.permute.xlu0 0
        %1715 = vperm.xlu0 %1714, %v1395
        %v1716 = vpop.permute.xlu0 %1715
        %1719 = vset.pattern.permute.xlu0 0
        %1720 = vperm.xlu0 %1719, %v1396
        %v1721 = vpop.permute.xlu0 %1720
        %1724 = vset.pattern.permute.xlu0 0
        %1725 = vperm.xlu0 %1724, %v1397
        %v1726 = vpop.permute.xlu0 %1725
        %1729 = vset.pattern.permute.xlu0 0
        %1730 = vperm.xlu0 %1729, %v1398
        %v1731 = vpop.permute.xlu0 %1730
        %1734 = vset.pattern.permute.xlu0 0
        %1735 = vperm.xlu0 %1734, %v1399
        %v1736 = vpop.permute.xlu0 %1735
        %1739 = vset.pattern.permute.xlu0 0
        %1740 = vperm.xlu0 %1739, %v1400
        %v1741 = vpop.permute.xlu0 %1740
        %1744 = vset.pattern.permute.xlu0 0
        %1745 = vperm.xlu0 %1744, %v1401
        %v1746 = vpop.permute.xlu0 %1745
        %1749 = vset.pattern.permute.xlu0 0
        %1750 = vperm.xlu0 %1749, %v1402
        %v1751 = vpop.permute.xlu0 %1750
        %1754 = vset.pattern.permute.xlu0 0
        %1755 = vperm.xlu0 %1754, %v1403
        %v1756 = vpop.permute.xlu0 %1755
        %1759 = vset.pattern.permute.xlu0 0
        %1760 = vperm.xlu0 %1759, %v1404
        %v1761 = vpop.permute.xlu0 %1760
        %1764 = vset.pattern.permute.xlu0 0
        %1765 = vperm.xlu0 %1764, %v1405
        %v1766 = vpop.permute.xlu0 %1765
        %v1768 = vmul.f32 %v1571, %v270
        %v1769 = vmul.f32 %v1576, %v271
        %v1770 = vmul.f32 %v1581, %v272
        %v1771 = vmul.f32 %v1586, %v273
        %v1772 = vmul.f32 %v1591, %v270
        %v1773 = vmul.f32 %v1596, %v271
        %v1774 = vmul.f32 %v1601, %v272
        %v1775 = vmul.f32 %v1606, %v273
        %v1776 = vmul.f32 %v1611, %v270
        %v1777 = vmul.f32 %v1616, %v271
        %v1778 = vmul.f32 %v1621, %v272
        %v1779 = vmul.f32 %v1626, %v273
        %v1780 = vmul.f32 %v1631, %v270
        %v1781 = vmul.f32 %v1636, %v271
        %v1782 = vmul.f32 %v1641, %v272
        %v1783 = vmul.f32 %v1646, %v273
        %v1784 = vmul.f32 %v1651, %v270
        %v1785 = vmul.f32 %v1656, %v271
        %v1786 = vmul.f32 %v1661, %v272
        %v1787 = vmul.f32 %v1666, %v273
        %v1788 = vmul.f32 %v1671, %v270
        %v1789 = vmul.f32 %v1676, %v271
        %v1790 = vmul.f32 %v1681, %v272
        %v1791 = vmul.f32 %v1686, %v273
        %v1792 = vmul.f32 %v1691, %v270
        %v1793 = vmul.f32 %v1696, %v271
        %v1794 = vmul.f32 %v1701, %v272
        %v1795 = vmul.f32 %v1706, %v273
        %v1796 = vmul.f32 %v1711, %v270
        %v1797 = vmul.f32 %v1716, %v271
        %v1798 = vmul.f32 %v1721, %v272
        %v1799 = vmul.f32 %v1726, %v273
        %v1800 = vmul.f32 %v1731, %v270
        %v1801 = vmul.f32 %v1736, %v271
        %v1802 = vmul.f32 %v1741, %v272
        %v1803 = vmul.f32 %v1746, %v273
        %v1804 = vmul.f32 %v1751, %v270
        %v1805 = vmul.f32 %v1756, %v271
        %v1806 = vmul.f32 %v1761, %v272
        %v1807 = vmul.f32 %v1766, %v273
        %1809 = vset.pattern.permute.xlu0 0
        %1810 = vperm.xlu0 %1809, %v1488
        %v1811 = vpop.permute.xlu0 %1810
        %1814 = vset.pattern.permute.xlu0 0
        %1815 = vperm.xlu0 %1814, %v1489
        %v1816 = vpop.permute.xlu0 %1815
        %1819 = vset.pattern.permute.xlu0 0
        %1820 = vperm.xlu0 %1819, %v1490
        %v1821 = vpop.permute.xlu0 %1820
        %1824 = vset.pattern.permute.xlu0 0
        %1825 = vperm.xlu0 %1824, %v1491
        %v1826 = vpop.permute.xlu0 %1825
        %1829 = vset.pattern.permute.xlu0 0
        %1830 = vperm.xlu0 %1829, %v1492
        %v1831 = vpop.permute.xlu0 %1830
        %1834 = vset.pattern.permute.xlu0 0
        %1835 = vperm.xlu0 %1834, %v1493
        %v1836 = vpop.permute.xlu0 %1835
        %1839 = vset.pattern.permute.xlu0 0
        %1840 = vperm.xlu0 %1839, %v1494
        %v1841 = vpop.permute.xlu0 %1840
        %1844 = vset.pattern.permute.xlu0 0
        %1845 = vperm.xlu0 %1844, %v1495
        %v1846 = vpop.permute.xlu0 %1845
        %1849 = vset.pattern.permute.xlu0 0
        %1850 = vperm.xlu0 %1849, %v1496
        %v1851 = vpop.permute.xlu0 %1850
        %1854 = vset.pattern.permute.xlu0 0
        %1855 = vperm.xlu0 %1854, %v1497
        %v1856 = vpop.permute.xlu0 %1855
        %1859 = vset.pattern.permute.xlu0 0
        %1860 = vperm.xlu0 %1859, %v1498
        %v1861 = vpop.permute.xlu0 %1860
        %1864 = vset.pattern.permute.xlu0 0
        %1865 = vperm.xlu0 %1864, %v1499
        %v1866 = vpop.permute.xlu0 %1865
        %1869 = vset.pattern.permute.xlu0 0
        %1870 = vperm.xlu0 %1869, %v1500
        %v1871 = vpop.permute.xlu0 %1870
        %1874 = vset.pattern.permute.xlu0 0
        %1875 = vperm.xlu0 %1874, %v1501
        %v1876 = vpop.permute.xlu0 %1875
        %1879 = vset.pattern.permute.xlu0 0
        %1880 = vperm.xlu0 %1879, %v1502
        %v1881 = vpop.permute.xlu0 %1880
        %1884 = vset.pattern.permute.xlu0 0
        %1885 = vperm.xlu0 %1884, %v1503
        %v1886 = vpop.permute.xlu0 %1885
        %1889 = vset.pattern.permute.xlu0 0
        %1890 = vperm.xlu0 %1889, %v1504
        %v1891 = vpop.permute.xlu0 %1890
        %1894 = vset.pattern.permute.xlu0 0
        %1895 = vperm.xlu0 %1894, %v1505
        %v1896 = vpop.permute.xlu0 %1895
        %1899 = vset.pattern.permute.xlu0 0
        %1900 = vperm.xlu0 %1899, %v1506
        %v1901 = vpop.permute.xlu0 %1900
        %1904 = vset.pattern.permute.xlu0 0
        %1905 = vperm.xlu0 %1904, %v1507
        %v1906 = vpop.permute.xlu0 %1905
        %1909 = vset.pattern.permute.xlu0 0
        %1910 = vperm.xlu0 %1909, %v1508
        %v1911 = vpop.permute.xlu0 %1910
        %1914 = vset.pattern.permute.xlu0 0
        %1915 = vperm.xlu0 %1914, %v1509
        %v1916 = vpop.permute.xlu0 %1915
        %1919 = vset.pattern.permute.xlu0 0
        %1920 = vperm.xlu0 %1919, %v1510
        %v1921 = vpop.permute.xlu0 %1920
        %1924 = vset.pattern.permute.xlu0 0
        %1925 = vperm.xlu0 %1924, %v1511
        %v1926 = vpop.permute.xlu0 %1925
        %1929 = vset.pattern.permute.xlu0 0
        %1930 = vperm.xlu0 %1929, %v1512
        %v1931 = vpop.permute.xlu0 %1930
        %1934 = vset.pattern.permute.xlu0 0
        %1935 = vperm.xlu0 %1934, %v1513
        %v1936 = vpop.permute.xlu0 %1935
        %1939 = vset.pattern.permute.xlu0 0
        %1940 = vperm.xlu0 %1939, %v1514
        %v1941 = vpop.permute.xlu0 %1940
        %1944 = vset.pattern.permute.xlu0 0
        %1945 = vperm.xlu0 %1944, %v1515
        %v1946 = vpop.permute.xlu0 %1945
        %1949 = vset.pattern.permute.xlu0 0
        %1950 = vperm.xlu0 %1949, %v1516
        %v1951 = vpop.permute.xlu0 %1950
        %1954 = vset.pattern.permute.xlu0 0
        %1955 = vperm.xlu0 %1954, %v1517
        %v1956 = vpop.permute.xlu0 %1955
        %1959 = vset.pattern.permute.xlu0 0
        %1960 = vperm.xlu0 %1959, %v1518
        %v1961 = vpop.permute.xlu0 %1960
        %1964 = vset.pattern.permute.xlu0 0
        %1965 = vperm.xlu0 %1964, %v1519
        %v1966 = vpop.permute.xlu0 %1965
        %1969 = vset.pattern.permute.xlu0 0
        %1970 = vperm.xlu0 %1969, %v1520
        %v1971 = vpop.permute.xlu0 %1970
        %1974 = vset.pattern.permute.xlu0 0
        %1975 = vperm.xlu0 %1974, %v1521
        %v1976 = vpop.permute.xlu0 %1975
        %1979 = vset.pattern.permute.xlu0 0
        %1980 = vperm.xlu0 %1979, %v1522
        %v1981 = vpop.permute.xlu0 %1980
        %1984 = vset.pattern.permute.xlu0 0
        %1985 = vperm.xlu0 %1984, %v1523
        %v1986 = vpop.permute.xlu0 %1985
        %1989 = vset.pattern.permute.xlu0 0
        %1990 = vperm.xlu0 %1989, %v1524
        %v1991 = vpop.permute.xlu0 %1990
        %1994 = vset.pattern.permute.xlu0 0
        %1995 = vperm.xlu0 %1994, %v1525
        %v1996 = vpop.permute.xlu0 %1995
        %1999 = vset.pattern.permute.xlu0 0
        %2000 = vperm.xlu0 %1999, %v1526
        %v2001 = vpop.permute.xlu0 %2000
        %2004 = vset.pattern.permute.xlu0 0
        %2005 = vperm.xlu0 %2004, %v1527
        %v2006 = vpop.permute.xlu0 %2005
        %v2008 = vsub.f32 %v1768, %v1811
        %v2009 = vsub.f32 %v1769, %v1816
        %v2010 = vsub.f32 %v1770, %v1821
        %v2011 = vsub.f32 %v1771, %v1826
        %v2012 = vsub.f32 %v1772, %v1831
        %v2013 = vsub.f32 %v1773, %v1836
        %v2014 = vsub.f32 %v1774, %v1841
        %v2015 = vsub.f32 %v1775, %v1846
        %v2016 = vsub.f32 %v1776, %v1851
        %v2017 = vsub.f32 %v1777, %v1856
        %v2018 = vsub.f32 %v1778, %v1861
        %v2019 = vsub.f32 %v1779, %v1866
        %v2020 = vsub.f32 %v1780, %v1871
        %v2021 = vsub.f32 %v1781, %v1876
        %v2022 = vsub.f32 %v1782, %v1881
        %v2023 = vsub.f32 %v1783, %v1886
        %v2024 = vsub.f32 %v1784, %v1891
        %v2025 = vsub.f32 %v1785, %v1896
        %v2026 = vsub.f32 %v1786, %v1901
        %v2027 = vsub.f32 %v1787, %v1906
        %v2028 = vsub.f32 %v1788, %v1911
        %v2029 = vsub.f32 %v1789, %v1916
        %v2030 = vsub.f32 %v1790, %v1921
        %v2031 = vsub.f32 %v1791, %v1926
        %v2032 = vsub.f32 %v1792, %v1931
        %v2033 = vsub.f32 %v1793, %v1936
        %v2034 = vsub.f32 %v1794, %v1941
        %v2035 = vsub.f32 %v1795, %v1946
        %v2036 = vsub.f32 %v1796, %v1951
        %v2037 = vsub.f32 %v1797, %v1956
        %v2038 = vsub.f32 %v1798, %v1961
        %v2039 = vsub.f32 %v1799, %v1966
        %v2040 = vsub.f32 %v1800, %v1971
        %v2041 = vsub.f32 %v1801, %v1976
        %v2042 = vsub.f32 %v1802, %v1981
        %v2043 = vsub.f32 %v1803, %v1986
        %v2044 = vsub.f32 %v1804, %v1991
        %v2045 = vsub.f32 %v1805, %v1996
        %v2046 = vsub.f32 %v1806, %v2001
        %v2047 = vsub.f32 %v1807, %v2006
        %v2048 = vtanh.pop %v2008
        %v2049 = vtanh.pop %v2009
        %v2050 = vtanh.pop %v2010
        %v2051 = vtanh.pop %v2011
        %v2052 = vtanh.pop %v2012
        %v2053 = vtanh.pop %v2013
        %v2054 = vtanh.pop %v2014
        %v2055 = vtanh.pop %v2015
        %v2056 = vtanh.pop %v2016
        %v2057 = vtanh.pop %v2017
        %v2058 = vtanh.pop %v2018
        %v2059 = vtanh.pop %v2019
        %v2060 = vtanh.pop %v2020
        %v2061 = vtanh.pop %v2021
        %v2062 = vtanh.pop %v2022
        %v2063 = vtanh.pop %v2023
        %v2064 = vtanh.pop %v2024
        %v2065 = vtanh.pop %v2025
        %v2066 = vtanh.pop %v2026
        %v2067 = vtanh.pop %v2027
        %v2068 = vtanh.pop %v2028
        %v2069 = vtanh.pop %v2029
        %v2070 = vtanh.pop %v2030
        %v2071 = vtanh.pop %v2031
        %v2072 = vtanh.pop %v2032
        %v2073 = vtanh.pop %v2033
        %v2074 = vtanh.pop %v2034
        %v2075 = vtanh.pop %v2035
        %v2076 = vtanh.pop %v2036
        %v2077 = vtanh.pop %v2037
        %v2078 = vtanh.pop %v2038
        %v2079 = vtanh.pop %v2039
        %v2080 = vtanh.pop %v2040
        %v2081 = vtanh.pop %v2041
        %v2082 = vtanh.pop %v2042
        %v2083 = vtanh.pop %v2043
        %v2084 = vtanh.pop %v2044
        %v2085 = vtanh.pop %v2045
        %v2086 = vtanh.pop %v2046
        %v2087 = vtanh.pop %v2047
        %2089 = vset.pattern.permute.xlu0 0
        %2090 = vperm.xlu0 %2089, %v1528
        %v2091 = vpop.permute.xlu0 %2090
        %2094 = vset.pattern.permute.xlu0 0
        %2095 = vperm.xlu0 %2094, %v1529
        %v2096 = vpop.permute.xlu0 %2095
        %2099 = vset.pattern.permute.xlu0 0
        %2100 = vperm.xlu0 %2099, %v1530
        %v2101 = vpop.permute.xlu0 %2100
        %2104 = vset.pattern.permute.xlu0 0
        %2105 = vperm.xlu0 %2104, %v1531
        %v2106 = vpop.permute.xlu0 %2105
        %2109 = vset.pattern.permute.xlu0 0
        %2110 = vperm.xlu0 %2109, %v1532
        %v2111 = vpop.permute.xlu0 %2110
        %2114 = vset.pattern.permute.xlu0 0
        %2115 = vperm.xlu0 %2114, %v1533
        %v2116 = vpop.permute.xlu0 %2115
        %2119 = vset.pattern.permute.xlu0 0
        %2120 = vperm.xlu0 %2119, %v1534
        %v2121 = vpop.permute.xlu0 %2120
        %2124 = vset.pattern.permute.xlu0 0
        %2125 = vperm.xlu0 %2124, %v1535
        %v2126 = vpop.permute.xlu0 %2125
        %2129 = vset.pattern.permute.xlu0 0
        %2130 = vperm.xlu0 %2129, %v1536
        %v2131 = vpop.permute.xlu0 %2130
        %2134 = vset.pattern.permute.xlu0 0
        %2135 = vperm.xlu0 %2134, %v1537
        %v2136 = vpop.permute.xlu0 %2135
        %2139 = vset.pattern.permute.xlu0 0
        %2140 = vperm.xlu0 %2139, %v1538
        %v2141 = vpop.permute.xlu0 %2140
        %2144 = vset.pattern.permute.xlu0 0
        %2145 = vperm.xlu0 %2144, %v1539
        %v2146 = vpop.permute.xlu0 %2145
        %2149 = vset.pattern.permute.xlu0 0
        %2150 = vperm.xlu0 %2149, %v1540
        %v2151 = vpop.permute.xlu0 %2150
        %2154 = vset.pattern.permute.xlu0 0
        %2155 = vperm.xlu0 %2154, %v1541
        %v2156 = vpop.permute.xlu0 %2155
        %2159 = vset.pattern.permute.xlu0 0
        %2160 = vperm.xlu0 %2159, %v1542
        %v2161 = vpop.permute.xlu0 %2160
        %2164 = vset.pattern.permute.xlu0 0
        %2165 = vperm.xlu0 %2164, %v1543
        %v2166 = vpop.permute.xlu0 %2165
        %2169 = vset.pattern.permute.xlu0 0
        %2170 = vperm.xlu0 %2169, %v1544
        %v2171 = vpop.permute.xlu0 %2170
        %2174 = vset.pattern.permute.xlu0 0
        %2175 = vperm.xlu0 %2174, %v1545
        %v2176 = vpop.permute.xlu0 %2175
        %2179 = vset.pattern.permute.xlu0 0
        %2180 = vperm.xlu0 %2179, %v1546
        %v2181 = vpop.permute.xlu0 %2180
        %2184 = vset.pattern.permute.xlu0 0
        %2185 = vperm.xlu0 %2184, %v1547
        %v2186 = vpop.permute.xlu0 %2185
        %2189 = vset.pattern.permute.xlu0 0
        %2190 = vperm.xlu0 %2189, %v1548
        %v2191 = vpop.permute.xlu0 %2190
        %2194 = vset.pattern.permute.xlu0 0
        %2195 = vperm.xlu0 %2194, %v1549
        %v2196 = vpop.permute.xlu0 %2195
        %2199 = vset.pattern.permute.xlu0 0
        %2200 = vperm.xlu0 %2199, %v1550
        %v2201 = vpop.permute.xlu0 %2200
        %2204 = vset.pattern.permute.xlu0 0
        %2205 = vperm.xlu0 %2204, %v1551
        %v2206 = vpop.permute.xlu0 %2205
        %2209 = vset.pattern.permute.xlu0 0
        %2210 = vperm.xlu0 %2209, %v1552
        %v2211 = vpop.permute.xlu0 %2210
        %2214 = vset.pattern.permute.xlu0 0
        %2215 = vperm.xlu0 %2214, %v1553
        %v2216 = vpop.permute.xlu0 %2215
        %2219 = vset.pattern.permute.xlu0 0
        %2220 = vperm.xlu0 %2219, %v1554
        %v2221 = vpop.permute.xlu0 %2220
        %2224 = vset.pattern.permute.xlu0 0
        %2225 = vperm.xlu0 %2224, %v1555
        %v2226 = vpop.permute.xlu0 %2225
        %2229 = vset.pattern.permute.xlu0 0
        %2230 = vperm.xlu0 %2229, %v1556
        %v2231 = vpop.permute.xlu0 %2230
        %2234 = vset.pattern.permute.xlu0 0
        %2235 = vperm.xlu0 %2234, %v1557
        %v2236 = vpop.permute.xlu0 %2235
        %2239 = vset.pattern.permute.xlu0 0
        %2240 = vperm.xlu0 %2239, %v1558
        %v2241 = vpop.permute.xlu0 %2240
        %2244 = vset.pattern.permute.xlu0 0
        %2245 = vperm.xlu0 %2244, %v1559
        %v2246 = vpop.permute.xlu0 %2245
        %2249 = vset.pattern.permute.xlu0 0
        %2250 = vperm.xlu0 %2249, %v1560
        %v2251 = vpop.permute.xlu0 %2250
        %2254 = vset.pattern.permute.xlu0 0
        %2255 = vperm.xlu0 %2254, %v1561
        %v2256 = vpop.permute.xlu0 %2255
        %2259 = vset.pattern.permute.xlu0 0
        %2260 = vperm.xlu0 %2259, %v1562
        %v2261 = vpop.permute.xlu0 %2260
        %2264 = vset.pattern.permute.xlu0 0
        %2265 = vperm.xlu0 %2264, %v1563
        %v2266 = vpop.permute.xlu0 %2265
        %2269 = vset.pattern.permute.xlu0 0
        %2270 = vperm.xlu0 %2269, %v1564
        %v2271 = vpop.permute.xlu0 %2270
        %2274 = vset.pattern.permute.xlu0 0
        %2275 = vperm.xlu0 %2274, %v1565
        %v2276 = vpop.permute.xlu0 %2275
        %2279 = vset.pattern.permute.xlu0 0
        %2280 = vperm.xlu0 %2279, %v1566
        %v2281 = vpop.permute.xlu0 %2280
        %2284 = vset.pattern.permute.xlu0 0
        %2285 = vperm.xlu0 %2284, %v1567
        %v2286 = vpop.permute.xlu0 %2285
        %v2288 = vmul.f32 %v2091, %v2048
        %v2289 = vmul.f32 %v2096, %v2049
        %v2290 = vmul.f32 %v2101, %v2050
        %v2291 = vmul.f32 %v2106, %v2051
        %v2292 = vmul.f32 %v2111, %v2052
        %v2293 = vmul.f32 %v2116, %v2053
        %v2294 = vmul.f32 %v2121, %v2054
        %v2295 = vmul.f32 %v2126, %v2055
        %v2296 = vmul.f32 %v2131, %v2056
        %v2297 = vmul.f32 %v2136, %v2057
        %v2298 = vmul.f32 %v2141, %v2058
        %v2299 = vmul.f32 %v2146, %v2059
        %v2300 = vmul.f32 %v2151, %v2060
        %v2301 = vmul.f32 %v2156, %v2061
        %v2302 = vmul.f32 %v2161, %v2062
        %v2303 = vmul.f32 %v2166, %v2063
        %v2304 = vmul.f32 %v2171, %v2064
        %v2305 = vmul.f32 %v2176, %v2065
        %v2306 = vmul.f32 %v2181, %v2066
        %v2307 = vmul.f32 %v2186, %v2067
        %v2308 = vmul.f32 %v2191, %v2068
        %v2309 = vmul.f32 %v2196, %v2069
        %v2310 = vmul.f32 %v2201, %v2070
        %v2311 = vmul.f32 %v2206, %v2071
        %v2312 = vmul.f32 %v2211, %v2072
        %v2313 = vmul.f32 %v2216, %v2073
        %v2314 = vmul.f32 %v2221, %v2074
        %v2315 = vmul.f32 %v2226, %v2075
        %v2316 = vmul.f32 %v2231, %v2076
        %v2317 = vmul.f32 %v2236, %v2077
        %v2318 = vmul.f32 %v2241, %v2078
        %v2319 = vmul.f32 %v2246, %v2079
        %v2320 = vmul.f32 %v2251, %v2080
        %v2321 = vmul.f32 %v2256, %v2081
        %v2322 = vmul.f32 %v2261, %v2082
        %v2323 = vmul.f32 %v2266, %v2083
        %v2324 = vmul.f32 %v2271, %v2084
        %v2325 = vmul.f32 %v2276, %v2085
        %v2326 = vmul.f32 %v2281, %v2086
        %v2327 = vmul.f32 %v2286, %v2087
        %v2328 = vadd.f32 %v2288, %v2289
        %v2329 = vadd.f32 %v2328, %v2290
        %v2330 = vadd.f32 %v2329, %v2291
        %v2331 = vrot.slane %v2330, 4
        %v2332 = vadd.f32 %v2330, %v2331
        %v2333 = vrot.slane %v2332, 2
        %v2334 = vadd.f32 %v2332, %v2333
        %v2335 = vrot.slane %v2334, 1
        %v2336 = vadd.f32 %v2334, %v2335
        %v2337 = vadd.f32 %v2292, %v2293
        %v2338 = vadd.f32 %v2337, %v2294
        %v2339 = vadd.f32 %v2338, %v2295
        %v2340 = vrot.slane %v2339, 4
        %v2341 = vadd.f32 %v2339, %v2340
        %v2342 = vrot.slane %v2341, 2
        %v2343 = vadd.f32 %v2341, %v2342
        %v2344 = vrot.slane %v2343, 1
        %v2345 = vadd.f32 %v2343, %v2344
        %v2346 = vadd.f32 %v2296, %v2297
        %v2347 = vadd.f32 %v2346, %v2298
        %v2348 = vadd.f32 %v2347, %v2299
        %v2349 = vrot.slane %v2348, 4
        %v2350 = vadd.f32 %v2348, %v2349
        %v2351 = vrot.slane %v2350, 2
        %v2352 = vadd.f32 %v2350, %v2351
        %v2353 = vrot.slane %v2352, 1
        %v2354 = vadd.f32 %v2352, %v2353
        %v2355 = vadd.f32 %v2300, %v2301
        %v2356 = vadd.f32 %v2355, %v2302
        %v2357 = vadd.f32 %v2356, %v2303
        %v2358 = vrot.slane %v2357, 4
        %v2359 = vadd.f32 %v2357, %v2358
        %v2360 = vrot.slane %v2359, 2
        %v2361 = vadd.f32 %v2359, %v2360
        %v2362 = vrot.slane %v2361, 1
        %v2363 = vadd.f32 %v2361, %v2362
        %v2364 = vadd.f32 %v2304, %v2305
        %v2365 = vadd.f32 %v2364, %v2306
        %v2366 = vadd.f32 %v2365, %v2307
        %v2367 = vrot.slane %v2366, 4
        %v2368 = vadd.f32 %v2366, %v2367
        %v2369 = vrot.slane %v2368, 2
        %v2370 = vadd.f32 %v2368, %v2369
        %v2371 = vrot.slane %v2370, 1
        %v2372 = vadd.f32 %v2370, %v2371
        %v2373 = vadd.f32 %v2308, %v2309
        %v2374 = vadd.f32 %v2373, %v2310
        %v2375 = vadd.f32 %v2374, %v2311
        %v2376 = vrot.slane %v2375, 4
        %v2377 = vadd.f32 %v2375, %v2376
        %v2378 = vrot.slane %v2377, 2
        %v2379 = vadd.f32 %v2377, %v2378
        %v2380 = vrot.slane %v2379, 1
        %v2381 = vadd.f32 %v2379, %v2380
        %v2382 = vadd.f32 %v2312, %v2313
        %v2383 = vadd.f32 %v2382, %v2314
        %v2384 = vadd.f32 %v2383, %v2315
        %v2385 = vrot.slane %v2384, 4
        %v2386 = vadd.f32 %v2384, %v2385
        %v2387 = vrot.slane %v2386, 2
        %v2388 = vadd.f32 %v2386, %v2387
        %v2389 = vrot.slane %v2388, 1
        %v2390 = vadd.f32 %v2388, %v2389
        %v2391 = vadd.f32 %v2316, %v2317
        %v2392 = vadd.f32 %v2391, %v2318
        %v2393 = vadd.f32 %v2392, %v2319
        %v2394 = vrot.slane %v2393, 4
        %v2395 = vadd.f32 %v2393, %v2394
        %v2396 = vrot.slane %v2395, 2
        %v2397 = vadd.f32 %v2395, %v2396
        %v2398 = vrot.slane %v2397, 1
        %v2399 = vadd.f32 %v2397, %v2398
        %v2400 = vadd.f32 %v2320, %v2321
        %v2401 = vadd.f32 %v2400, %v2322
        %v2402 = vadd.f32 %v2401, %v2323
        %v2403 = vrot.slane %v2402, 4
        %v2404 = vadd.f32 %v2402, %v2403
        %v2405 = vrot.slane %v2404, 2
        %v2406 = vadd.f32 %v2404, %v2405
        %v2407 = vrot.slane %v2406, 1
        %v2408 = vadd.f32 %v2406, %v2407
        %v2409 = vadd.f32 %v2324, %v2325
        %v2410 = vadd.f32 %v2409, %v2326
        %v2411 = vadd.f32 %v2410, %v2327
        %v2412 = vrot.slane %v2411, 4
        %v2413 = vadd.f32 %v2411, %v2412
        %v2414 = vrot.slane %v2413, 2
        %v2415 = vadd.f32 %v2413, %v2414
        %v2416 = vrot.slane %v2415, 1
        %v2417 = vadd.f32 %v2415, %v2416
        %v2428 = vsel %vm1346, %v2345, %v2336
        %v2429 = vsel %vm1348, %v2354, %v2428
        %v2430 = vsel %vm1350, %v2363, %v2429
        %v2431 = vsel %vm1352, %v2372, %v2430
        %v2432 = vsel %vm1354, %v2381, %v2431
        %v2433 = vsel %vm1356, %v2390, %v2432
        %v2434 = vsel %vm1358, %v2399, %v2433
        %v2435 = vsel %vm1346, %v2417, %v2408
        %v2438 = vadd.f32 %v1363, %v2434
        %v2439 = vadd.f32 %v1364, %v2435
        %s2440 = scalar_lea.vmem %s1, 640
        %v2441 = vld [vmem:[%s2440] sm:$0xff]
        %v2442 = vld [vmem:[%s2440 + $0x8] sm:$0xff]
        %v2443 = vld [vmem:[%s2440 + $0x10] sm:$0xff]
        %v2444 = vld [vmem:[%s2440 + $0x18] sm:$0xff]
        %v2445 = vld [vmem:[%s2440 + $0x20] sm:$0xff]
        %v2446 = vld [vmem:[%s2440 + $0x28] sm:$0xff]
        %v2447 = vld [vmem:[%s2440 + $0x30] sm:$0xff]
        %v2448 = vld [vmem:[%s2440 + $0x38] sm:$0xff]
        %v2449 = vld [vmem:[%s2440 + $0x40] sm:$0xff]
        %v2450 = vld [vmem:[%s2440 + $0x48] sm:$0xff]
        %v2451 = vld [vmem:[%s2440 + $0x50] sm:$0xff]
        %v2452 = vld [vmem:[%s2440 + $0x58] sm:$0xff]
        %v2453 = vld [vmem:[%s2440 + $0x60] sm:$0xff]
        %v2454 = vld [vmem:[%s2440 + $0x68] sm:$0xff]
        %v2455 = vld [vmem:[%s2440 + $0x70] sm:$0xff]
        %v2456 = vld [vmem:[%s2440 + $0x78] sm:$0xff]
        %v2457 = vld [vmem:[%s2440 + $0x80] sm:$0xff]
        %v2458 = vld [vmem:[%s2440 + $0x88] sm:$0xff]
        %v2459 = vld [vmem:[%s2440 + $0x90] sm:$0xff]
        %v2460 = vld [vmem:[%s2440 + $0x98] sm:$0xff]
        %v2461 = vld [vmem:[%s2440 + $0xa0] sm:$0xff]
        %v2462 = vld [vmem:[%s2440 + $0xa8] sm:$0xff]
        %v2463 = vld [vmem:[%s2440 + $0xb0] sm:$0xff]
        %v2464 = vld [vmem:[%s2440 + $0xb8] sm:$0xff]
        %v2465 = vld [vmem:[%s2440 + $0xc0] sm:$0xff]
        %v2466 = vld [vmem:[%s2440 + $0xc8] sm:$0xff]
        %v2467 = vld [vmem:[%s2440 + $0xd0] sm:$0xff]
        %v2468 = vld [vmem:[%s2440 + $0xd8] sm:$0xff]
        %v2469 = vld [vmem:[%s2440 + $0xe0] sm:$0xff]
        %v2470 = vld [vmem:[%s2440 + $0xe8] sm:$0xff]
        %v2471 = vld [vmem:[%s2440 + $0xf0] sm:$0xff]
        %v2472 = vld [vmem:[%s2440 + $0xf8] sm:$0xff]
        %v2473 = vld [vmem:[%s2440 + $0x100] sm:$0xff]
        %v2474 = vld [vmem:[%s2440 + $0x108] sm:$0xff]
        %v2475 = vld [vmem:[%s2440 + $0x110] sm:$0xff]
        %v2476 = vld [vmem:[%s2440 + $0x118] sm:$0xff]
        %v2477 = vld [vmem:[%s2440 + $0x120] sm:$0xff]
        %v2478 = vld [vmem:[%s2440 + $0x128] sm:$0xff]
        %v2479 = vld [vmem:[%s2440 + $0x130] sm:$0xff]
        %v2480 = vld [vmem:[%s2440 + $0x138] sm:$0xff]
        %s2481 = scalar_lea.vmem %s2, 640
        %v2482 = vld [vmem:[%s2481] sm:$0xff]
        %v2483 = vld [vmem:[%s2481 + $0x8] sm:$0xff]
        %v2484 = vld [vmem:[%s2481 + $0x10] sm:$0xff]
        %v2485 = vld [vmem:[%s2481 + $0x18] sm:$0xff]
        %v2486 = vld [vmem:[%s2481 + $0x20] sm:$0xff]
        %v2487 = vld [vmem:[%s2481 + $0x28] sm:$0xff]
        %v2488 = vld [vmem:[%s2481 + $0x30] sm:$0xff]
        %v2489 = vld [vmem:[%s2481 + $0x38] sm:$0xff]
        %v2490 = vld [vmem:[%s2481 + $0x40] sm:$0xff]
        %v2491 = vld [vmem:[%s2481 + $0x48] sm:$0xff]
        %v2492 = vld [vmem:[%s2481 + $0x50] sm:$0xff]
        %v2493 = vld [vmem:[%s2481 + $0x58] sm:$0xff]
        %v2494 = vld [vmem:[%s2481 + $0x60] sm:$0xff]
        %v2495 = vld [vmem:[%s2481 + $0x68] sm:$0xff]
        %v2496 = vld [vmem:[%s2481 + $0x70] sm:$0xff]
        %v2497 = vld [vmem:[%s2481 + $0x78] sm:$0xff]
        %v2498 = vld [vmem:[%s2481 + $0x80] sm:$0xff]
        %v2499 = vld [vmem:[%s2481 + $0x88] sm:$0xff]
        %v2500 = vld [vmem:[%s2481 + $0x90] sm:$0xff]
        %v2501 = vld [vmem:[%s2481 + $0x98] sm:$0xff]
        %v2502 = vld [vmem:[%s2481 + $0xa0] sm:$0xff]
        %v2503 = vld [vmem:[%s2481 + $0xa8] sm:$0xff]
        %v2504 = vld [vmem:[%s2481 + $0xb0] sm:$0xff]
        %v2505 = vld [vmem:[%s2481 + $0xb8] sm:$0xff]
        %v2506 = vld [vmem:[%s2481 + $0xc0] sm:$0xff]
        %v2507 = vld [vmem:[%s2481 + $0xc8] sm:$0xff]
        %v2508 = vld [vmem:[%s2481 + $0xd0] sm:$0xff]
        %v2509 = vld [vmem:[%s2481 + $0xd8] sm:$0xff]
        %v2510 = vld [vmem:[%s2481 + $0xe0] sm:$0xff]
        %v2511 = vld [vmem:[%s2481 + $0xe8] sm:$0xff]
        %v2512 = vld [vmem:[%s2481 + $0xf0] sm:$0xff]
        %v2513 = vld [vmem:[%s2481 + $0xf8] sm:$0xff]
        %v2514 = vld [vmem:[%s2481 + $0x100] sm:$0xff]
        %v2515 = vld [vmem:[%s2481 + $0x108] sm:$0xff]
        %v2516 = vld [vmem:[%s2481 + $0x110] sm:$0xff]
        %v2517 = vld [vmem:[%s2481 + $0x118] sm:$0xff]
        %v2518 = vld [vmem:[%s2481 + $0x120] sm:$0xff]
        %v2519 = vld [vmem:[%s2481 + $0x128] sm:$0xff]
        %v2520 = vld [vmem:[%s2481 + $0x130] sm:$0xff]
        %v2521 = vld [vmem:[%s2481 + $0x138] sm:$0xff]
        %s2522 = scalar_lea.vmem %s3, 640
        %v2523 = vld [vmem:[%s2522] sm:$0xff]
        %v2524 = vld [vmem:[%s2522 + $0x8] sm:$0xff]
        %v2525 = vld [vmem:[%s2522 + $0x10] sm:$0xff]
        %v2526 = vld [vmem:[%s2522 + $0x18] sm:$0xff]
        %v2527 = vld [vmem:[%s2522 + $0x20] sm:$0xff]
        %v2528 = vld [vmem:[%s2522 + $0x28] sm:$0xff]
        %v2529 = vld [vmem:[%s2522 + $0x30] sm:$0xff]
        %v2530 = vld [vmem:[%s2522 + $0x38] sm:$0xff]
        %v2531 = vld [vmem:[%s2522 + $0x40] sm:$0xff]
        %v2532 = vld [vmem:[%s2522 + $0x48] sm:$0xff]
        %v2533 = vld [vmem:[%s2522 + $0x50] sm:$0xff]
        %v2534 = vld [vmem:[%s2522 + $0x58] sm:$0xff]
        %v2535 = vld [vmem:[%s2522 + $0x60] sm:$0xff]
        %v2536 = vld [vmem:[%s2522 + $0x68] sm:$0xff]
        %v2537 = vld [vmem:[%s2522 + $0x70] sm:$0xff]
        %v2538 = vld [vmem:[%s2522 + $0x78] sm:$0xff]
        %v2539 = vld [vmem:[%s2522 + $0x80] sm:$0xff]
        %v2540 = vld [vmem:[%s2522 + $0x88] sm:$0xff]
        %v2541 = vld [vmem:[%s2522 + $0x90] sm:$0xff]
        %v2542 = vld [vmem:[%s2522 + $0x98] sm:$0xff]
        %v2543 = vld [vmem:[%s2522 + $0xa0] sm:$0xff]
        %v2544 = vld [vmem:[%s2522 + $0xa8] sm:$0xff]
        %v2545 = vld [vmem:[%s2522 + $0xb0] sm:$0xff]
        %v2546 = vld [vmem:[%s2522 + $0xb8] sm:$0xff]
        %v2547 = vld [vmem:[%s2522 + $0xc0] sm:$0xff]
        %v2548 = vld [vmem:[%s2522 + $0xc8] sm:$0xff]
        %v2549 = vld [vmem:[%s2522 + $0xd0] sm:$0xff]
        %v2550 = vld [vmem:[%s2522 + $0xd8] sm:$0xff]
        %v2551 = vld [vmem:[%s2522 + $0xe0] sm:$0xff]
        %v2552 = vld [vmem:[%s2522 + $0xe8] sm:$0xff]
        %v2553 = vld [vmem:[%s2522 + $0xf0] sm:$0xff]
        %v2554 = vld [vmem:[%s2522 + $0xf8] sm:$0xff]
        %v2555 = vld [vmem:[%s2522 + $0x100] sm:$0xff]
        %v2556 = vld [vmem:[%s2522 + $0x108] sm:$0xff]
        %v2557 = vld [vmem:[%s2522 + $0x110] sm:$0xff]
        %v2558 = vld [vmem:[%s2522 + $0x118] sm:$0xff]
        %v2559 = vld [vmem:[%s2522 + $0x120] sm:$0xff]
        %v2560 = vld [vmem:[%s2522 + $0x128] sm:$0xff]
        %v2561 = vld [vmem:[%s2522 + $0x130] sm:$0xff]
        %v2562 = vld [vmem:[%s2522 + $0x138] sm:$0xff]
        %v2563 = vmul.f32 %v2441, %v2482
        %v2564 = vmul.f32 %v2442, %v2483
        %v2565 = vmul.f32 %v2443, %v2484
        %v2566 = vmul.f32 %v2444, %v2485
        %v2567 = vmul.f32 %v2445, %v2486
        %v2568 = vmul.f32 %v2446, %v2487
        %v2569 = vmul.f32 %v2447, %v2488
        %v2570 = vmul.f32 %v2448, %v2489
        %v2571 = vmul.f32 %v2449, %v2490
        %v2572 = vmul.f32 %v2450, %v2491
        %v2573 = vmul.f32 %v2451, %v2492
        %v2574 = vmul.f32 %v2452, %v2493
        %v2575 = vmul.f32 %v2453, %v2494
        %v2576 = vmul.f32 %v2454, %v2495
        %v2577 = vmul.f32 %v2455, %v2496
        %v2578 = vmul.f32 %v2456, %v2497
        %v2579 = vmul.f32 %v2457, %v2498
        %v2580 = vmul.f32 %v2458, %v2499
        %v2581 = vmul.f32 %v2459, %v2500
        %v2582 = vmul.f32 %v2460, %v2501
        %v2583 = vmul.f32 %v2461, %v2502
        %v2584 = vmul.f32 %v2462, %v2503
        %v2585 = vmul.f32 %v2463, %v2504
        %v2586 = vmul.f32 %v2464, %v2505
        %v2587 = vmul.f32 %v2465, %v2506
        %v2588 = vmul.f32 %v2466, %v2507
        %v2589 = vmul.f32 %v2467, %v2508
        %v2590 = vmul.f32 %v2468, %v2509
        %v2591 = vmul.f32 %v2469, %v2510
        %v2592 = vmul.f32 %v2470, %v2511
        %v2593 = vmul.f32 %v2471, %v2512
        %v2594 = vmul.f32 %v2472, %v2513
        %v2595 = vmul.f32 %v2473, %v2514
        %v2596 = vmul.f32 %v2474, %v2515
        %v2597 = vmul.f32 %v2475, %v2516
        %v2598 = vmul.f32 %v2476, %v2517
        %v2599 = vmul.f32 %v2477, %v2518
        %v2600 = vmul.f32 %v2478, %v2519
        %v2601 = vmul.f32 %v2479, %v2520
        %v2602 = vmul.f32 %v2480, %v2521
        %v2603 = vmul.f32 %v2523, %v2523
        %v2604 = vmul.f32 %v2524, %v2524
        %v2605 = vmul.f32 %v2525, %v2525
        %v2606 = vmul.f32 %v2526, %v2526
        %v2607 = vmul.f32 %v2527, %v2527
        %v2608 = vmul.f32 %v2528, %v2528
        %v2609 = vmul.f32 %v2529, %v2529
        %v2610 = vmul.f32 %v2530, %v2530
        %v2611 = vmul.f32 %v2531, %v2531
        %v2612 = vmul.f32 %v2532, %v2532
        %v2613 = vmul.f32 %v2533, %v2533
        %v2614 = vmul.f32 %v2534, %v2534
        %v2615 = vmul.f32 %v2535, %v2535
        %v2616 = vmul.f32 %v2536, %v2536
        %v2617 = vmul.f32 %v2537, %v2537
        %v2618 = vmul.f32 %v2538, %v2538
        %v2619 = vmul.f32 %v2539, %v2539
        %v2620 = vmul.f32 %v2540, %v2540
        %v2621 = vmul.f32 %v2541, %v2541
        %v2622 = vmul.f32 %v2542, %v2542
        %v2623 = vmul.f32 %v2543, %v2543
        %v2624 = vmul.f32 %v2544, %v2544
        %v2625 = vmul.f32 %v2545, %v2545
        %v2626 = vmul.f32 %v2546, %v2546
        %v2627 = vmul.f32 %v2547, %v2547
        %v2628 = vmul.f32 %v2548, %v2548
        %v2629 = vmul.f32 %v2549, %v2549
        %v2630 = vmul.f32 %v2550, %v2550
        %v2631 = vmul.f32 %v2551, %v2551
        %v2632 = vmul.f32 %v2552, %v2552
        %v2633 = vmul.f32 %v2553, %v2553
        %v2634 = vmul.f32 %v2554, %v2554
        %v2635 = vmul.f32 %v2555, %v2555
        %v2636 = vmul.f32 %v2556, %v2556
        %v2637 = vmul.f32 %v2557, %v2557
        %v2638 = vmul.f32 %v2558, %v2558
        %v2639 = vmul.f32 %v2559, %v2559
        %v2640 = vmul.f32 %v2560, %v2560
        %v2641 = vmul.f32 %v2561, %v2561
        %v2642 = vmul.f32 %v2562, %v2562
        %2644 = vset.pattern.permute.xlu0 0
        %2645 = vperm.xlu0 %2644, %v2441
        %v2646 = vpop.permute.xlu0 %2645
        %2649 = vset.pattern.permute.xlu0 0
        %2650 = vperm.xlu0 %2649, %v2442
        %v2651 = vpop.permute.xlu0 %2650
        %2654 = vset.pattern.permute.xlu0 0
        %2655 = vperm.xlu0 %2654, %v2443
        %v2656 = vpop.permute.xlu0 %2655
        %2659 = vset.pattern.permute.xlu0 0
        %2660 = vperm.xlu0 %2659, %v2444
        %v2661 = vpop.permute.xlu0 %2660
        %2664 = vset.pattern.permute.xlu0 0
        %2665 = vperm.xlu0 %2664, %v2445
        %v2666 = vpop.permute.xlu0 %2665
        %2669 = vset.pattern.permute.xlu0 0
        %2670 = vperm.xlu0 %2669, %v2446
        %v2671 = vpop.permute.xlu0 %2670
        %2674 = vset.pattern.permute.xlu0 0
        %2675 = vperm.xlu0 %2674, %v2447
        %v2676 = vpop.permute.xlu0 %2675
        %2679 = vset.pattern.permute.xlu0 0
        %2680 = vperm.xlu0 %2679, %v2448
        %v2681 = vpop.permute.xlu0 %2680
        %2684 = vset.pattern.permute.xlu0 0
        %2685 = vperm.xlu0 %2684, %v2449
        %v2686 = vpop.permute.xlu0 %2685
        %2689 = vset.pattern.permute.xlu0 0
        %2690 = vperm.xlu0 %2689, %v2450
        %v2691 = vpop.permute.xlu0 %2690
        %2694 = vset.pattern.permute.xlu0 0
        %2695 = vperm.xlu0 %2694, %v2451
        %v2696 = vpop.permute.xlu0 %2695
        %2699 = vset.pattern.permute.xlu0 0
        %2700 = vperm.xlu0 %2699, %v2452
        %v2701 = vpop.permute.xlu0 %2700
        %2704 = vset.pattern.permute.xlu0 0
        %2705 = vperm.xlu0 %2704, %v2453
        %v2706 = vpop.permute.xlu0 %2705
        %2709 = vset.pattern.permute.xlu0 0
        %2710 = vperm.xlu0 %2709, %v2454
        %v2711 = vpop.permute.xlu0 %2710
        %2714 = vset.pattern.permute.xlu0 0
        %2715 = vperm.xlu0 %2714, %v2455
        %v2716 = vpop.permute.xlu0 %2715
        %2719 = vset.pattern.permute.xlu0 0
        %2720 = vperm.xlu0 %2719, %v2456
        %v2721 = vpop.permute.xlu0 %2720
        %2724 = vset.pattern.permute.xlu0 0
        %2725 = vperm.xlu0 %2724, %v2457
        %v2726 = vpop.permute.xlu0 %2725
        %2729 = vset.pattern.permute.xlu0 0
        %2730 = vperm.xlu0 %2729, %v2458
        %v2731 = vpop.permute.xlu0 %2730
        %2734 = vset.pattern.permute.xlu0 0
        %2735 = vperm.xlu0 %2734, %v2459
        %v2736 = vpop.permute.xlu0 %2735
        %2739 = vset.pattern.permute.xlu0 0
        %2740 = vperm.xlu0 %2739, %v2460
        %v2741 = vpop.permute.xlu0 %2740
        %2744 = vset.pattern.permute.xlu0 0
        %2745 = vperm.xlu0 %2744, %v2461
        %v2746 = vpop.permute.xlu0 %2745
        %2749 = vset.pattern.permute.xlu0 0
        %2750 = vperm.xlu0 %2749, %v2462
        %v2751 = vpop.permute.xlu0 %2750
        %2754 = vset.pattern.permute.xlu0 0
        %2755 = vperm.xlu0 %2754, %v2463
        %v2756 = vpop.permute.xlu0 %2755
        %2759 = vset.pattern.permute.xlu0 0
        %2760 = vperm.xlu0 %2759, %v2464
        %v2761 = vpop.permute.xlu0 %2760
        %2764 = vset.pattern.permute.xlu0 0
        %2765 = vperm.xlu0 %2764, %v2465
        %v2766 = vpop.permute.xlu0 %2765
        %2769 = vset.pattern.permute.xlu0 0
        %2770 = vperm.xlu0 %2769, %v2466
        %v2771 = vpop.permute.xlu0 %2770
        %2774 = vset.pattern.permute.xlu0 0
        %2775 = vperm.xlu0 %2774, %v2467
        %v2776 = vpop.permute.xlu0 %2775
        %2779 = vset.pattern.permute.xlu0 0
        %2780 = vperm.xlu0 %2779, %v2468
        %v2781 = vpop.permute.xlu0 %2780
        %2784 = vset.pattern.permute.xlu0 0
        %2785 = vperm.xlu0 %2784, %v2469
        %v2786 = vpop.permute.xlu0 %2785
        %2789 = vset.pattern.permute.xlu0 0
        %2790 = vperm.xlu0 %2789, %v2470
        %v2791 = vpop.permute.xlu0 %2790
        %2794 = vset.pattern.permute.xlu0 0
        %2795 = vperm.xlu0 %2794, %v2471
        %v2796 = vpop.permute.xlu0 %2795
        %2799 = vset.pattern.permute.xlu0 0
        %2800 = vperm.xlu0 %2799, %v2472
        %v2801 = vpop.permute.xlu0 %2800
        %2804 = vset.pattern.permute.xlu0 0
        %2805 = vperm.xlu0 %2804, %v2473
        %v2806 = vpop.permute.xlu0 %2805
        %2809 = vset.pattern.permute.xlu0 0
        %2810 = vperm.xlu0 %2809, %v2474
        %v2811 = vpop.permute.xlu0 %2810
        %2814 = vset.pattern.permute.xlu0 0
        %2815 = vperm.xlu0 %2814, %v2475
        %v2816 = vpop.permute.xlu0 %2815
        %2819 = vset.pattern.permute.xlu0 0
        %2820 = vperm.xlu0 %2819, %v2476
        %v2821 = vpop.permute.xlu0 %2820
        %2824 = vset.pattern.permute.xlu0 0
        %2825 = vperm.xlu0 %2824, %v2477
        %v2826 = vpop.permute.xlu0 %2825
        %2829 = vset.pattern.permute.xlu0 0
        %2830 = vperm.xlu0 %2829, %v2478
        %v2831 = vpop.permute.xlu0 %2830
        %2834 = vset.pattern.permute.xlu0 0
        %2835 = vperm.xlu0 %2834, %v2479
        %v2836 = vpop.permute.xlu0 %2835
        %2839 = vset.pattern.permute.xlu0 0
        %2840 = vperm.xlu0 %2839, %v2480
        %v2841 = vpop.permute.xlu0 %2840
        %v2843 = vmul.f32 %v2646, %v270
        %v2844 = vmul.f32 %v2651, %v271
        %v2845 = vmul.f32 %v2656, %v272
        %v2846 = vmul.f32 %v2661, %v273
        %v2847 = vmul.f32 %v2666, %v270
        %v2848 = vmul.f32 %v2671, %v271
        %v2849 = vmul.f32 %v2676, %v272
        %v2850 = vmul.f32 %v2681, %v273
        %v2851 = vmul.f32 %v2686, %v270
        %v2852 = vmul.f32 %v2691, %v271
        %v2853 = vmul.f32 %v2696, %v272
        %v2854 = vmul.f32 %v2701, %v273
        %v2855 = vmul.f32 %v2706, %v270
        %v2856 = vmul.f32 %v2711, %v271
        %v2857 = vmul.f32 %v2716, %v272
        %v2858 = vmul.f32 %v2721, %v273
        %v2859 = vmul.f32 %v2726, %v270
        %v2860 = vmul.f32 %v2731, %v271
        %v2861 = vmul.f32 %v2736, %v272
        %v2862 = vmul.f32 %v2741, %v273
        %v2863 = vmul.f32 %v2746, %v270
        %v2864 = vmul.f32 %v2751, %v271
        %v2865 = vmul.f32 %v2756, %v272
        %v2866 = vmul.f32 %v2761, %v273
        %v2867 = vmul.f32 %v2766, %v270
        %v2868 = vmul.f32 %v2771, %v271
        %v2869 = vmul.f32 %v2776, %v272
        %v2870 = vmul.f32 %v2781, %v273
        %v2871 = vmul.f32 %v2786, %v270
        %v2872 = vmul.f32 %v2791, %v271
        %v2873 = vmul.f32 %v2796, %v272
        %v2874 = vmul.f32 %v2801, %v273
        %v2875 = vmul.f32 %v2806, %v270
        %v2876 = vmul.f32 %v2811, %v271
        %v2877 = vmul.f32 %v2816, %v272
        %v2878 = vmul.f32 %v2821, %v273
        %v2879 = vmul.f32 %v2826, %v270
        %v2880 = vmul.f32 %v2831, %v271
        %v2881 = vmul.f32 %v2836, %v272
        %v2882 = vmul.f32 %v2841, %v273
        %2884 = vset.pattern.permute.xlu0 0
        %2885 = vperm.xlu0 %2884, %v2563
        %v2886 = vpop.permute.xlu0 %2885
        %2889 = vset.pattern.permute.xlu0 0
        %2890 = vperm.xlu0 %2889, %v2564
        %v2891 = vpop.permute.xlu0 %2890
        %2894 = vset.pattern.permute.xlu0 0
        %2895 = vperm.xlu0 %2894, %v2565
        %v2896 = vpop.permute.xlu0 %2895
        %2899 = vset.pattern.permute.xlu0 0
        %2900 = vperm.xlu0 %2899, %v2566
        %v2901 = vpop.permute.xlu0 %2900
        %2904 = vset.pattern.permute.xlu0 0
        %2905 = vperm.xlu0 %2904, %v2567
        %v2906 = vpop.permute.xlu0 %2905
        %2909 = vset.pattern.permute.xlu0 0
        %2910 = vperm.xlu0 %2909, %v2568
        %v2911 = vpop.permute.xlu0 %2910
        %2914 = vset.pattern.permute.xlu0 0
        %2915 = vperm.xlu0 %2914, %v2569
        %v2916 = vpop.permute.xlu0 %2915
        %2919 = vset.pattern.permute.xlu0 0
        %2920 = vperm.xlu0 %2919, %v2570
        %v2921 = vpop.permute.xlu0 %2920
        %2924 = vset.pattern.permute.xlu0 0
        %2925 = vperm.xlu0 %2924, %v2571
        %v2926 = vpop.permute.xlu0 %2925
        %2929 = vset.pattern.permute.xlu0 0
        %2930 = vperm.xlu0 %2929, %v2572
        %v2931 = vpop.permute.xlu0 %2930
        %2934 = vset.pattern.permute.xlu0 0
        %2935 = vperm.xlu0 %2934, %v2573
        %v2936 = vpop.permute.xlu0 %2935
        %2939 = vset.pattern.permute.xlu0 0
        %2940 = vperm.xlu0 %2939, %v2574
        %v2941 = vpop.permute.xlu0 %2940
        %2944 = vset.pattern.permute.xlu0 0
        %2945 = vperm.xlu0 %2944, %v2575
        %v2946 = vpop.permute.xlu0 %2945
        %2949 = vset.pattern.permute.xlu0 0
        %2950 = vperm.xlu0 %2949, %v2576
        %v2951 = vpop.permute.xlu0 %2950
        %2954 = vset.pattern.permute.xlu0 0
        %2955 = vperm.xlu0 %2954, %v2577
        %v2956 = vpop.permute.xlu0 %2955
        %2959 = vset.pattern.permute.xlu0 0
        %2960 = vperm.xlu0 %2959, %v2578
        %v2961 = vpop.permute.xlu0 %2960
        %2964 = vset.pattern.permute.xlu0 0
        %2965 = vperm.xlu0 %2964, %v2579
        %v2966 = vpop.permute.xlu0 %2965
        %2969 = vset.pattern.permute.xlu0 0
        %2970 = vperm.xlu0 %2969, %v2580
        %v2971 = vpop.permute.xlu0 %2970
        %2974 = vset.pattern.permute.xlu0 0
        %2975 = vperm.xlu0 %2974, %v2581
        %v2976 = vpop.permute.xlu0 %2975
        %2979 = vset.pattern.permute.xlu0 0
        %2980 = vperm.xlu0 %2979, %v2582
        %v2981 = vpop.permute.xlu0 %2980
        %2984 = vset.pattern.permute.xlu0 0
        %2985 = vperm.xlu0 %2984, %v2583
        %v2986 = vpop.permute.xlu0 %2985
        %2989 = vset.pattern.permute.xlu0 0
        %2990 = vperm.xlu0 %2989, %v2584
        %v2991 = vpop.permute.xlu0 %2990
        %2994 = vset.pattern.permute.xlu0 0
        %2995 = vperm.xlu0 %2994, %v2585
        %v2996 = vpop.permute.xlu0 %2995
        %2999 = vset.pattern.permute.xlu0 0
        %3000 = vperm.xlu0 %2999, %v2586
        %v3001 = vpop.permute.xlu0 %3000
        %3004 = vset.pattern.permute.xlu0 0
        %3005 = vperm.xlu0 %3004, %v2587
        %v3006 = vpop.permute.xlu0 %3005
        %3009 = vset.pattern.permute.xlu0 0
        %3010 = vperm.xlu0 %3009, %v2588
        %v3011 = vpop.permute.xlu0 %3010
        %3014 = vset.pattern.permute.xlu0 0
        %3015 = vperm.xlu0 %3014, %v2589
        %v3016 = vpop.permute.xlu0 %3015
        %3019 = vset.pattern.permute.xlu0 0
        %3020 = vperm.xlu0 %3019, %v2590
        %v3021 = vpop.permute.xlu0 %3020
        %3024 = vset.pattern.permute.xlu0 0
        %3025 = vperm.xlu0 %3024, %v2591
        %v3026 = vpop.permute.xlu0 %3025
        %3029 = vset.pattern.permute.xlu0 0
        %3030 = vperm.xlu0 %3029, %v2592
        %v3031 = vpop.permute.xlu0 %3030
        %3034 = vset.pattern.permute.xlu0 0
        %3035 = vperm.xlu0 %3034, %v2593
        %v3036 = vpop.permute.xlu0 %3035
        %3039 = vset.pattern.permute.xlu0 0
        %3040 = vperm.xlu0 %3039, %v2594
        %v3041 = vpop.permute.xlu0 %3040
        %3044 = vset.pattern.permute.xlu0 0
        %3045 = vperm.xlu0 %3044, %v2595
        %v3046 = vpop.permute.xlu0 %3045
        %3049 = vset.pattern.permute.xlu0 0
        %3050 = vperm.xlu0 %3049, %v2596
        %v3051 = vpop.permute.xlu0 %3050
        %3054 = vset.pattern.permute.xlu0 0
        %3055 = vperm.xlu0 %3054, %v2597
        %v3056 = vpop.permute.xlu0 %3055
        %3059 = vset.pattern.permute.xlu0 0
        %3060 = vperm.xlu0 %3059, %v2598
        %v3061 = vpop.permute.xlu0 %3060
        %3064 = vset.pattern.permute.xlu0 0
        %3065 = vperm.xlu0 %3064, %v2599
        %v3066 = vpop.permute.xlu0 %3065
        %3069 = vset.pattern.permute.xlu0 0
        %3070 = vperm.xlu0 %3069, %v2600
        %v3071 = vpop.permute.xlu0 %3070
        %3074 = vset.pattern.permute.xlu0 0
        %3075 = vperm.xlu0 %3074, %v2601
        %v3076 = vpop.permute.xlu0 %3075
        %3079 = vset.pattern.permute.xlu0 0
        %3080 = vperm.xlu0 %3079, %v2602
        %v3081 = vpop.permute.xlu0 %3080
        %v3083 = vsub.f32 %v2843, %v2886
        %v3084 = vsub.f32 %v2844, %v2891
        %v3085 = vsub.f32 %v2845, %v2896
        %v3086 = vsub.f32 %v2846, %v2901
        %v3087 = vsub.f32 %v2847, %v2906
        %v3088 = vsub.f32 %v2848, %v2911
        %v3089 = vsub.f32 %v2849, %v2916
        %v3090 = vsub.f32 %v2850, %v2921
        %v3091 = vsub.f32 %v2851, %v2926
        %v3092 = vsub.f32 %v2852, %v2931
        %v3093 = vsub.f32 %v2853, %v2936
        %v3094 = vsub.f32 %v2854, %v2941
        %v3095 = vsub.f32 %v2855, %v2946
        %v3096 = vsub.f32 %v2856, %v2951
        %v3097 = vsub.f32 %v2857, %v2956
        %v3098 = vsub.f32 %v2858, %v2961
        %v3099 = vsub.f32 %v2859, %v2966
        %v3100 = vsub.f32 %v2860, %v2971
        %v3101 = vsub.f32 %v2861, %v2976
        %v3102 = vsub.f32 %v2862, %v2981
        %v3103 = vsub.f32 %v2863, %v2986
        %v3104 = vsub.f32 %v2864, %v2991
        %v3105 = vsub.f32 %v2865, %v2996
        %v3106 = vsub.f32 %v2866, %v3001
        %v3107 = vsub.f32 %v2867, %v3006
        %v3108 = vsub.f32 %v2868, %v3011
        %v3109 = vsub.f32 %v2869, %v3016
        %v3110 = vsub.f32 %v2870, %v3021
        %v3111 = vsub.f32 %v2871, %v3026
        %v3112 = vsub.f32 %v2872, %v3031
        %v3113 = vsub.f32 %v2873, %v3036
        %v3114 = vsub.f32 %v2874, %v3041
        %v3115 = vsub.f32 %v2875, %v3046
        %v3116 = vsub.f32 %v2876, %v3051
        %v3117 = vsub.f32 %v2877, %v3056
        %v3118 = vsub.f32 %v2878, %v3061
        %v3119 = vsub.f32 %v2879, %v3066
        %v3120 = vsub.f32 %v2880, %v3071
        %v3121 = vsub.f32 %v2881, %v3076
        %v3122 = vsub.f32 %v2882, %v3081
        %v3123 = vtanh.pop %v3083
        %v3124 = vtanh.pop %v3084
        %v3125 = vtanh.pop %v3085
        %v3126 = vtanh.pop %v3086
        %v3127 = vtanh.pop %v3087
        %v3128 = vtanh.pop %v3088
        %v3129 = vtanh.pop %v3089
        %v3130 = vtanh.pop %v3090
        %v3131 = vtanh.pop %v3091
        %v3132 = vtanh.pop %v3092
        %v3133 = vtanh.pop %v3093
        %v3134 = vtanh.pop %v3094
        %v3135 = vtanh.pop %v3095
        %v3136 = vtanh.pop %v3096
        %v3137 = vtanh.pop %v3097
        %v3138 = vtanh.pop %v3098
        %v3139 = vtanh.pop %v3099
        %v3140 = vtanh.pop %v3100
        %v3141 = vtanh.pop %v3101
        %v3142 = vtanh.pop %v3102
        %v3143 = vtanh.pop %v3103
        %v3144 = vtanh.pop %v3104
        %v3145 = vtanh.pop %v3105
        %v3146 = vtanh.pop %v3106
        %v3147 = vtanh.pop %v3107
        %v3148 = vtanh.pop %v3108
        %v3149 = vtanh.pop %v3109
        %v3150 = vtanh.pop %v3110
        %v3151 = vtanh.pop %v3111
        %v3152 = vtanh.pop %v3112
        %v3153 = vtanh.pop %v3113
        %v3154 = vtanh.pop %v3114
        %v3155 = vtanh.pop %v3115
        %v3156 = vtanh.pop %v3116
        %v3157 = vtanh.pop %v3117
        %v3158 = vtanh.pop %v3118
        %v3159 = vtanh.pop %v3119
        %v3160 = vtanh.pop %v3120
        %v3161 = vtanh.pop %v3121
        %v3162 = vtanh.pop %v3122
        %3164 = vset.pattern.permute.xlu0 0
        %3165 = vperm.xlu0 %3164, %v2603
        %v3166 = vpop.permute.xlu0 %3165
        %3169 = vset.pattern.permute.xlu0 0
        %3170 = vperm.xlu0 %3169, %v2604
        %v3171 = vpop.permute.xlu0 %3170
        %3174 = vset.pattern.permute.xlu0 0
        %3175 = vperm.xlu0 %3174, %v2605
        %v3176 = vpop.permute.xlu0 %3175
        %3179 = vset.pattern.permute.xlu0 0
        %3180 = vperm.xlu0 %3179, %v2606
        %v3181 = vpop.permute.xlu0 %3180
        %3184 = vset.pattern.permute.xlu0 0
        %3185 = vperm.xlu0 %3184, %v2607
        %v3186 = vpop.permute.xlu0 %3185
        %3189 = vset.pattern.permute.xlu0 0
        %3190 = vperm.xlu0 %3189, %v2608
        %v3191 = vpop.permute.xlu0 %3190
        %3194 = vset.pattern.permute.xlu0 0
        %3195 = vperm.xlu0 %3194, %v2609
        %v3196 = vpop.permute.xlu0 %3195
        %3199 = vset.pattern.permute.xlu0 0
        %3200 = vperm.xlu0 %3199, %v2610
        %v3201 = vpop.permute.xlu0 %3200
        %3204 = vset.pattern.permute.xlu0 0
        %3205 = vperm.xlu0 %3204, %v2611
        %v3206 = vpop.permute.xlu0 %3205
        %3209 = vset.pattern.permute.xlu0 0
        %3210 = vperm.xlu0 %3209, %v2612
        %v3211 = vpop.permute.xlu0 %3210
        %3214 = vset.pattern.permute.xlu0 0
        %3215 = vperm.xlu0 %3214, %v2613
        %v3216 = vpop.permute.xlu0 %3215
        %3219 = vset.pattern.permute.xlu0 0
        %3220 = vperm.xlu0 %3219, %v2614
        %v3221 = vpop.permute.xlu0 %3220
        %3224 = vset.pattern.permute.xlu0 0
        %3225 = vperm.xlu0 %3224, %v2615
        %v3226 = vpop.permute.xlu0 %3225
        %3229 = vset.pattern.permute.xlu0 0
        %3230 = vperm.xlu0 %3229, %v2616
        %v3231 = vpop.permute.xlu0 %3230
        %3234 = vset.pattern.permute.xlu0 0
        %3235 = vperm.xlu0 %3234, %v2617
        %v3236 = vpop.permute.xlu0 %3235
        %3239 = vset.pattern.permute.xlu0 0
        %3240 = vperm.xlu0 %3239, %v2618
        %v3241 = vpop.permute.xlu0 %3240
        %3244 = vset.pattern.permute.xlu0 0
        %3245 = vperm.xlu0 %3244, %v2619
        %v3246 = vpop.permute.xlu0 %3245
        %3249 = vset.pattern.permute.xlu0 0
        %3250 = vperm.xlu0 %3249, %v2620
        %v3251 = vpop.permute.xlu0 %3250
        %3254 = vset.pattern.permute.xlu0 0
        %3255 = vperm.xlu0 %3254, %v2621
        %v3256 = vpop.permute.xlu0 %3255
        %3259 = vset.pattern.permute.xlu0 0
        %3260 = vperm.xlu0 %3259, %v2622
        %v3261 = vpop.permute.xlu0 %3260
        %3264 = vset.pattern.permute.xlu0 0
        %3265 = vperm.xlu0 %3264, %v2623
        %v3266 = vpop.permute.xlu0 %3265
        %3269 = vset.pattern.permute.xlu0 0
        %3270 = vperm.xlu0 %3269, %v2624
        %v3271 = vpop.permute.xlu0 %3270
        %3274 = vset.pattern.permute.xlu0 0
        %3275 = vperm.xlu0 %3274, %v2625
        %v3276 = vpop.permute.xlu0 %3275
        %3279 = vset.pattern.permute.xlu0 0
        %3280 = vperm.xlu0 %3279, %v2626
        %v3281 = vpop.permute.xlu0 %3280
        %3284 = vset.pattern.permute.xlu0 0
        %3285 = vperm.xlu0 %3284, %v2627
        %v3286 = vpop.permute.xlu0 %3285
        %3289 = vset.pattern.permute.xlu0 0
        %3290 = vperm.xlu0 %3289, %v2628
        %v3291 = vpop.permute.xlu0 %3290
        %3294 = vset.pattern.permute.xlu0 0
        %3295 = vperm.xlu0 %3294, %v2629
        %v3296 = vpop.permute.xlu0 %3295
        %3299 = vset.pattern.permute.xlu0 0
        %3300 = vperm.xlu0 %3299, %v2630
        %v3301 = vpop.permute.xlu0 %3300
        %3304 = vset.pattern.permute.xlu0 0
        %3305 = vperm.xlu0 %3304, %v2631
        %v3306 = vpop.permute.xlu0 %3305
        %3309 = vset.pattern.permute.xlu0 0
        %3310 = vperm.xlu0 %3309, %v2632
        %v3311 = vpop.permute.xlu0 %3310
        %3314 = vset.pattern.permute.xlu0 0
        %3315 = vperm.xlu0 %3314, %v2633
        %v3316 = vpop.permute.xlu0 %3315
        %3319 = vset.pattern.permute.xlu0 0
        %3320 = vperm.xlu0 %3319, %v2634
        %v3321 = vpop.permute.xlu0 %3320
        %3324 = vset.pattern.permute.xlu0 0
        %3325 = vperm.xlu0 %3324, %v2635
        %v3326 = vpop.permute.xlu0 %3325
        %3329 = vset.pattern.permute.xlu0 0
        %3330 = vperm.xlu0 %3329, %v2636
        %v3331 = vpop.permute.xlu0 %3330
        %3334 = vset.pattern.permute.xlu0 0
        %3335 = vperm.xlu0 %3334, %v2637
        %v3336 = vpop.permute.xlu0 %3335
        %3339 = vset.pattern.permute.xlu0 0
        %3340 = vperm.xlu0 %3339, %v2638
        %v3341 = vpop.permute.xlu0 %3340
        %3344 = vset.pattern.permute.xlu0 0
        %3345 = vperm.xlu0 %3344, %v2639
        %v3346 = vpop.permute.xlu0 %3345
        %3349 = vset.pattern.permute.xlu0 0
        %3350 = vperm.xlu0 %3349, %v2640
        %v3351 = vpop.permute.xlu0 %3350
        %3354 = vset.pattern.permute.xlu0 0
        %3355 = vperm.xlu0 %3354, %v2641
        %v3356 = vpop.permute.xlu0 %3355
        %3359 = vset.pattern.permute.xlu0 0
        %3360 = vperm.xlu0 %3359, %v2642
        %v3361 = vpop.permute.xlu0 %3360
        %v3363 = vmul.f32 %v3166, %v3123
        %v3364 = vmul.f32 %v3171, %v3124
        %v3365 = vmul.f32 %v3176, %v3125
        %v3366 = vmul.f32 %v3181, %v3126
        %v3367 = vmul.f32 %v3186, %v3127
        %v3368 = vmul.f32 %v3191, %v3128
        %v3369 = vmul.f32 %v3196, %v3129
        %v3370 = vmul.f32 %v3201, %v3130
        %v3371 = vmul.f32 %v3206, %v3131
        %v3372 = vmul.f32 %v3211, %v3132
        %v3373 = vmul.f32 %v3216, %v3133
        %v3374 = vmul.f32 %v3221, %v3134
        %v3375 = vmul.f32 %v3226, %v3135
        %v3376 = vmul.f32 %v3231, %v3136
        %v3377 = vmul.f32 %v3236, %v3137
        %v3378 = vmul.f32 %v3241, %v3138
        %v3379 = vmul.f32 %v3246, %v3139
        %v3380 = vmul.f32 %v3251, %v3140
        %v3381 = vmul.f32 %v3256, %v3141
        %v3382 = vmul.f32 %v3261, %v3142
        %v3383 = vmul.f32 %v3266, %v3143
        %v3384 = vmul.f32 %v3271, %v3144
        %v3385 = vmul.f32 %v3276, %v3145
        %v3386 = vmul.f32 %v3281, %v3146
        %v3387 = vmul.f32 %v3286, %v3147
        %v3388 = vmul.f32 %v3291, %v3148
        %v3389 = vmul.f32 %v3296, %v3149
        %v3390 = vmul.f32 %v3301, %v3150
        %v3391 = vmul.f32 %v3306, %v3151
        %v3392 = vmul.f32 %v3311, %v3152
        %v3393 = vmul.f32 %v3316, %v3153
        %v3394 = vmul.f32 %v3321, %v3154
        %v3395 = vmul.f32 %v3326, %v3155
        %v3396 = vmul.f32 %v3331, %v3156
        %v3397 = vmul.f32 %v3336, %v3157
        %v3398 = vmul.f32 %v3341, %v3158
        %v3399 = vmul.f32 %v3346, %v3159
        %v3400 = vmul.f32 %v3351, %v3160
        %v3401 = vmul.f32 %v3356, %v3161
        %v3402 = vmul.f32 %v3361, %v3162
        %v3403 = vadd.f32 %v3363, %v3364
        %v3404 = vadd.f32 %v3403, %v3365
        %v3405 = vadd.f32 %v3404, %v3366
        %v3406 = vrot.slane %v3405, 4
        %v3407 = vadd.f32 %v3405, %v3406
        %v3408 = vrot.slane %v3407, 2
        %v3409 = vadd.f32 %v3407, %v3408
        %v3410 = vrot.slane %v3409, 1
        %v3411 = vadd.f32 %v3409, %v3410
        %v3412 = vadd.f32 %v3367, %v3368
        %v3413 = vadd.f32 %v3412, %v3369
        %v3414 = vadd.f32 %v3413, %v3370
        %v3415 = vrot.slane %v3414, 4
        %v3416 = vadd.f32 %v3414, %v3415
        %v3417 = vrot.slane %v3416, 2
        %v3418 = vadd.f32 %v3416, %v3417
        %v3419 = vrot.slane %v3418, 1
        %v3420 = vadd.f32 %v3418, %v3419
        %v3421 = vadd.f32 %v3371, %v3372
        %v3422 = vadd.f32 %v3421, %v3373
        %v3423 = vadd.f32 %v3422, %v3374
        %v3424 = vrot.slane %v3423, 4
        %v3425 = vadd.f32 %v3423, %v3424
        %v3426 = vrot.slane %v3425, 2
        %v3427 = vadd.f32 %v3425, %v3426
        %v3428 = vrot.slane %v3427, 1
        %v3429 = vadd.f32 %v3427, %v3428
        %v3430 = vadd.f32 %v3375, %v3376
        %v3431 = vadd.f32 %v3430, %v3377
        %v3432 = vadd.f32 %v3431, %v3378
        %v3433 = vrot.slane %v3432, 4
        %v3434 = vadd.f32 %v3432, %v3433
        %v3435 = vrot.slane %v3434, 2
        %v3436 = vadd.f32 %v3434, %v3435
        %v3437 = vrot.slane %v3436, 1
        %v3438 = vadd.f32 %v3436, %v3437
        %v3439 = vadd.f32 %v3379, %v3380
        %v3440 = vadd.f32 %v3439, %v3381
        %v3441 = vadd.f32 %v3440, %v3382
        %v3442 = vrot.slane %v3441, 4
        %v3443 = vadd.f32 %v3441, %v3442
        %v3444 = vrot.slane %v3443, 2
        %v3445 = vadd.f32 %v3443, %v3444
        %v3446 = vrot.slane %v3445, 1
        %v3447 = vadd.f32 %v3445, %v3446
        %v3448 = vadd.f32 %v3383, %v3384
        %v3449 = vadd.f32 %v3448, %v3385
        %v3450 = vadd.f32 %v3449, %v3386
        %v3451 = vrot.slane %v3450, 4
        %v3452 = vadd.f32 %v3450, %v3451
        %v3453 = vrot.slane %v3452, 2
        %v3454 = vadd.f32 %v3452, %v3453
        %v3455 = vrot.slane %v3454, 1
        %v3456 = vadd.f32 %v3454, %v3455
        %v3457 = vadd.f32 %v3387, %v3388
        %v3458 = vadd.f32 %v3457, %v3389
        %v3459 = vadd.f32 %v3458, %v3390
        %v3460 = vrot.slane %v3459, 4
        %v3461 = vadd.f32 %v3459, %v3460
        %v3462 = vrot.slane %v3461, 2
        %v3463 = vadd.f32 %v3461, %v3462
        %v3464 = vrot.slane %v3463, 1
        %v3465 = vadd.f32 %v3463, %v3464
        %v3466 = vadd.f32 %v3391, %v3392
        %v3467 = vadd.f32 %v3466, %v3393
        %v3468 = vadd.f32 %v3467, %v3394
        %v3469 = vrot.slane %v3468, 4
        %v3470 = vadd.f32 %v3468, %v3469
        %v3471 = vrot.slane %v3470, 2
        %v3472 = vadd.f32 %v3470, %v3471
        %v3473 = vrot.slane %v3472, 1
        %v3474 = vadd.f32 %v3472, %v3473
        %v3475 = vadd.f32 %v3395, %v3396
        %v3476 = vadd.f32 %v3475, %v3397
        %v3477 = vadd.f32 %v3476, %v3398
        %v3478 = vrot.slane %v3477, 4
        %v3479 = vadd.f32 %v3477, %v3478
        %v3480 = vrot.slane %v3479, 2
        %v3481 = vadd.f32 %v3479, %v3480
        %v3482 = vrot.slane %v3481, 1
        %v3483 = vadd.f32 %v3481, %v3482
        %v3484 = vadd.f32 %v3399, %v3400
        %v3485 = vadd.f32 %v3484, %v3401
        %v3486 = vadd.f32 %v3485, %v3402
        %v3487 = vrot.slane %v3486, 4
        %v3488 = vadd.f32 %v3486, %v3487
        %v3489 = vrot.slane %v3488, 2
        %v3490 = vadd.f32 %v3488, %v3489
        %v3491 = vrot.slane %v3490, 1
        %v3492 = vadd.f32 %v3490, %v3491
        %v3503 = vsel %vm1346, %v3420, %v3411
        %v3504 = vsel %vm1348, %v3429, %v3503
        %v3505 = vsel %vm1350, %v3438, %v3504
        %v3506 = vsel %vm1352, %v3447, %v3505
        %v3507 = vsel %vm1354, %v3456, %v3506
        %v3508 = vsel %vm1356, %v3465, %v3507
        %v3509 = vsel %vm1358, %v3474, %v3508
        %v3510 = vsel %vm1346, %v3492, %v3483
        %v3513 = vadd.f32 %v2438, %v3509
        %v3514 = vadd.f32 %v2439, %v3510
        %3515 = vst [vmem:[%s269] sm:$0xff] %v3513
        %3516 = vst [vmem:[%s269 + $0x8] sm:$0x3] %v3514
        %s3517 = sand.u32 %s137, 1
        %s3518 = scalar_lea.sflag [#allocation4], %s3517
        %s3519 = sand.u32 %s137, 1
        %s3520 = smul.addr %s3519, 16
        %s3521 = scalar_lea.vmem [#allocation3], %s3520
        // Predicated region
        $region79: #{tpu_custom_call.1} parent=73 // pred_check
          %p3522 = pneg %p147
        $region80: #{tpu_custom_call.1} parent=73 // pred_check_branch
          %3524 = sbr.rel (%p3522) target = $region82
        $region81: #{tpu_custom_call.1} parent=73 // pred_region
          %s3526 = ssub.s32 256, 256
          %3527 = vsyncadd %s3518, %s3526
          %s3528 = smul.addr %s19, 128
          %s3529 = scalar_lea.hbm %s5, %s3528
          %s3530 = sshll.u32 %s3521, 4
          %s3531 = int_to_ptr.vmem [resolvable:$true] %s3530
          %3536 = dma.vmem_to_hbm [thread:$0]  %s3531, 256, %s3529, %s3518, 128, 256, 8
        $region82: #{tpu_custom_call.1} parent=73 // pred_fallthru
          _
      $region74: #{tpu_custom_call.1} parent=5 // pred_fallthru
        _
      %p3537 = scmp.le.s32.totalorder 2, %s14
      // Predicated region
      $region83: #{tpu_custom_call.1} parent=5 // pred_check
        %p3538 = pneg %p3537
      $region84: #{tpu_custom_call.1} parent=5 // pred_check_branch
        %3540 = sbr.rel (%p3538) target = $region86
      $region85: #{tpu_custom_call.1} parent=5 // pred_region
        %s3541 = ssub.s32 %s14, 2
        // Predicated region
        $region87: #{tpu_custom_call.1} parent=85 // pred_check
          %p3542 = pneg %p153
        $region88: #{tpu_custom_call.1} parent=85 // pred_check_branch
          %3544 = sbr.rel (%p3542) target = $region90
        $region89: #{tpu_custom_call.1} parent=85 // pred_region
          %s3545 = sand.u32 %s138, 1
          %s3546 = scalar_lea.sflag [#allocation4], %s3545
          %s3547 = sand.u32 %s138, 1
          %s3548 = smul.addr %s3547, 16
          %s3549 = scalar_lea.vmem [#allocation3], %s3548
          %3550 = dma.done %s3546, 256
        $region90: #{tpu_custom_call.1} parent=85 // pred_fallthru
          _
      $region86: #{tpu_custom_call.1} parent=5 // pred_fallthru
        _
    $region6: #{tpu_custom_call.1} parent=1 // loop_footer
      %s18 = sadd.s32 1, %s14
    $region7: #{tpu_custom_call.1} parent=1 // loop_footer_branch
      %13 = sbr.rel target = $region3
    $region8: #{tpu_custom_call.1} parent=1 // loop_exit
      _
    %3551 = vsyncpa [#allocation4], 1
    %s3552 = scalar_lea.sflag [#allocation4], 1
    %3553 = vsyncpa %s3552, 1

</llo_original>
